<compile_context>
chip_gen: v5e
topology: v5e:2x2
jax: 0.10.0
libtpu: 0.0.40
codegen_flags: <defaults>
</compile_context>

<pallas_src>
from functools import partial

import jax
import jax.numpy as jnp
from jax.experimental import pallas as pl
from jax.experimental.pallas import tpu as pltpu


# ----------------------------------------------------------------------------
# Fused kernel
# ----------------------------------------------------------------------------
def _fused_kernel(xp_ref, w1_ref, b1_ref, w2_ref, b2_ref, fcw_ref, fcb_ref,
                  o_ref, conv1_ref, xp2_ref, conv2_ref, flat_ref):
    TB, Hp, Wp, Cin = xp_ref.shape          # input is already zero-padded (+1)
    H, W = Hp - 2, Wp - 2
    C1 = b1_ref.shape[-1]
    C2 = b2_ref.shape[-1]
    K = o_ref.shape[-1]
    Ho1, Wo1 = H // 2, W // 2
    Ho2, Wo2 = Ho1 // 2, Wo1 // 2
    f32 = jnp.float32

    b1 = b1_ref[...]                        # (1, C1)  loaded once
    b2 = b2_ref[...]                        # (1, C2)

    # ---------------- Block 1: 3x3 conv (no bias yet) -----------------------
    if Cin == 1:
        # Tiny-Cin special case: 9 broadcast VPU FMAs per image (no im2col).
        w1_taps = [w1_ref[t] for t in range(9)]                 # each (1, C1)

        @pl.loop(0, TB)
        def _conv1(n):
            acc = None
            for dy in range(3):
                for dx in range(3):
                    t = xp_ref[n, dy:dy + H, dx:dx + W, :] * w1_taps[3 * dy + dx]
                    acc = t if acc is None else acc + t
            conv1_ref[n] = acc                                   # (H, W, C1)
    else:
        # Generic path: 9 accumulating K=Cin matmuls per image.
        @pl.loop(0, TB)
        def _conv1(n):
            acc = None
            for dy in range(3):
                for dx in range(3):
                    patch = xp_ref[n, dy:dy + H, dx:dx + W, :].reshape(H * W, Cin)
                    t = jnp.dot(patch, w1_ref[3 * dy + dx],
                                preferred_element_type=f32)
                    acc = t if acc is None else acc + t
            conv1_ref[n] = acc.reshape(H, W, C1)

    # ---- maxpool 2x2 + bias + ReLU (bias commutes with max), no write-back --
    pooled1 = jnp.maximum(
        jnp.maximum(conv1_ref[:, pl.ds(0, Ho1, 2), pl.ds(0, Wo1, 2), :],
                    conv1_ref[:, pl.ds(0, Ho1, 2), pl.ds(1, Wo1, 2), :]),
        jnp.maximum(conv1_ref[:, pl.ds(1, Ho1, 2), pl.ds(0, Wo1, 2), :],
                    conv1_ref[:, pl.ds(1, Ho1, 2), pl.ds(1, Wo1, 2), :]))
    pooled1 = jnp.maximum(pooled1 + b1, 0.0)                     # (TB,Ho1,Wo1,C1)

    # Zero only the halo strips of the padded block-2 buffer (interior is
    # fully rewritten every step; safe on both TensorCores of v7x).
    xp2_ref[:, 0:1, :, :] = jnp.zeros((TB, 1, Wo1 + 2, C1), f32)
    xp2_ref[:, Ho1 + 1:Ho1 + 2, :, :] = jnp.zeros((TB, 1, Wo1 + 2, C1), f32)
    xp2_ref[:, :, 0:1, :] = jnp.zeros((TB, Ho1 + 2, 1, C1), f32)
    xp2_ref[:, :, Wo1 + 1:Wo1 + 2, :] = jnp.zeros((TB, Ho1 + 2, 1, C1), f32)
    xp2_ref[:, 1:Ho1 + 1, 1:Wo1 + 1, :] = pooled1

    # ---------------- Block 2: 3x3 conv, 9 accumulating MXU matmuls ---------
    @pl.loop(0, TB)
    def _conv2(n):
        acc = None
        for dy in range(3):
            for dx in range(3):
                patch = xp2_ref[n, dy:dy + Ho1, dx:dx + Wo1, :].reshape(
                    Ho1 * Wo1, C1)
                t = jnp.dot(patch, w2_ref[3 * dy + dx],
                            preferred_element_type=f32)
                acc = t if acc is None else acc + t
        conv2_ref[n] = acc.reshape(Ho1, Wo1, C2)

    # ---- maxpool 2x2 + bias + ReLU, written straight into the flat FC slab --
    for h in range(Ho2):
        for w in range(Wo2):
            s = h * Wo2 + w
            p = jnp.maximum(
                jnp.maximum(conv2_ref[:, 2 * h, 2 * w, :],
                            conv2_ref[:, 2 * h, 2 * w + 1, :]),
                jnp.maximum(conv2_ref[:, 2 * h + 1, 2 * w, :],
                            conv2_ref[:, 2 * h + 1, 2 * w + 1, :]))
            flat_ref[:, s * C2:(s + 1) * C2] = jnp.maximum(p + b2, 0.0)

    # ---------------- FC: ONE deep-K MXU matmul ------------------------------
    out = jnp.dot(flat_ref[...], fcw_ref[...], preferred_element_type=f32)
    o_ref[...] = (out + fcb_ref[...]).reshape(TB, 1, K)


# ----------------------------------------------------------------------------
# Wrappers
# ----------------------------------------------------------------------------
def prepare_params(params, image_hw):
    """One-time (outside-jit) repack of PyTorch-convention params."""
    H, W = image_hw
    Cin = params["w1"].shape[2]
    C1 = params["w1"].shape[3]
    C2 = params["w2"].shape[3]
    K = params["fc_w"].shape[0]
    Ho2, Wo2 = H // 4, W // 4
    S2 = Ho2 * Wo2
    # fc_w: (K, C2*Ho2*Wo2) flattened in (c,h,w) order -> rows ordered (h,w,c)
    fcw = params["fc_w"].reshape(K, C2, Ho2, Wo2)
    fcw = jnp.transpose(fcw, (2, 3, 1, 0)).reshape(S2 * C2, K)
    return {
        "w1": params["w1"].reshape(9, Cin, C1),   # HWIO -> (tap, Cin, C1)
        "b1": params["b1"].reshape(1, C1),
        "w2": params["w2"].reshape(9, C1, C2),
        "b2": params["b2"].reshape(1, C2),
        "fcw": fcw,                               # (S2*C2, K)
        "fcb": params["fc_b"].reshape(1, K),
    }


def _pick_tb(n, max_tb=8):
    # Several images per grid step (amortise the ~0.35us/step overhead) while
    # keeping at least two grid steps when possible for v7x's 2 TensorCores.
    return max(1, min(max_tb, -(-n // 2)))


@partial(jax.jit, static_argnames=("tb",))
def _forward_impl(x_nchw, prep, tb):
    N, C, H, W = x_nchw.shape
    C1 = prep["b1"].shape[-1]
    C2 = prep["b2"].shape[-1]
    K = prep["fcb"].shape[-1]
    Ho1, Wo1 = H // 2, W // 2
    S2C2 = prep["fcw"].shape[0]

    n_pad = -(-N // tb) * tb
    # NCHW -> NHWC, spatial halo pad (+1) and batch pad to a TB multiple.
    x = jnp.transpose(x_nchw, (0, 2, 3, 1)).astype(jnp.float32)
    x = jnp.pad(x, ((0, n_pad - N), (1, 1), (1, 1), (0, 0)))

    out = pl.pallas_call(
        _fused_kernel,
        out_shape=jax.ShapeDtypeStruct((n_pad, 1, K), jnp.float32),
        grid=(n_pad // tb,),
        in_specs=[
            pl.BlockSpec((tb, H + 2, W + 2, C), lambda b: (b, 0, 0, 0)),
            pl.BlockSpec((9, C, C1), lambda b: (0, 0, 0)),
            pl.BlockSpec((1, C1), lambda b: (0, 0)),
            pl.BlockSpec((9, C1, C2), lambda b: (0, 0, 0)),
            pl.BlockSpec((1, C2), lambda b: (0, 0)),
            pl.BlockSpec((S2C2, K), lambda b: (0, 0)),
            pl.BlockSpec((1, K), lambda b: (0, 0)),
        ],
        out_specs=pl.BlockSpec((tb, 1, K), lambda b: (b, 0, 0)),
        scratch_shapes=[
            pltpu.VMEM((tb, H, W, C1), jnp.float32),               # conv1 (pre-pool)
            pltpu.VMEM((tb, Ho1 + 2, Wo1 + 2, C1), jnp.float32),   # padded pooled1
            pltpu.VMEM((tb, Ho1, Wo1, C2), jnp.float32),           # conv2 (pre-pool)
            pltpu.VMEM((tb, S2C2), jnp.float32),                   # flat FC input
        ],
        compiler_params=pltpu.CompilerParams(
            dimension_semantics=("parallel",),
            vmem_limit_bytes=32 * 1024 * 1024),
    )(x, prep["w1"], prep["b1"], prep["w2"], prep["b2"],
      prep["fcw"], prep["fcb"])
    return out.reshape(n_pad, K)[:N]


def christian_forward(x_nchw, prep, max_tb=8):
    N, _, H, W = x_nchw.shape
    assert H % 4 == 0 and W % 4 == 0, "two 2x2 max-pools need H, W % 4 == 0"
    return _forward_impl(x_nchw, prep, tb=_pick_tb(N, max_tb))


# ----------------------------------------------------------------------------
# Pure-JAX reference (PyTorch semantics) for the correctness check
# ----------------------------------------------------------------------------
def reference_forward(x_nchw, params):
    def block(x, w_hwio, b):
        w_oihw = jnp.transpose(w_hwio, (3, 2, 0, 1))
        y = jax.lax.conv_general_dilated(
            x, w_oihw, window_strides=(1, 1), padding=((1, 1), (1, 1)),
            dimension_numbers=("NCHW", "OIHW", "NCHW"))
        y = y + b[None, :, None, None]
        y = jax.lax.reduce_window(y, -jnp.inf, jax.lax.max,
                                  (1, 1, 2, 2), (1, 1, 2, 2), "VALID")
        return jnp.maximum(y, 0.0)

    x = block(x_nchw.astype(jnp.float32), params["w1"], params["b1"])
    x = block(x, params["w2"], params["b2"])
    x = x.reshape(x.shape[0], -1)
    return x @ params["fc_w"].T + params["fc_b"]


# ----------------------------------------------------------------------------
# Main
# ----------------------------------------------------------------------------
if __name__ == "__main__":
    key = jax.random.PRNGKey(0)
    N, C, H, W = 5, 1, 16, 16          # docstring example: (5, 1, 16, 16)
    NUM_CLASSES = 10
    fc_in = 100 * (H // 4) * (W // 4)  # 100 * 4 * 4 = 1600

    k = jax.random.split(key, 7)
    params = {
        # conv weights kept in HWIO (3, 3, Cin, Cout)
        "w1": 0.05 * jax.random.normal(k[0], (3, 3, C, 50), jnp.float32),
        "b1": 0.05 * jax.random.normal(k[1], (50,), jnp.float32),
        "w2": 0.05 * jax.random.normal(k[2], (3, 3, 50, 100), jnp.float32),
        "b2": 0.05 * jax.random.normal(k[3], (100,), jnp.float32),
        # fc weight in PyTorch Linear convention (num_classes, fc_in)
        "fc_w": 0.05 * jax.random.normal(k[4], (NUM_CLASSES, fc_in), jnp.float32),
        "fc_b": 0.05 * jax.random.normal(k[5], (NUM_CLASSES,), jnp.float32),
    }
    x = jax.random.normal(k[6], (N, C, H, W), jnp.float32)

    prep = prepare_params(params, (H, W))

    out = jax.block_until_ready(christian_forward(x, prep))
    assert out.shape == (N, NUM_CLASSES), out.shape

    ref = reference_forward(x, params)
    err = float(jnp.max(jnp.abs(out - ref)))
    assert jnp.allclose(out, ref, rtol=1e-3, atol=1e-3), err

    print("KERNEL_OK")
</pallas_src>

<mosaic_0001>
module attributes {stable_mosaic.version = 11 : i64} {
  func.func @_fused_kernel(%arg0: i32, %arg1: memref<3x18x18x1xf32, #tpu.memory_space<vmem>>, %arg2: memref<9x1x50xf32, #tpu.memory_space<vmem>>, %arg3: memref<1x50xf32, #tpu.memory_space<vmem>>, %arg4: memref<9x50x100xf32, #tpu.memory_space<vmem>>, %arg5: memref<1x100xf32, #tpu.memory_space<vmem>>, %arg6: memref<1600x10xf32, #tpu.memory_space<vmem>>, %arg7: memref<1x10xf32, #tpu.memory_space<vmem>>, %arg8: memref<3x1x10xf32, #tpu.memory_space<vmem>>, %arg9: memref<3x16x16x50xf32, #tpu.memory_space<vmem>>, %arg10: memref<3x10x10x50xf32, #tpu.memory_space<vmem>>, %arg11: memref<3x8x8x100xf32, #tpu.memory_space<vmem>>, %arg12: memref<3x1600xf32, #tpu.memory_space<vmem>>) attributes {dimension_semantics = [#tpu.dimension_semantics<parallel>], iteration_bounds = array<i64: 2>, scalar_prefetch = 0 : i64, scratch_operands = 4 : i64, tpu.core_type = #tpu.core_type<tc>, window_params = [{transform_indices = @transform_0, window_bounds = array<i64: 3, 18, 18, 1>}, {pipeline_mode = #tpu.pipeline_mode<synchronous>, transform_indices = @transform_1, window_bounds = array<i64: 9, 1, 50>}, {pipeline_mode = #tpu.pipeline_mode<synchronous>, transform_indices = @transform_2, window_bounds = array<i64: 1, 50>}, {pipeline_mode = #tpu.pipeline_mode<synchronous>, transform_indices = @transform_3, window_bounds = array<i64: 9, 50, 100>}, {pipeline_mode = #tpu.pipeline_mode<synchronous>, transform_indices = @transform_4, window_bounds = array<i64: 1, 100>}, {pipeline_mode = #tpu.pipeline_mode<synchronous>, transform_indices = @transform_5, window_bounds = array<i64: 1600, 10>}, {pipeline_mode = #tpu.pipeline_mode<synchronous>, transform_indices = @transform_6, window_bounds = array<i64: 1, 10>}, {transform_indices = @transform_7, window_bounds = array<i64: 3, 1, 10>}]} {
    %c0 = arith.constant 0 : index
    %c0_0 = arith.constant 0 : index
    %0 = vector.load %arg3[%c0, %c0_0] : memref<1x50xf32, #tpu.memory_space<vmem>>, vector<1x50xf32>
    %c0_1 = arith.constant 0 : index
    %c0_2 = arith.constant 0 : index
    %1 = vector.load %arg5[%c0_1, %c0_2] : memref<1x100xf32, #tpu.memory_space<vmem>>, vector<1x100xf32>
    %c0_3 = arith.constant 0 : index
    %c0_4 = arith.constant 0 : index
    %c0_5 = arith.constant 0 : index
    %2 = vector.load %arg2[%c0_3, %c0_4, %c0_5] : memref<9x1x50xf32, #tpu.memory_space<vmem>>, vector<1x1x50xf32>
    %3 = vector.shape_cast %2 : vector<1x1x50xf32> to vector<1x50xf32>
    %c1 = arith.constant 1 : index
    %c0_6 = arith.constant 0 : index
    %c0_7 = arith.constant 0 : index
    %4 = vector.load %arg2[%c1, %c0_6, %c0_7] : memref<9x1x50xf32, #tpu.memory_space<vmem>>, vector<1x1x50xf32>
    %5 = vector.shape_cast %4 : vector<1x1x50xf32> to vector<1x50xf32>
    %c2 = arith.constant 2 : index
    %c0_8 = arith.constant 0 : index
    %c0_9 = arith.constant 0 : index
    %6 = vector.load %arg2[%c2, %c0_8, %c0_9] : memref<9x1x50xf32, #tpu.memory_space<vmem>>, vector<1x1x50xf32>
    %7 = vector.shape_cast %6 : vector<1x1x50xf32> to vector<1x50xf32>
    %c3 = arith.constant 3 : index
    %c0_10 = arith.constant 0 : index
    %c0_11 = arith.constant 0 : index
    %8 = vector.load %arg2[%c3, %c0_10, %c0_11] : memref<9x1x50xf32, #tpu.memory_space<vmem>>, vector<1x1x50xf32>
    %9 = vector.shape_cast %8 : vector<1x1x50xf32> to vector<1x50xf32>
    %c4 = arith.constant 4 : index
    %c0_12 = arith.constant 0 : index
    %c0_13 = arith.constant 0 : index
    %10 = vector.load %arg2[%c4, %c0_12, %c0_13] : memref<9x1x50xf32, #tpu.memory_space<vmem>>, vector<1x1x50xf32>
    %11 = vector.shape_cast %10 : vector<1x1x50xf32> to vector<1x50xf32>
    %c5 = arith.constant 5 : index
    %c0_14 = arith.constant 0 : index
    %c0_15 = arith.constant 0 : index
    %12 = vector.load %arg2[%c5, %c0_14, %c0_15] : memref<9x1x50xf32, #tpu.memory_space<vmem>>, vector<1x1x50xf32>
    %13 = vector.shape_cast %12 : vector<1x1x50xf32> to vector<1x50xf32>
    %c6 = arith.constant 6 : index
    %c0_16 = arith.constant 0 : index
    %c0_17 = arith.constant 0 : index
    %14 = vector.load %arg2[%c6, %c0_16, %c0_17] : memref<9x1x50xf32, #tpu.memory_space<vmem>>, vector<1x1x50xf32>
    %15 = vector.shape_cast %14 : vector<1x1x50xf32> to vector<1x50xf32>
    %c7 = arith.constant 7 : index
    %c0_18 = arith.constant 0 : index
    %c0_19 = arith.constant 0 : index
    %16 = vector.load %arg2[%c7, %c0_18, %c0_19] : memref<9x1x50xf32, #tpu.memory_space<vmem>>, vector<1x1x50xf32>
    %17 = vector.shape_cast %16 : vector<1x1x50xf32> to vector<1x50xf32>
    %c8 = arith.constant 8 : index
    %c0_20 = arith.constant 0 : index
    %c0_21 = arith.constant 0 : index
    %18 = vector.load %arg2[%c8, %c0_20, %c0_21] : memref<9x1x50xf32, #tpu.memory_space<vmem>>, vector<1x1x50xf32>
    %19 = vector.shape_cast %18 : vector<1x1x50xf32> to vector<1x50xf32>
    %c0_i32 = arith.constant 0 : i32
    %c3_i32 = arith.constant 3 : i32
    %20 = arith.addi %c0_i32, %c3_i32 : i32
    %c1_i32 = arith.constant 1 : i32
    scf.for %arg13 = %c0_i32 to %20 step %c1_i32  : i32 {
      %c1_i32_365 = arith.constant 1 : i32
      %307 = arith.muli %arg13, %c1_i32_365 : i32
      %c0_i32_366 = arith.constant 0 : i32
      %308 = arith.addi %c0_i32_366, %307 : i32
      %309 = arith.index_cast %308 : i32 to index
      %c0_367 = arith.constant 0 : index
      %c0_368 = arith.constant 0 : index
      %c0_369 = arith.constant 0 : index
      %310 = vector.load %arg1[%309, %c0_367, %c0_368, %c0_369] : memref<3x18x18x1xf32, #tpu.memory_space<vmem>>, vector<1x16x16x1xf32>
      %311 = vector.shape_cast %310 : vector<1x16x16x1xf32> to vector<16x16x1xf32>
      %312 = vector.shape_cast %3 : vector<1x50xf32> to vector<1x1x50xf32>
      %313 = vector.broadcast %311 : vector<16x16x1xf32> to vector<16x16x50xf32>
      %314 = vector.broadcast %312 : vector<1x1x50xf32> to vector<16x16x50xf32>
      %315 = arith.mulf %313, %314 : vector<16x16x50xf32>
      %316 = arith.index_cast %308 : i32 to index
      %c0_370 = arith.constant 0 : index
      %c1_371 = arith.constant 1 : index
      %c0_372 = arith.constant 0 : index
      %317 = vector.load %arg1[%316, %c0_370, %c1_371, %c0_372] : memref<3x18x18x1xf32, #tpu.memory_space<vmem>>, vector<1x16x16x1xf32>
      %318 = vector.shape_cast %317 : vector<1x16x16x1xf32> to vector<16x16x1xf32>
      %319 = vector.shape_cast %5 : vector<1x50xf32> to vector<1x1x50xf32>
      %320 = vector.broadcast %318 : vector<16x16x1xf32> to vector<16x16x50xf32>
      %321 = vector.broadcast %319 : vector<1x1x50xf32> to vector<16x16x50xf32>
      %322 = arith.mulf %320, %321 : vector<16x16x50xf32>
      %323 = arith.addf %315, %322 : vector<16x16x50xf32>
      %324 = arith.index_cast %308 : i32 to index
      %c0_373 = arith.constant 0 : index
      %c2_374 = arith.constant 2 : index
      %c0_375 = arith.constant 0 : index
      %325 = vector.load %arg1[%324, %c0_373, %c2_374, %c0_375] : memref<3x18x18x1xf32, #tpu.memory_space<vmem>>, vector<1x16x16x1xf32>
      %326 = vector.shape_cast %325 : vector<1x16x16x1xf32> to vector<16x16x1xf32>
      %327 = vector.shape_cast %7 : vector<1x50xf32> to vector<1x1x50xf32>
      %328 = vector.broadcast %326 : vector<16x16x1xf32> to vector<16x16x50xf32>
      %329 = vector.broadcast %327 : vector<1x1x50xf32> to vector<16x16x50xf32>
      %330 = arith.mulf %328, %329 : vector<16x16x50xf32>
      %331 = arith.addf %323, %330 : vector<16x16x50xf32>
      %332 = arith.index_cast %308 : i32 to index
      %c1_376 = arith.constant 1 : index
      %c0_377 = arith.constant 0 : index
      %c0_378 = arith.constant 0 : index
      %333 = vector.load %arg1[%332, %c1_376, %c0_377, %c0_378] : memref<3x18x18x1xf32, #tpu.memory_space<vmem>>, vector<1x16x16x1xf32>
      %334 = vector.shape_cast %333 : vector<1x16x16x1xf32> to vector<16x16x1xf32>
      %335 = vector.shape_cast %9 : vector<1x50xf32> to vector<1x1x50xf32>
      %336 = vector.broadcast %334 : vector<16x16x1xf32> to vector<16x16x50xf32>
      %337 = vector.broadcast %335 : vector<1x1x50xf32> to vector<16x16x50xf32>
      %338 = arith.mulf %336, %337 : vector<16x16x50xf32>
      %339 = arith.addf %331, %338 : vector<16x16x50xf32>
      %340 = arith.index_cast %308 : i32 to index
      %c1_379 = arith.constant 1 : index
      %c1_380 = arith.constant 1 : index
      %c0_381 = arith.constant 0 : index
      %341 = vector.load %arg1[%340, %c1_379, %c1_380, %c0_381] : memref<3x18x18x1xf32, #tpu.memory_space<vmem>>, vector<1x16x16x1xf32>
      %342 = vector.shape_cast %341 : vector<1x16x16x1xf32> to vector<16x16x1xf32>
      %343 = vector.shape_cast %11 : vector<1x50xf32> to vector<1x1x50xf32>
      %344 = vector.broadcast %342 : vector<16x16x1xf32> to vector<16x16x50xf32>
      %345 = vector.broadcast %343 : vector<1x1x50xf32> to vector<16x16x50xf32>
      %346 = arith.mulf %344, %345 : vector<16x16x50xf32>
      %347 = arith.addf %339, %346 : vector<16x16x50xf32>
      %348 = arith.index_cast %308 : i32 to index
      %c1_382 = arith.constant 1 : index
      %c2_383 = arith.constant 2 : index
      %c0_384 = arith.constant 0 : index
      %349 = vector.load %arg1[%348, %c1_382, %c2_383, %c0_384] : memref<3x18x18x1xf32, #tpu.memory_space<vmem>>, vector<1x16x16x1xf32>
      %350 = vector.shape_cast %349 : vector<1x16x16x1xf32> to vector<16x16x1xf32>
      %351 = vector.shape_cast %13 : vector<1x50xf32> to vector<1x1x50xf32>
      %352 = vector.broadcast %350 : vector<16x16x1xf32> to vector<16x16x50xf32>
      %353 = vector.broadcast %351 : vector<1x1x50xf32> to vector<16x16x50xf32>
      %354 = arith.mulf %352, %353 : vector<16x16x50xf32>
      %355 = arith.addf %347, %354 : vector<16x16x50xf32>
      %356 = arith.index_cast %308 : i32 to index
      %c2_385 = arith.constant 2 : index
      %c0_386 = arith.constant 0 : index
      %c0_387 = arith.constant 0 : index
      %357 = vector.load %arg1[%356, %c2_385, %c0_386, %c0_387] : memref<3x18x18x1xf32, #tpu.memory_space<vmem>>, vector<1x16x16x1xf32>
      %358 = vector.shape_cast %357 : vector<1x16x16x1xf32> to vector<16x16x1xf32>
      %359 = vector.shape_cast %15 : vector<1x50xf32> to vector<1x1x50xf32>
      %360 = vector.broadcast %358 : vector<16x16x1xf32> to vector<16x16x50xf32>
      %361 = vector.broadcast %359 : vector<1x1x50xf32> to vector<16x16x50xf32>
      %362 = arith.mulf %360, %361 : vector<16x16x50xf32>
      %363 = arith.addf %355, %362 : vector<16x16x50xf32>
      %364 = arith.index_cast %308 : i32 to index
      %c2_388 = arith.constant 2 : index
      %c1_389 = arith.constant 1 : index
      %c0_390 = arith.constant 0 : index
      %365 = vector.load %arg1[%364, %c2_388, %c1_389, %c0_390] : memref<3x18x18x1xf32, #tpu.memory_space<vmem>>, vector<1x16x16x1xf32>
      %366 = vector.shape_cast %365 : vector<1x16x16x1xf32> to vector<16x16x1xf32>
      %367 = vector.shape_cast %17 : vector<1x50xf32> to vector<1x1x50xf32>
      %368 = vector.broadcast %366 : vector<16x16x1xf32> to vector<16x16x50xf32>
      %369 = vector.broadcast %367 : vector<1x1x50xf32> to vector<16x16x50xf32>
      %370 = arith.mulf %368, %369 : vector<16x16x50xf32>
      %371 = arith.addf %363, %370 : vector<16x16x50xf32>
      %372 = arith.index_cast %308 : i32 to index
      %c2_391 = arith.constant 2 : index
      %c2_392 = arith.constant 2 : index
      %c0_393 = arith.constant 0 : index
      %373 = vector.load %arg1[%372, %c2_391, %c2_392, %c0_393] : memref<3x18x18x1xf32, #tpu.memory_space<vmem>>, vector<1x16x16x1xf32>
      %374 = vector.shape_cast %373 : vector<1x16x16x1xf32> to vector<16x16x1xf32>
      %375 = vector.shape_cast %19 : vector<1x50xf32> to vector<1x1x50xf32>
      %376 = vector.broadcast %374 : vector<16x16x1xf32> to vector<16x16x50xf32>
      %377 = vector.broadcast %375 : vector<1x1x50xf32> to vector<16x16x50xf32>
      %378 = arith.mulf %376, %377 : vector<16x16x50xf32>
      %379 = arith.addf %371, %378 : vector<16x16x50xf32>
      %380 = arith.index_cast %308 : i32 to index
      %c0_394 = arith.constant 0 : index
      %c0_395 = arith.constant 0 : index
      %c0_396 = arith.constant 0 : index
      %381 = vector.load %arg9[%380, %c0_394, %c0_395, %c0_396] : memref<3x16x16x50xf32, #tpu.memory_space<vmem>>, vector<1x16x16x50xf32>
      %382 = vector.shape_cast %381 : vector<1x16x16x50xf32> to vector<16x16x50xf32>
      %383 = vector.shape_cast %379 : vector<16x16x50xf32> to vector<1x16x16x50xf32>
      tpu.vector_store %arg9[%380, %c0_394, %c0_395, %c0_396], %383 {strides = array<i32>} : memref<3x16x16x50xf32, #tpu.memory_space<vmem>>, vector<1x16x16x50xf32>,
    }
    %c3_i32_22 = arith.constant 3 : i32
    %c0_23 = arith.constant 0 : index
    %c0_24 = arith.constant 0 : index
    %c0_25 = arith.constant 0 : index
    %c0_26 = arith.constant 0 : index
    %21 = tpu.strided_load %arg9[%c0_23, %c0_24, %c0_25, %c0_26] {strides = array<i32: 1, 2, 2, 1>} : memref<3x16x16x50xf32, #tpu.memory_space<vmem>>, vector<3x8x8x50xf32>
    %c0_27 = arith.constant 0 : index
    %c0_28 = arith.constant 0 : index
    %c1_29 = arith.constant 1 : index
    %c0_30 = arith.constant 0 : index
    %22 = tpu.strided_load %arg9[%c0_27, %c0_28, %c1_29, %c0_30] {strides = array<i32: 1, 2, 2, 1>} : memref<3x16x16x50xf32, #tpu.memory_space<vmem>>, vector<3x8x8x50xf32>
    %23 = arith.maximumf %21, %22 : vector<3x8x8x50xf32>
    %c0_31 = arith.constant 0 : index
    %c1_32 = arith.constant 1 : index
    %c0_33 = arith.constant 0 : index
    %c0_34 = arith.constant 0 : index
    %24 = tpu.strided_load %arg9[%c0_31, %c1_32, %c0_33, %c0_34] {strides = array<i32: 1, 2, 2, 1>} : memref<3x16x16x50xf32, #tpu.memory_space<vmem>>, vector<3x8x8x50xf32>
    %c0_35 = arith.constant 0 : index
    %c1_36 = arith.constant 1 : index
    %c1_37 = arith.constant 1 : index
    %c0_38 = arith.constant 0 : index
    %25 = tpu.strided_load %arg9[%c0_35, %c1_36, %c1_37, %c0_38] {strides = array<i32: 1, 2, 2, 1>} : memref<3x16x16x50xf32, #tpu.memory_space<vmem>>, vector<3x8x8x50xf32>
    %26 = arith.maximumf %24, %25 : vector<3x8x8x50xf32>
    %27 = arith.maximumf %23, %26 : vector<3x8x8x50xf32>
    %28 = vector.shape_cast %0 : vector<1x50xf32> to vector<1x1x1x50xf32>
    %29 = vector.broadcast %28 : vector<1x1x1x50xf32> to vector<3x8x8x50xf32>
    %30 = arith.addf %27, %29 : vector<3x8x8x50xf32>
    %cst = arith.constant 0.000000e+00 : f32
    %31 = vector.broadcast %cst : f32 to vector<3x8x8x50xf32>
    %32 = arith.maximumf %30, %31 : vector<3x8x8x50xf32>
    %cst_39 = arith.constant 0.000000e+00 : f32
    %33 = vector.broadcast %cst_39 : f32 to vector<3x1x10x50xf32>
    %c0_40 = arith.constant 0 : index
    %c0_41 = arith.constant 0 : index
    %c0_42 = arith.constant 0 : index
    %c0_43 = arith.constant 0 : index
    %34 = vector.load %arg10[%c0_40, %c0_41, %c0_42, %c0_43] : memref<3x10x10x50xf32, #tpu.memory_space<vmem>>, vector<3x1x10x50xf32>
    tpu.vector_store %arg10[%c0_40, %c0_41, %c0_42, %c0_43], %33 {strides = array<i32>} : memref<3x10x10x50xf32, #tpu.memory_space<vmem>>, vector<3x1x10x50xf32>,
    %cst_44 = arith.constant 0.000000e+00 : f32
    %35 = vector.broadcast %cst_44 : f32 to vector<3x1x10x50xf32>
    %c0_45 = arith.constant 0 : index
    %c9 = arith.constant 9 : index
    %c0_46 = arith.constant 0 : index
    %c0_47 = arith.constant 0 : index
    %36 = vector.load %arg10[%c0_45, %c9, %c0_46, %c0_47] : memref<3x10x10x50xf32, #tpu.memory_space<vmem>>, vector<3x1x10x50xf32>
    tpu.vector_store %arg10[%c0_45, %c9, %c0_46, %c0_47], %35 {strides = array<i32>} : memref<3x10x10x50xf32, #tpu.memory_space<vmem>>, vector<3x1x10x50xf32>,
    %cst_48 = arith.constant 0.000000e+00 : f32
    %37 = vector.broadcast %cst_48 : f32 to vector<3x10x1x50xf32>
    %c0_49 = arith.constant 0 : index
    %c0_50 = arith.constant 0 : index
    %c0_51 = arith.constant 0 : index
    %c0_52 = arith.constant 0 : index
    %38 = vector.load %arg10[%c0_49, %c0_50, %c0_51, %c0_52] : memref<3x10x10x50xf32, #tpu.memory_space<vmem>>, vector<3x10x1x50xf32>
    tpu.vector_store %arg10[%c0_49, %c0_50, %c0_51, %c0_52], %37 {strides = array<i32>} : memref<3x10x10x50xf32, #tpu.memory_space<vmem>>, vector<3x10x1x50xf32>,
    %cst_53 = arith.constant 0.000000e+00 : f32
    %39 = vector.broadcast %cst_53 : f32 to vector<3x10x1x50xf32>
    %c0_54 = arith.constant 0 : index
    %c0_55 = arith.constant 0 : index
    %c9_56 = arith.constant 9 : index
    %c0_57 = arith.constant 0 : index
    %40 = vector.load %arg10[%c0_54, %c0_55, %c9_56, %c0_57] : memref<3x10x10x50xf32, #tpu.memory_space<vmem>>, vector<3x10x1x50xf32>
    tpu.vector_store %arg10[%c0_54, %c0_55, %c9_56, %c0_57], %39 {strides = array<i32>} : memref<3x10x10x50xf32, #tpu.memory_space<vmem>>, vector<3x10x1x50xf32>,
    %c0_58 = arith.constant 0 : index
    %c1_59 = arith.constant 1 : index
    %c1_60 = arith.constant 1 : index
    %c0_61 = arith.constant 0 : index
    %41 = vector.load %arg10[%c0_58, %c1_59, %c1_60, %c0_61] : memref<3x10x10x50xf32, #tpu.memory_space<vmem>>, vector<3x8x8x50xf32>
    tpu.vector_store %arg10[%c0_58, %c1_59, %c1_60, %c0_61], %32 {strides = array<i32>} : memref<3x10x10x50xf32, #tpu.memory_space<vmem>>, vector<3x8x8x50xf32>,
    %c0_i32_62 = arith.constant 0 : i32
    %c3_i32_63 = arith.constant 3 : i32
    %42 = arith.addi %c0_i32_62, %c3_i32_63 : i32
    %c1_i32_64 = arith.constant 1 : i32
    scf.for %arg13 = %c0_i32_62 to %42 step %c1_i32_64  : i32 {
      %c1_i32_365 = arith.constant 1 : i32
      %307 = arith.muli %arg13, %c1_i32_365 : i32
      %c0_i32_366 = arith.constant 0 : i32
      %308 = arith.addi %c0_i32_366, %307 : i32
      %309 = arith.index_cast %308 : i32 to index
      %c0_367 = arith.constant 0 : index
      %c0_368 = arith.constant 0 : index
      %c0_369 = arith.constant 0 : index
      %310 = vector.load %arg10[%309, %c0_367, %c0_368, %c0_369] : memref<3x10x10x50xf32, #tpu.memory_space<vmem>>, vector<1x8x8x50xf32>
      %311 = vector.shape_cast %310 : vector<1x8x8x50xf32> to vector<8x8x50xf32>
      %312 = vector.shape_cast %311 : vector<8x8x50xf32> to vector<64x50xf32>
      %c0_370 = arith.constant 0 : index
      %c0_371 = arith.constant 0 : index
      %c0_372 = arith.constant 0 : index
      %313 = vector.load %arg4[%c0_370, %c0_371, %c0_372] : memref<9x50x100xf32, #tpu.memory_space<vmem>>, vector<1x50x100xf32>
      %314 = vector.shape_cast %313 : vector<1x50x100xf32> to vector<50x100xf32>
      %cst_373 = arith.constant dense<0.000000e+00> : vector<64x100xf32>
      %315 = tpu.matmul %312, %314, %cst_373 {dimension_numbers = #tpu.dot_dimension_numbers<[1], [0], [0], [1], [0, 0, 1, 1], [], []>} : vector<64x50xf32>, vector<50x100xf32>, vector<64x100xf32> -> vector<64x100xf32>
      %316 = arith.index_cast %308 : i32 to index
      %c0_374 = arith.constant 0 : index
      %c1_375 = arith.constant 1 : index
      %c0_376 = arith.constant 0 : index
      %317 = vector.load %arg10[%316, %c0_374, %c1_375, %c0_376] : memref<3x10x10x50xf32, #tpu.memory_space<vmem>>, vector<1x8x8x50xf32>
      %318 = vector.shape_cast %317 : vector<1x8x8x50xf32> to vector<8x8x50xf32>
      %319 = vector.shape_cast %318 : vector<8x8x50xf32> to vector<64x50xf32>
      %c1_377 = arith.constant 1 : index
      %c0_378 = arith.constant 0 : index
      %c0_379 = arith.constant 0 : index
      %320 = vector.load %arg4[%c1_377, %c0_378, %c0_379] : memref<9x50x100xf32, #tpu.memory_space<vmem>>, vector<1x50x100xf32>
      %321 = vector.shape_cast %320 : vector<1x50x100xf32> to vector<50x100xf32>
      %cst_380 = arith.constant dense<0.000000e+00> : vector<64x100xf32>
      %322 = tpu.matmul %319, %321, %cst_380 {dimension_numbers = #tpu.dot_dimension_numbers<[1], [0], [0], [1], [0, 0, 1, 1], [], []>} : vector<64x50xf32>, vector<50x100xf32>, vector<64x100xf32> -> vector<64x100xf32>
      %323 = arith.addf %315, %322 : vector<64x100xf32>
      %324 = arith.index_cast %308 : i32 to index
      %c0_381 = arith.constant 0 : index
      %c2_382 = arith.constant 2 : index
      %c0_383 = arith.constant 0 : index
      %325 = vector.load %arg10[%324, %c0_381, %c2_382, %c0_383] : memref<3x10x10x50xf32, #tpu.memory_space<vmem>>, vector<1x8x8x50xf32>
      %326 = vector.shape_cast %325 : vector<1x8x8x50xf32> to vector<8x8x50xf32>
      %327 = vector.shape_cast %326 : vector<8x8x50xf32> to vector<64x50xf32>
      %c2_384 = arith.constant 2 : index
      %c0_385 = arith.constant 0 : index
      %c0_386 = arith.constant 0 : index
      %328 = vector.load %arg4[%c2_384, %c0_385, %c0_386] : memref<9x50x100xf32, #tpu.memory_space<vmem>>, vector<1x50x100xf32>
      %329 = vector.shape_cast %328 : vector<1x50x100xf32> to vector<50x100xf32>
      %cst_387 = arith.constant dense<0.000000e+00> : vector<64x100xf32>
      %330 = tpu.matmul %327, %329, %cst_387 {dimension_numbers = #tpu.dot_dimension_numbers<[1], [0], [0], [1], [0, 0, 1, 1], [], []>} : vector<64x50xf32>, vector<50x100xf32>, vector<64x100xf32> -> vector<64x100xf32>
      %331 = arith.addf %323, %330 : vector<64x100xf32>
      %332 = arith.index_cast %308 : i32 to index
      %c1_388 = arith.constant 1 : index
      %c0_389 = arith.constant 0 : index
      %c0_390 = arith.constant 0 : index
      %333 = vector.load %arg10[%332, %c1_388, %c0_389, %c0_390] : memref<3x10x10x50xf32, #tpu.memory_space<vmem>>, vector<1x8x8x50xf32>
      %334 = vector.shape_cast %333 : vector<1x8x8x50xf32> to vector<8x8x50xf32>
      %335 = vector.shape_cast %334 : vector<8x8x50xf32> to vector<64x50xf32>
      %c3_391 = arith.constant 3 : index
      %c0_392 = arith.constant 0 : index
      %c0_393 = arith.constant 0 : index
      %336 = vector.load %arg4[%c3_391, %c0_392, %c0_393] : memref<9x50x100xf32, #tpu.memory_space<vmem>>, vector<1x50x100xf32>
      %337 = vector.shape_cast %336 : vector<1x50x100xf32> to vector<50x100xf32>
      %cst_394 = arith.constant dense<0.000000e+00> : vector<64x100xf32>
      %338 = tpu.matmul %335, %337, %cst_394 {dimension_numbers = #tpu.dot_dimension_numbers<[1], [0], [0], [1], [0, 0, 1, 1], [], []>} : vector<64x50xf32>, vector<50x100xf32>, vector<64x100xf32> -> vector<64x100xf32>
      %339 = arith.addf %331, %338 : vector<64x100xf32>
      %340 = arith.index_cast %308 : i32 to index
      %c1_395 = arith.constant 1 : index
      %c1_396 = arith.constant 1 : index
      %c0_397 = arith.constant 0 : index
      %341 = vector.load %arg10[%340, %c1_395, %c1_396, %c0_397] : memref<3x10x10x50xf32, #tpu.memory_space<vmem>>, vector<1x8x8x50xf32>
      %342 = vector.shape_cast %341 : vector<1x8x8x50xf32> to vector<8x8x50xf32>
      %343 = vector.shape_cast %342 : vector<8x8x50xf32> to vector<64x50xf32>
      %c4_398 = arith.constant 4 : index
      %c0_399 = arith.constant 0 : index
      %c0_400 = arith.constant 0 : index
      %344 = vector.load %arg4[%c4_398, %c0_399, %c0_400] : memref<9x50x100xf32, #tpu.memory_space<vmem>>, vector<1x50x100xf32>
      %345 = vector.shape_cast %344 : vector<1x50x100xf32> to vector<50x100xf32>
      %cst_401 = arith.constant dense<0.000000e+00> : vector<64x100xf32>
      %346 = tpu.matmul %343, %345, %cst_401 {dimension_numbers = #tpu.dot_dimension_numbers<[1], [0], [0], [1], [0, 0, 1, 1], [], []>} : vector<64x50xf32>, vector<50x100xf32>, vector<64x100xf32> -> vector<64x100xf32>
      %347 = arith.addf %339, %346 : vector<64x100xf32>
      %348 = arith.index_cast %308 : i32 to index
      %c1_402 = arith.constant 1 : index
      %c2_403 = arith.constant 2 : index
      %c0_404 = arith.constant 0 : index
      %349 = vector.load %arg10[%348, %c1_402, %c2_403, %c0_404] : memref<3x10x10x50xf32, #tpu.memory_space<vmem>>, vector<1x8x8x50xf32>
      %350 = vector.shape_cast %349 : vector<1x8x8x50xf32> to vector<8x8x50xf32>
      %351 = vector.shape_cast %350 : vector<8x8x50xf32> to vector<64x50xf32>
      %c5_405 = arith.constant 5 : index
      %c0_406 = arith.constant 0 : index
      %c0_407 = arith.constant 0 : index
      %352 = vector.load %arg4[%c5_405, %c0_406, %c0_407] : memref<9x50x100xf32, #tpu.memory_space<vmem>>, vector<1x50x100xf32>
      %353 = vector.shape_cast %352 : vector<1x50x100xf32> to vector<50x100xf32>
      %cst_408 = arith.constant dense<0.000000e+00> : vector<64x100xf32>
      %354 = tpu.matmul %351, %353, %cst_408 {dimension_numbers = #tpu.dot_dimension_numbers<[1], [0], [0], [1], [0, 0, 1, 1], [], []>} : vector<64x50xf32>, vector<50x100xf32>, vector<64x100xf32> -> vector<64x100xf32>
      %355 = arith.addf %347, %354 : vector<64x100xf32>
      %356 = arith.index_cast %308 : i32 to index
      %c2_409 = arith.constant 2 : index
      %c0_410 = arith.constant 0 : index
      %c0_411 = arith.constant 0 : index
      %357 = vector.load %arg10[%356, %c2_409, %c0_410, %c0_411] : memref<3x10x10x50xf32, #tpu.memory_space<vmem>>, vector<1x8x8x50xf32>
      %358 = vector.shape_cast %357 : vector<1x8x8x50xf32> to vector<8x8x50xf32>
      %359 = vector.shape_cast %358 : vector<8x8x50xf32> to vector<64x50xf32>
      %c6_412 = arith.constant 6 : index
      %c0_413 = arith.constant 0 : index
      %c0_414 = arith.constant 0 : index
      %360 = vector.load %arg4[%c6_412, %c0_413, %c0_414] : memref<9x50x100xf32, #tpu.memory_space<vmem>>, vector<1x50x100xf32>
      %361 = vector.shape_cast %360 : vector<1x50x100xf32> to vector<50x100xf32>
      %cst_415 = arith.constant dense<0.000000e+00> : vector<64x100xf32>
      %362 = tpu.matmul %359, %361, %cst_415 {dimension_numbers = #tpu.dot_dimension_numbers<[1], [0], [0], [1], [0, 0, 1, 1], [], []>} : vector<64x50xf32>, vector<50x100xf32>, vector<64x100xf32> -> vector<64x100xf32>
      %363 = arith.addf %355, %362 : vector<64x100xf32>
      %364 = arith.index_cast %308 : i32 to index
      %c2_416 = arith.constant 2 : index
      %c1_417 = arith.constant 1 : index
      %c0_418 = arith.constant 0 : index
      %365 = vector.load %arg10[%364, %c2_416, %c1_417, %c0_418] : memref<3x10x10x50xf32, #tpu.memory_space<vmem>>, vector<1x8x8x50xf32>
      %366 = vector.shape_cast %365 : vector<1x8x8x50xf32> to vector<8x8x50xf32>
      %367 = vector.shape_cast %366 : vector<8x8x50xf32> to vector<64x50xf32>
      %c7_419 = arith.constant 7 : index
      %c0_420 = arith.constant 0 : index
      %c0_421 = arith.constant 0 : index
      %368 = vector.load %arg4[%c7_419, %c0_420, %c0_421] : memref<9x50x100xf32, #tpu.memory_space<vmem>>, vector<1x50x100xf32>
      %369 = vector.shape_cast %368 : vector<1x50x100xf32> to vector<50x100xf32>
      %cst_422 = arith.constant dense<0.000000e+00> : vector<64x100xf32>
      %370 = tpu.matmul %367, %369, %cst_422 {dimension_numbers = #tpu.dot_dimension_numbers<[1], [0], [0], [1], [0, 0, 1, 1], [], []>} : vector<64x50xf32>, vector<50x100xf32>, vector<64x100xf32> -> vector<64x100xf32>
      %371 = arith.addf %363, %370 : vector<64x100xf32>
      %372 = arith.index_cast %308 : i32 to index
      %c2_423 = arith.constant 2 : index
      %c2_424 = arith.constant 2 : index
      %c0_425 = arith.constant 0 : index
      %373 = vector.load %arg10[%372, %c2_423, %c2_424, %c0_425] : memref<3x10x10x50xf32, #tpu.memory_space<vmem>>, vector<1x8x8x50xf32>
      %374 = vector.shape_cast %373 : vector<1x8x8x50xf32> to vector<8x8x50xf32>
      %375 = vector.shape_cast %374 : vector<8x8x50xf32> to vector<64x50xf32>
      %c8_426 = arith.constant 8 : index
      %c0_427 = arith.constant 0 : index
      %c0_428 = arith.constant 0 : index
      %376 = vector.load %arg4[%c8_426, %c0_427, %c0_428] : memref<9x50x100xf32, #tpu.memory_space<vmem>>, vector<1x50x100xf32>
      %377 = vector.shape_cast %376 : vector<1x50x100xf32> to vector<50x100xf32>
      %cst_429 = arith.constant dense<0.000000e+00> : vector<64x100xf32>
      %378 = tpu.matmul %375, %377, %cst_429 {dimension_numbers = #tpu.dot_dimension_numbers<[1], [0], [0], [1], [0, 0, 1, 1], [], []>} : vector<64x50xf32>, vector<50x100xf32>, vector<64x100xf32> -> vector<64x100xf32>
      %379 = arith.addf %371, %378 : vector<64x100xf32>
      %380 = vector.shape_cast %379 : vector<64x100xf32> to vector<8x8x100xf32>
      %381 = arith.index_cast %308 : i32 to index
      %c0_430 = arith.constant 0 : index
      %c0_431 = arith.constant 0 : index
      %c0_432 = arith.constant 0 : index
      %382 = vector.load %arg11[%381, %c0_430, %c0_431, %c0_432] : memref<3x8x8x100xf32, #tpu.memory_space<vmem>>, vector<1x8x8x100xf32>
      %383 = vector.shape_cast %382 : vector<1x8x8x100xf32> to vector<8x8x100xf32>
      %384 = vector.shape_cast %380 : vector<8x8x100xf32> to vector<1x8x8x100xf32>
      tpu.vector_store %arg11[%381, %c0_430, %c0_431, %c0_432], %384 {strides = array<i32>} : memref<3x8x8x100xf32, #tpu.memory_space<vmem>>, vector<1x8x8x100xf32>,
    }
    %c3_i32_65 = arith.constant 3 : i32
    %c0_66 = arith.constant 0 : index
    %c0_67 = arith.constant 0 : index
    %c0_68 = arith.constant 0 : index
    %c0_69 = arith.constant 0 : index
    %43 = vector.load %arg11[%c0_66, %c0_67, %c0_68, %c0_69] : memref<3x8x8x100xf32, #tpu.memory_space<vmem>>, vector<3x1x1x100xf32>
    %44 = vector.shape_cast %43 : vector<3x1x1x100xf32> to vector<3x100xf32>
    %c0_70 = arith.constant 0 : index
    %c0_71 = arith.constant 0 : index
    %c1_72 = arith.constant 1 : index
    %c0_73 = arith.constant 0 : index
    %45 = vector.load %arg11[%c0_70, %c0_71, %c1_72, %c0_73] : memref<3x8x8x100xf32, #tpu.memory_space<vmem>>, vector<3x1x1x100xf32>
    %46 = vector.shape_cast %45 : vector<3x1x1x100xf32> to vector<3x100xf32>
    %47 = arith.maximumf %44, %46 : vector<3x100xf32>
    %c0_74 = arith.constant 0 : index
    %c1_75 = arith.constant 1 : index
    %c0_76 = arith.constant 0 : index
    %c0_77 = arith.constant 0 : index
    %48 = vector.load %arg11[%c0_74, %c1_75, %c0_76, %c0_77] : memref<3x8x8x100xf32, #tpu.memory_space<vmem>>, vector<3x1x1x100xf32>
    %49 = vector.shape_cast %48 : vector<3x1x1x100xf32> to vector<3x100xf32>
    %c0_78 = arith.constant 0 : index
    %c1_79 = arith.constant 1 : index
    %c1_80 = arith.constant 1 : index
    %c0_81 = arith.constant 0 : index
    %50 = vector.load %arg11[%c0_78, %c1_79, %c1_80, %c0_81] : memref<3x8x8x100xf32, #tpu.memory_space<vmem>>, vector<3x1x1x100xf32>
    %51 = vector.shape_cast %50 : vector<3x1x1x100xf32> to vector<3x100xf32>
    %52 = arith.maximumf %49, %51 : vector<3x100xf32>
    %53 = arith.maximumf %47, %52 : vector<3x100xf32>
    %54 = vector.broadcast %1 : vector<1x100xf32> to vector<3x100xf32>
    %55 = arith.addf %53, %54 : vector<3x100xf32>
    %cst_82 = arith.constant 0.000000e+00 : f32
    %56 = vector.broadcast %cst_82 : f32 to vector<3x100xf32>
    %57 = arith.maximumf %55, %56 : vector<3x100xf32>
    %c0_83 = arith.constant 0 : index
    %c0_84 = arith.constant 0 : index
    %58 = vector.load %arg12[%c0_83, %c0_84] : memref<3x1600xf32, #tpu.memory_space<vmem>>, vector<3x100xf32>
    tpu.vector_store %arg12[%c0_83, %c0_84], %57 {strides = array<i32>} : memref<3x1600xf32, #tpu.memory_space<vmem>>, vector<3x100xf32>,
    %c0_85 = arith.constant 0 : index
    %c0_86 = arith.constant 0 : index
    %c2_87 = arith.constant 2 : index
    %c0_88 = arith.constant 0 : index
    %59 = vector.load %arg11[%c0_85, %c0_86, %c2_87, %c0_88] : memref<3x8x8x100xf32, #tpu.memory_space<vmem>>, vector<3x1x1x100xf32>
    %60 = vector.shape_cast %59 : vector<3x1x1x100xf32> to vector<3x100xf32>
    %c0_89 = arith.constant 0 : index
    %c0_90 = arith.constant 0 : index
    %c3_91 = arith.constant 3 : index
    %c0_92 = arith.constant 0 : index
    %61 = vector.load %arg11[%c0_89, %c0_90, %c3_91, %c0_92] : memref<3x8x8x100xf32, #tpu.memory_space<vmem>>, vector<3x1x1x100xf32>
    %62 = vector.shape_cast %61 : vector<3x1x1x100xf32> to vector<3x100xf32>
    %63 = arith.maximumf %60, %62 : vector<3x100xf32>
    %c0_93 = arith.constant 0 : index
    %c1_94 = arith.constant 1 : index
    %c2_95 = arith.constant 2 : index
    %c0_96 = arith.constant 0 : index
    %64 = vector.load %arg11[%c0_93, %c1_94, %c2_95, %c0_96] : memref<3x8x8x100xf32, #tpu.memory_space<vmem>>, vector<3x1x1x100xf32>
    %65 = vector.shape_cast %64 : vector<3x1x1x100xf32> to vector<3x100xf32>
    %c0_97 = arith.constant 0 : index
    %c1_98 = arith.constant 1 : index
    %c3_99 = arith.constant 3 : index
    %c0_100 = arith.constant 0 : index
    %66 = vector.load %arg11[%c0_97, %c1_98, %c3_99, %c0_100] : memref<3x8x8x100xf32, #tpu.memory_space<vmem>>, vector<3x1x1x100xf32>
    %67 = vector.shape_cast %66 : vector<3x1x1x100xf32> to vector<3x100xf32>
    %68 = arith.maximumf %65, %67 : vector<3x100xf32>
    %69 = arith.maximumf %63, %68 : vector<3x100xf32>
    %70 = vector.broadcast %1 : vector<1x100xf32> to vector<3x100xf32>
    %71 = arith.addf %69, %70 : vector<3x100xf32>
    %cst_101 = arith.constant 0.000000e+00 : f32
    %72 = vector.broadcast %cst_101 : f32 to vector<3x100xf32>
    %73 = arith.maximumf %71, %72 : vector<3x100xf32>
    %c0_102 = arith.constant 0 : index
    %c100 = arith.constant 100 : index
    %74 = vector.load %arg12[%c0_102, %c100] : memref<3x1600xf32, #tpu.memory_space<vmem>>, vector<3x100xf32>
    tpu.vector_store %arg12[%c0_102, %c100], %73 {strides = array<i32>} : memref<3x1600xf32, #tpu.memory_space<vmem>>, vector<3x100xf32>,
    %c0_103 = arith.constant 0 : index
    %c0_104 = arith.constant 0 : index
    %c4_105 = arith.constant 4 : index
    %c0_106 = arith.constant 0 : index
    %75 = vector.load %arg11[%c0_103, %c0_104, %c4_105, %c0_106] : memref<3x8x8x100xf32, #tpu.memory_space<vmem>>, vector<3x1x1x100xf32>
    %76 = vector.shape_cast %75 : vector<3x1x1x100xf32> to vector<3x100xf32>
    %c0_107 = arith.constant 0 : index
    %c0_108 = arith.constant 0 : index
    %c5_109 = arith.constant 5 : index
    %c0_110 = arith.constant 0 : index
    %77 = vector.load %arg11[%c0_107, %c0_108, %c5_109, %c0_110] : memref<3x8x8x100xf32, #tpu.memory_space<vmem>>, vector<3x1x1x100xf32>
    %78 = vector.shape_cast %77 : vector<3x1x1x100xf32> to vector<3x100xf32>
    %79 = arith.maximumf %76, %78 : vector<3x100xf32>
    %c0_111 = arith.constant 0 : index
    %c1_112 = arith.constant 1 : index
    %c4_113 = arith.constant 4 : index
    %c0_114 = arith.constant 0 : index
    %80 = vector.load %arg11[%c0_111, %c1_112, %c4_113, %c0_114] : memref<3x8x8x100xf32, #tpu.memory_space<vmem>>, vector<3x1x1x100xf32>
    %81 = vector.shape_cast %80 : vector<3x1x1x100xf32> to vector<3x100xf32>
    %c0_115 = arith.constant 0 : index
    %c1_116 = arith.constant 1 : index
    %c5_117 = arith.constant 5 : index
    %c0_118 = arith.constant 0 : index
    %82 = vector.load %arg11[%c0_115, %c1_116, %c5_117, %c0_118] : memref<3x8x8x100xf32, #tpu.memory_space<vmem>>, vector<3x1x1x100xf32>
    %83 = vector.shape_cast %82 : vector<3x1x1x100xf32> to vector<3x100xf32>
    %84 = arith.maximumf %81, %83 : vector<3x100xf32>
    %85 = arith.maximumf %79, %84 : vector<3x100xf32>
    %86 = vector.broadcast %1 : vector<1x100xf32> to vector<3x100xf32>
    %87 = arith.addf %85, %86 : vector<3x100xf32>
    %cst_119 = arith.constant 0.000000e+00 : f32
    %88 = vector.broadcast %cst_119 : f32 to vector<3x100xf32>
    %89 = arith.maximumf %87, %88 : vector<3x100xf32>
    %c0_120 = arith.constant 0 : index
    %c200 = arith.constant 200 : index
    %90 = vector.load %arg12[%c0_120, %c200] : memref<3x1600xf32, #tpu.memory_space<vmem>>, vector<3x100xf32>
    tpu.vector_store %arg12[%c0_120, %c200], %89 {strides = array<i32>} : memref<3x1600xf32, #tpu.memory_space<vmem>>, vector<3x100xf32>,
    %c0_121 = arith.constant 0 : index
    %c0_122 = arith.constant 0 : index
    %c6_123 = arith.constant 6 : index
    %c0_124 = arith.constant 0 : index
    %91 = vector.load %arg11[%c0_121, %c0_122, %c6_123, %c0_124] : memref<3x8x8x100xf32, #tpu.memory_space<vmem>>, vector<3x1x1x100xf32>
    %92 = vector.shape_cast %91 : vector<3x1x1x100xf32> to vector<3x100xf32>
    %c0_125 = arith.constant 0 : index
    %c0_126 = arith.constant 0 : index
    %c7_127 = arith.constant 7 : index
    %c0_128 = arith.constant 0 : index
    %93 = vector.load %arg11[%c0_125, %c0_126, %c7_127, %c0_128] : memref<3x8x8x100xf32, #tpu.memory_space<vmem>>, vector<3x1x1x100xf32>
    %94 = vector.shape_cast %93 : vector<3x1x1x100xf32> to vector<3x100xf32>
    %95 = arith.maximumf %92, %94 : vector<3x100xf32>
    %c0_129 = arith.constant 0 : index
    %c1_130 = arith.constant 1 : index
    %c6_131 = arith.constant 6 : index
    %c0_132 = arith.constant 0 : index
    %96 = vector.load %arg11[%c0_129, %c1_130, %c6_131, %c0_132] : memref<3x8x8x100xf32, #tpu.memory_space<vmem>>, vector<3x1x1x100xf32>
    %97 = vector.shape_cast %96 : vector<3x1x1x100xf32> to vector<3x100xf32>
    %c0_133 = arith.constant 0 : index
    %c1_134 = arith.constant 1 : index
    %c7_135 = arith.constant 7 : index
    %c0_136 = arith.constant 0 : index
    %98 = vector.load %arg11[%c0_133, %c1_134, %c7_135, %c0_136] : memref<3x8x8x100xf32, #tpu.memory_space<vmem>>, vector<3x1x1x100xf32>
    %99 = vector.shape_cast %98 : vector<3x1x1x100xf32> to vector<3x100xf32>
    %100 = arith.maximumf %97, %99 : vector<3x100xf32>
    %101 = arith.maximumf %95, %100 : vector<3x100xf32>
    %102 = vector.broadcast %1 : vector<1x100xf32> to vector<3x100xf32>
    %103 = arith.addf %101, %102 : vector<3x100xf32>
    %cst_137 = arith.constant 0.000000e+00 : f32
    %104 = vector.broadcast %cst_137 : f32 to vector<3x100xf32>
    %105 = arith.maximumf %103, %104 : vector<3x100xf32>
    %c0_138 = arith.constant 0 : index
    %c300 = arith.constant 300 : index
    %106 = vector.load %arg12[%c0_138, %c300] : memref<3x1600xf32, #tpu.memory_space<vmem>>, vector<3x100xf32>
    tpu.vector_store %arg12[%c0_138, %c300], %105 {strides = array<i32>} : memref<3x1600xf32, #tpu.memory_space<vmem>>, vector<3x100xf32>,
    %c0_139 = arith.constant 0 : index
    %c2_140 = arith.constant 2 : index
    %c0_141 = arith.constant 0 : index
    %c0_142 = arith.constant 0 : index
    %107 = vector.load %arg11[%c0_139, %c2_140, %c0_141, %c0_142] : memref<3x8x8x100xf32, #tpu.memory_space<vmem>>, vector<3x1x1x100xf32>
    %108 = vector.shape_cast %107 : vector<3x1x1x100xf32> to vector<3x100xf32>
    %c0_143 = arith.constant 0 : index
    %c2_144 = arith.constant 2 : index
    %c1_145 = arith.constant 1 : index
    %c0_146 = arith.constant 0 : index
    %109 = vector.load %arg11[%c0_143, %c2_144, %c1_145, %c0_146] : memref<3x8x8x100xf32, #tpu.memory_space<vmem>>, vector<3x1x1x100xf32>
    %110 = vector.shape_cast %109 : vector<3x1x1x100xf32> to vector<3x100xf32>
    %111 = arith.maximumf %108, %110 : vector<3x100xf32>
    %c0_147 = arith.constant 0 : index
    %c3_148 = arith.constant 3 : index
    %c0_149 = arith.constant 0 : index
    %c0_150 = arith.constant 0 : index
    %112 = vector.load %arg11[%c0_147, %c3_148, %c0_149, %c0_150] : memref<3x8x8x100xf32, #tpu.memory_space<vmem>>, vector<3x1x1x100xf32>
    %113 = vector.shape_cast %112 : vector<3x1x1x100xf32> to vector<3x100xf32>
    %c0_151 = arith.constant 0 : index
    %c3_152 = arith.constant 3 : index
    %c1_153 = arith.constant 1 : index
    %c0_154 = arith.constant 0 : index
    %114 = vector.load %arg11[%c0_151, %c3_152, %c1_153, %c0_154] : memref<3x8x8x100xf32, #tpu.memory_space<vmem>>, vector<3x1x1x100xf32>
    %115 = vector.shape_cast %114 : vector<3x1x1x100xf32> to vector<3x100xf32>
    %116 = arith.maximumf %113, %115 : vector<3x100xf32>
    %117 = arith.maximumf %111, %116 : vector<3x100xf32>
    %118 = vector.broadcast %1 : vector<1x100xf32> to vector<3x100xf32>
    %119 = arith.addf %117, %118 : vector<3x100xf32>
    %cst_155 = arith.constant 0.000000e+00 : f32
    %120 = vector.broadcast %cst_155 : f32 to vector<3x100xf32>
    %121 = arith.maximumf %119, %120 : vector<3x100xf32>
    %c0_156 = arith.constant 0 : index
    %c400 = arith.constant 400 : index
    %122 = vector.load %arg12[%c0_156, %c400] : memref<3x1600xf32, #tpu.memory_space<vmem>>, vector<3x100xf32>
    tpu.vector_store %arg12[%c0_156, %c400], %121 {strides = array<i32>} : memref<3x1600xf32, #tpu.memory_space<vmem>>, vector<3x100xf32>,
    %c0_157 = arith.constant 0 : index
    %c2_158 = arith.constant 2 : index
    %c2_159 = arith.constant 2 : index
    %c0_160 = arith.constant 0 : index
    %123 = vector.load %arg11[%c0_157, %c2_158, %c2_159, %c0_160] : memref<3x8x8x100xf32, #tpu.memory_space<vmem>>, vector<3x1x1x100xf32>
    %124 = vector.shape_cast %123 : vector<3x1x1x100xf32> to vector<3x100xf32>
    %c0_161 = arith.constant 0 : index
    %c2_162 = arith.constant 2 : index
    %c3_163 = arith.constant 3 : index
    %c0_164 = arith.constant 0 : index
    %125 = vector.load %arg11[%c0_161, %c2_162, %c3_163, %c0_164] : memref<3x8x8x100xf32, #tpu.memory_space<vmem>>, vector<3x1x1x100xf32>
    %126 = vector.shape_cast %125 : vector<3x1x1x100xf32> to vector<3x100xf32>
    %127 = arith.maximumf %124, %126 : vector<3x100xf32>
    %c0_165 = arith.constant 0 : index
    %c3_166 = arith.constant 3 : index
    %c2_167 = arith.constant 2 : index
    %c0_168 = arith.constant 0 : index
    %128 = vector.load %arg11[%c0_165, %c3_166, %c2_167, %c0_168] : memref<3x8x8x100xf32, #tpu.memory_space<vmem>>, vector<3x1x1x100xf32>
    %129 = vector.shape_cast %128 : vector<3x1x1x100xf32> to vector<3x100xf32>
    %c0_169 = arith.constant 0 : index
    %c3_170 = arith.constant 3 : index
    %c3_171 = arith.constant 3 : index
    %c0_172 = arith.constant 0 : index
    %130 = vector.load %arg11[%c0_169, %c3_170, %c3_171, %c0_172] : memref<3x8x8x100xf32, #tpu.memory_space<vmem>>, vector<3x1x1x100xf32>
    %131 = vector.shape_cast %130 : vector<3x1x1x100xf32> to vector<3x100xf32>
    %132 = arith.maximumf %129, %131 : vector<3x100xf32>
    %133 = arith.maximumf %127, %132 : vector<3x100xf32>
    %134 = vector.broadcast %1 : vector<1x100xf32> to vector<3x100xf32>
    %135 = arith.addf %133, %134 : vector<3x100xf32>
    %cst_173 = arith.constant 0.000000e+00 : f32
    %136 = vector.broadcast %cst_173 : f32 to vector<3x100xf32>
    %137 = arith.maximumf %135, %136 : vector<3x100xf32>
    %c0_174 = arith.constant 0 : index
    %c500 = arith.constant 500 : index
    %138 = vector.load %arg12[%c0_174, %c500] : memref<3x1600xf32, #tpu.memory_space<vmem>>, vector<3x100xf32>
    tpu.vector_store %arg12[%c0_174, %c500], %137 {strides = array<i32>} : memref<3x1600xf32, #tpu.memory_space<vmem>>, vector<3x100xf32>,
    %c0_175 = arith.constant 0 : index
    %c2_176 = arith.constant 2 : index
    %c4_177 = arith.constant 4 : index
    %c0_178 = arith.constant 0 : index
    %139 = vector.load %arg11[%c0_175, %c2_176, %c4_177, %c0_178] : memref<3x8x8x100xf32, #tpu.memory_space<vmem>>, vector<3x1x1x100xf32>
    %140 = vector.shape_cast %139 : vector<3x1x1x100xf32> to vector<3x100xf32>
    %c0_179 = arith.constant 0 : index
    %c2_180 = arith.constant 2 : index
    %c5_181 = arith.constant 5 : index
    %c0_182 = arith.constant 0 : index
    %141 = vector.load %arg11[%c0_179, %c2_180, %c5_181, %c0_182] : memref<3x8x8x100xf32, #tpu.memory_space<vmem>>, vector<3x1x1x100xf32>
    %142 = vector.shape_cast %141 : vector<3x1x1x100xf32> to vector<3x100xf32>
    %143 = arith.maximumf %140, %142 : vector<3x100xf32>
    %c0_183 = arith.constant 0 : index
    %c3_184 = arith.constant 3 : index
    %c4_185 = arith.constant 4 : index
    %c0_186 = arith.constant 0 : index
    %144 = vector.load %arg11[%c0_183, %c3_184, %c4_185, %c0_186] : memref<3x8x8x100xf32, #tpu.memory_space<vmem>>, vector<3x1x1x100xf32>
    %145 = vector.shape_cast %144 : vector<3x1x1x100xf32> to vector<3x100xf32>
    %c0_187 = arith.constant 0 : index
    %c3_188 = arith.constant 3 : index
    %c5_189 = arith.constant 5 : index
    %c0_190 = arith.constant 0 : index
    %146 = vector.load %arg11[%c0_187, %c3_188, %c5_189, %c0_190] : memref<3x8x8x100xf32, #tpu.memory_space<vmem>>, vector<3x1x1x100xf32>
    %147 = vector.shape_cast %146 : vector<3x1x1x100xf32> to vector<3x100xf32>
    %148 = arith.maximumf %145, %147 : vector<3x100xf32>
    %149 = arith.maximumf %143, %148 : vector<3x100xf32>
    %150 = vector.broadcast %1 : vector<1x100xf32> to vector<3x100xf32>
    %151 = arith.addf %149, %150 : vector<3x100xf32>
    %cst_191 = arith.constant 0.000000e+00 : f32
    %152 = vector.broadcast %cst_191 : f32 to vector<3x100xf32>
    %153 = arith.maximumf %151, %152 : vector<3x100xf32>
    %c0_192 = arith.constant 0 : index
    %c600 = arith.constant 600 : index
    %154 = vector.load %arg12[%c0_192, %c600] : memref<3x1600xf32, #tpu.memory_space<vmem>>, vector<3x100xf32>
    tpu.vector_store %arg12[%c0_192, %c600], %153 {strides = array<i32>} : memref<3x1600xf32, #tpu.memory_space<vmem>>, vector<3x100xf32>,
    %c0_193 = arith.constant 0 : index
    %c2_194 = arith.constant 2 : index
    %c6_195 = arith.constant 6 : index
    %c0_196 = arith.constant 0 : index
    %155 = vector.load %arg11[%c0_193, %c2_194, %c6_195, %c0_196] : memref<3x8x8x100xf32, #tpu.memory_space<vmem>>, vector<3x1x1x100xf32>
    %156 = vector.shape_cast %155 : vector<3x1x1x100xf32> to vector<3x100xf32>
    %c0_197 = arith.constant 0 : index
    %c2_198 = arith.constant 2 : index
    %c7_199 = arith.constant 7 : index
    %c0_200 = arith.constant 0 : index
    %157 = vector.load %arg11[%c0_197, %c2_198, %c7_199, %c0_200] : memref<3x8x8x100xf32, #tpu.memory_space<vmem>>, vector<3x1x1x100xf32>
    %158 = vector.shape_cast %157 : vector<3x1x1x100xf32> to vector<3x100xf32>
    %159 = arith.maximumf %156, %158 : vector<3x100xf32>
    %c0_201 = arith.constant 0 : index
    %c3_202 = arith.constant 3 : index
    %c6_203 = arith.constant 6 : index
    %c0_204 = arith.constant 0 : index
    %160 = vector.load %arg11[%c0_201, %c3_202, %c6_203, %c0_204] : memref<3x8x8x100xf32, #tpu.memory_space<vmem>>, vector<3x1x1x100xf32>
    %161 = vector.shape_cast %160 : vector<3x1x1x100xf32> to vector<3x100xf32>
    %c0_205 = arith.constant 0 : index
    %c3_206 = arith.constant 3 : index
    %c7_207 = arith.constant 7 : index
    %c0_208 = arith.constant 0 : index
    %162 = vector.load %arg11[%c0_205, %c3_206, %c7_207, %c0_208] : memref<3x8x8x100xf32, #tpu.memory_space<vmem>>, vector<3x1x1x100xf32>
    %163 = vector.shape_cast %162 : vector<3x1x1x100xf32> to vector<3x100xf32>
    %164 = arith.maximumf %161, %163 : vector<3x100xf32>
    %165 = arith.maximumf %159, %164 : vector<3x100xf32>
    %166 = vector.broadcast %1 : vector<1x100xf32> to vector<3x100xf32>
    %167 = arith.addf %165, %166 : vector<3x100xf32>
    %cst_209 = arith.constant 0.000000e+00 : f32
    %168 = vector.broadcast %cst_209 : f32 to vector<3x100xf32>
    %169 = arith.maximumf %167, %168 : vector<3x100xf32>
    %c0_210 = arith.constant 0 : index
    %c700 = arith.constant 700 : index
    %170 = vector.load %arg12[%c0_210, %c700] : memref<3x1600xf32, #tpu.memory_space<vmem>>, vector<3x100xf32>
    tpu.vector_store %arg12[%c0_210, %c700], %169 {strides = array<i32>} : memref<3x1600xf32, #tpu.memory_space<vmem>>, vector<3x100xf32>,
    %c0_211 = arith.constant 0 : index
    %c4_212 = arith.constant 4 : index
    %c0_213 = arith.constant 0 : index
    %c0_214 = arith.constant 0 : index
    %171 = vector.load %arg11[%c0_211, %c4_212, %c0_213, %c0_214] : memref<3x8x8x100xf32, #tpu.memory_space<vmem>>, vector<3x1x1x100xf32>
    %172 = vector.shape_cast %171 : vector<3x1x1x100xf32> to vector<3x100xf32>
    %c0_215 = arith.constant 0 : index
    %c4_216 = arith.constant 4 : index
    %c1_217 = arith.constant 1 : index
    %c0_218 = arith.constant 0 : index
    %173 = vector.load %arg11[%c0_215, %c4_216, %c1_217, %c0_218] : memref<3x8x8x100xf32, #tpu.memory_space<vmem>>, vector<3x1x1x100xf32>
    %174 = vector.shape_cast %173 : vector<3x1x1x100xf32> to vector<3x100xf32>
    %175 = arith.maximumf %172, %174 : vector<3x100xf32>
    %c0_219 = arith.constant 0 : index
    %c5_220 = arith.constant 5 : index
    %c0_221 = arith.constant 0 : index
    %c0_222 = arith.constant 0 : index
    %176 = vector.load %arg11[%c0_219, %c5_220, %c0_221, %c0_222] : memref<3x8x8x100xf32, #tpu.memory_space<vmem>>, vector<3x1x1x100xf32>
    %177 = vector.shape_cast %176 : vector<3x1x1x100xf32> to vector<3x100xf32>
    %c0_223 = arith.constant 0 : index
    %c5_224 = arith.constant 5 : index
    %c1_225 = arith.constant 1 : index
    %c0_226 = arith.constant 0 : index
    %178 = vector.load %arg11[%c0_223, %c5_224, %c1_225, %c0_226] : memref<3x8x8x100xf32, #tpu.memory_space<vmem>>, vector<3x1x1x100xf32>
    %179 = vector.shape_cast %178 : vector<3x1x1x100xf32> to vector<3x100xf32>
    %180 = arith.maximumf %177, %179 : vector<3x100xf32>
    %181 = arith.maximumf %175, %180 : vector<3x100xf32>
    %182 = vector.broadcast %1 : vector<1x100xf32> to vector<3x100xf32>
    %183 = arith.addf %181, %182 : vector<3x100xf32>
    %cst_227 = arith.constant 0.000000e+00 : f32
    %184 = vector.broadcast %cst_227 : f32 to vector<3x100xf32>
    %185 = arith.maximumf %183, %184 : vector<3x100xf32>
    %c0_228 = arith.constant 0 : index
    %c800 = arith.constant 800 : index
    %186 = vector.load %arg12[%c0_228, %c800] : memref<3x1600xf32, #tpu.memory_space<vmem>>, vector<3x100xf32>
    tpu.vector_store %arg12[%c0_228, %c800], %185 {strides = array<i32>} : memref<3x1600xf32, #tpu.memory_space<vmem>>, vector<3x100xf32>,
    %c0_229 = arith.constant 0 : index
    %c4_230 = arith.constant 4 : index
    %c2_231 = arith.constant 2 : index
    %c0_232 = arith.constant 0 : index
    %187 = vector.load %arg11[%c0_229, %c4_230, %c2_231, %c0_232] : memref<3x8x8x100xf32, #tpu.memory_space<vmem>>, vector<3x1x1x100xf32>
    %188 = vector.shape_cast %187 : vector<3x1x1x100xf32> to vector<3x100xf32>
    %c0_233 = arith.constant 0 : index
    %c4_234 = arith.constant 4 : index
    %c3_235 = arith.constant 3 : index
    %c0_236 = arith.constant 0 : index
    %189 = vector.load %arg11[%c0_233, %c4_234, %c3_235, %c0_236] : memref<3x8x8x100xf32, #tpu.memory_space<vmem>>, vector<3x1x1x100xf32>
    %190 = vector.shape_cast %189 : vector<3x1x1x100xf32> to vector<3x100xf32>
    %191 = arith.maximumf %188, %190 : vector<3x100xf32>
    %c0_237 = arith.constant 0 : index
    %c5_238 = arith.constant 5 : index
    %c2_239 = arith.constant 2 : index
    %c0_240 = arith.constant 0 : index
    %192 = vector.load %arg11[%c0_237, %c5_238, %c2_239, %c0_240] : memref<3x8x8x100xf32, #tpu.memory_space<vmem>>, vector<3x1x1x100xf32>
    %193 = vector.shape_cast %192 : vector<3x1x1x100xf32> to vector<3x100xf32>
    %c0_241 = arith.constant 0 : index
    %c5_242 = arith.constant 5 : index
    %c3_243 = arith.constant 3 : index
    %c0_244 = arith.constant 0 : index
    %194 = vector.load %arg11[%c0_241, %c5_242, %c3_243, %c0_244] : memref<3x8x8x100xf32, #tpu.memory_space<vmem>>, vector<3x1x1x100xf32>
    %195 = vector.shape_cast %194 : vector<3x1x1x100xf32> to vector<3x100xf32>
    %196 = arith.maximumf %193, %195 : vector<3x100xf32>
    %197 = arith.maximumf %191, %196 : vector<3x100xf32>
    %198 = vector.broadcast %1 : vector<1x100xf32> to vector<3x100xf32>
    %199 = arith.addf %197, %198 : vector<3x100xf32>
    %cst_245 = arith.constant 0.000000e+00 : f32
    %200 = vector.broadcast %cst_245 : f32 to vector<3x100xf32>
    %201 = arith.maximumf %199, %200 : vector<3x100xf32>
    %c0_246 = arith.constant 0 : index
    %c900 = arith.constant 900 : index
    %202 = vector.load %arg12[%c0_246, %c900] : memref<3x1600xf32, #tpu.memory_space<vmem>>, vector<3x100xf32>
    tpu.vector_store %arg12[%c0_246, %c900], %201 {strides = array<i32>} : memref<3x1600xf32, #tpu.memory_space<vmem>>, vector<3x100xf32>,
    %c0_247 = arith.constant 0 : index
    %c4_248 = arith.constant 4 : index
    %c4_249 = arith.constant 4 : index
    %c0_250 = arith.constant 0 : index
    %203 = vector.load %arg11[%c0_247, %c4_248, %c4_249, %c0_250] : memref<3x8x8x100xf32, #tpu.memory_space<vmem>>, vector<3x1x1x100xf32>
    %204 = vector.shape_cast %203 : vector<3x1x1x100xf32> to vector<3x100xf32>
    %c0_251 = arith.constant 0 : index
    %c4_252 = arith.constant 4 : index
    %c5_253 = arith.constant 5 : index
    %c0_254 = arith.constant 0 : index
    %205 = vector.load %arg11[%c0_251, %c4_252, %c5_253, %c0_254] : memref<3x8x8x100xf32, #tpu.memory_space<vmem>>, vector<3x1x1x100xf32>
    %206 = vector.shape_cast %205 : vector<3x1x1x100xf32> to vector<3x100xf32>
    %207 = arith.maximumf %204, %206 : vector<3x100xf32>
    %c0_255 = arith.constant 0 : index
    %c5_256 = arith.constant 5 : index
    %c4_257 = arith.constant 4 : index
    %c0_258 = arith.constant 0 : index
    %208 = vector.load %arg11[%c0_255, %c5_256, %c4_257, %c0_258] : memref<3x8x8x100xf32, #tpu.memory_space<vmem>>, vector<3x1x1x100xf32>
    %209 = vector.shape_cast %208 : vector<3x1x1x100xf32> to vector<3x100xf32>
    %c0_259 = arith.constant 0 : index
    %c5_260 = arith.constant 5 : index
    %c5_261 = arith.constant 5 : index
    %c0_262 = arith.constant 0 : index
    %210 = vector.load %arg11[%c0_259, %c5_260, %c5_261, %c0_262] : memref<3x8x8x100xf32, #tpu.memory_space<vmem>>, vector<3x1x1x100xf32>
    %211 = vector.shape_cast %210 : vector<3x1x1x100xf32> to vector<3x100xf32>
    %212 = arith.maximumf %209, %211 : vector<3x100xf32>
    %213 = arith.maximumf %207, %212 : vector<3x100xf32>
    %214 = vector.broadcast %1 : vector<1x100xf32> to vector<3x100xf32>
    %215 = arith.addf %213, %214 : vector<3x100xf32>
    %cst_263 = arith.constant 0.000000e+00 : f32
    %216 = vector.broadcast %cst_263 : f32 to vector<3x100xf32>
    %217 = arith.maximumf %215, %216 : vector<3x100xf32>
    %c0_264 = arith.constant 0 : index
    %c1000 = arith.constant 1000 : index
    %218 = vector.load %arg12[%c0_264, %c1000] : memref<3x1600xf32, #tpu.memory_space<vmem>>, vector<3x100xf32>
    tpu.vector_store %arg12[%c0_264, %c1000], %217 {strides = array<i32>} : memref<3x1600xf32, #tpu.memory_space<vmem>>, vector<3x100xf32>,
    %c0_265 = arith.constant 0 : index
    %c4_266 = arith.constant 4 : index
    %c6_267 = arith.constant 6 : index
    %c0_268 = arith.constant 0 : index
    %219 = vector.load %arg11[%c0_265, %c4_266, %c6_267, %c0_268] : memref<3x8x8x100xf32, #tpu.memory_space<vmem>>, vector<3x1x1x100xf32>
    %220 = vector.shape_cast %219 : vector<3x1x1x100xf32> to vector<3x100xf32>
    %c0_269 = arith.constant 0 : index
    %c4_270 = arith.constant 4 : index
    %c7_271 = arith.constant 7 : index
    %c0_272 = arith.constant 0 : index
    %221 = vector.load %arg11[%c0_269, %c4_270, %c7_271, %c0_272] : memref<3x8x8x100xf32, #tpu.memory_space<vmem>>, vector<3x1x1x100xf32>
    %222 = vector.shape_cast %221 : vector<3x1x1x100xf32> to vector<3x100xf32>
    %223 = arith.maximumf %220, %222 : vector<3x100xf32>
    %c0_273 = arith.constant 0 : index
    %c5_274 = arith.constant 5 : index
    %c6_275 = arith.constant 6 : index
    %c0_276 = arith.constant 0 : index
    %224 = vector.load %arg11[%c0_273, %c5_274, %c6_275, %c0_276] : memref<3x8x8x100xf32, #tpu.memory_space<vmem>>, vector<3x1x1x100xf32>
    %225 = vector.shape_cast %224 : vector<3x1x1x100xf32> to vector<3x100xf32>
    %c0_277 = arith.constant 0 : index
    %c5_278 = arith.constant 5 : index
    %c7_279 = arith.constant 7 : index
    %c0_280 = arith.constant 0 : index
    %226 = vector.load %arg11[%c0_277, %c5_278, %c7_279, %c0_280] : memref<3x8x8x100xf32, #tpu.memory_space<vmem>>, vector<3x1x1x100xf32>
    %227 = vector.shape_cast %226 : vector<3x1x1x100xf32> to vector<3x100xf32>
    %228 = arith.maximumf %225, %227 : vector<3x100xf32>
    %229 = arith.maximumf %223, %228 : vector<3x100xf32>
    %230 = vector.broadcast %1 : vector<1x100xf32> to vector<3x100xf32>
    %231 = arith.addf %229, %230 : vector<3x100xf32>
    %cst_281 = arith.constant 0.000000e+00 : f32
    %232 = vector.broadcast %cst_281 : f32 to vector<3x100xf32>
    %233 = arith.maximumf %231, %232 : vector<3x100xf32>
    %c0_282 = arith.constant 0 : index
    %c1100 = arith.constant 1100 : index
    %234 = vector.load %arg12[%c0_282, %c1100] : memref<3x1600xf32, #tpu.memory_space<vmem>>, vector<3x100xf32>
    tpu.vector_store %arg12[%c0_282, %c1100], %233 {strides = array<i32>} : memref<3x1600xf32, #tpu.memory_space<vmem>>, vector<3x100xf32>,
    %c0_283 = arith.constant 0 : index
    %c6_284 = arith.constant 6 : index
    %c0_285 = arith.constant 0 : index
    %c0_286 = arith.constant 0 : index
    %235 = vector.load %arg11[%c0_283, %c6_284, %c0_285, %c0_286] : memref<3x8x8x100xf32, #tpu.memory_space<vmem>>, vector<3x1x1x100xf32>
    %236 = vector.shape_cast %235 : vector<3x1x1x100xf32> to vector<3x100xf32>
    %c0_287 = arith.constant 0 : index
    %c6_288 = arith.constant 6 : index
    %c1_289 = arith.constant 1 : index
    %c0_290 = arith.constant 0 : index
    %237 = vector.load %arg11[%c0_287, %c6_288, %c1_289, %c0_290] : memref<3x8x8x100xf32, #tpu.memory_space<vmem>>, vector<3x1x1x100xf32>
    %238 = vector.shape_cast %237 : vector<3x1x1x100xf32> to vector<3x100xf32>
    %239 = arith.maximumf %236, %238 : vector<3x100xf32>
    %c0_291 = arith.constant 0 : index
    %c7_292 = arith.constant 7 : index
    %c0_293 = arith.constant 0 : index
    %c0_294 = arith.constant 0 : index
    %240 = vector.load %arg11[%c0_291, %c7_292, %c0_293, %c0_294] : memref<3x8x8x100xf32, #tpu.memory_space<vmem>>, vector<3x1x1x100xf32>
    %241 = vector.shape_cast %240 : vector<3x1x1x100xf32> to vector<3x100xf32>
    %c0_295 = arith.constant 0 : index
    %c7_296 = arith.constant 7 : index
    %c1_297 = arith.constant 1 : index
    %c0_298 = arith.constant 0 : index
    %242 = vector.load %arg11[%c0_295, %c7_296, %c1_297, %c0_298] : memref<3x8x8x100xf32, #tpu.memory_space<vmem>>, vector<3x1x1x100xf32>
    %243 = vector.shape_cast %242 : vector<3x1x1x100xf32> to vector<3x100xf32>
    %244 = arith.maximumf %241, %243 : vector<3x100xf32>
    %245 = arith.maximumf %239, %244 : vector<3x100xf32>
    %246 = vector.broadcast %1 : vector<1x100xf32> to vector<3x100xf32>
    %247 = arith.addf %245, %246 : vector<3x100xf32>
    %cst_299 = arith.constant 0.000000e+00 : f32
    %248 = vector.broadcast %cst_299 : f32 to vector<3x100xf32>
    %249 = arith.maximumf %247, %248 : vector<3x100xf32>
    %c0_300 = arith.constant 0 : index
    %c1200 = arith.constant 1200 : index
    %250 = vector.load %arg12[%c0_300, %c1200] : memref<3x1600xf32, #tpu.memory_space<vmem>>, vector<3x100xf32>
    tpu.vector_store %arg12[%c0_300, %c1200], %249 {strides = array<i32>} : memref<3x1600xf32, #tpu.memory_space<vmem>>, vector<3x100xf32>,
    %c0_301 = arith.constant 0 : index
    %c6_302 = arith.constant 6 : index
    %c2_303 = arith.constant 2 : index
    %c0_304 = arith.constant 0 : index
    %251 = vector.load %arg11[%c0_301, %c6_302, %c2_303, %c0_304] : memref<3x8x8x100xf32, #tpu.memory_space<vmem>>, vector<3x1x1x100xf32>
    %252 = vector.shape_cast %251 : vector<3x1x1x100xf32> to vector<3x100xf32>
    %c0_305 = arith.constant 0 : index
    %c6_306 = arith.constant 6 : index
    %c3_307 = arith.constant 3 : index
    %c0_308 = arith.constant 0 : index
    %253 = vector.load %arg11[%c0_305, %c6_306, %c3_307, %c0_308] : memref<3x8x8x100xf32, #tpu.memory_space<vmem>>, vector<3x1x1x100xf32>
    %254 = vector.shape_cast %253 : vector<3x1x1x100xf32> to vector<3x100xf32>
    %255 = arith.maximumf %252, %254 : vector<3x100xf32>
    %c0_309 = arith.constant 0 : index
    %c7_310 = arith.constant 7 : index
    %c2_311 = arith.constant 2 : index
    %c0_312 = arith.constant 0 : index
    %256 = vector.load %arg11[%c0_309, %c7_310, %c2_311, %c0_312] : memref<3x8x8x100xf32, #tpu.memory_space<vmem>>, vector<3x1x1x100xf32>
    %257 = vector.shape_cast %256 : vector<3x1x1x100xf32> to vector<3x100xf32>
    %c0_313 = arith.constant 0 : index
    %c7_314 = arith.constant 7 : index
    %c3_315 = arith.constant 3 : index
    %c0_316 = arith.constant 0 : index
    %258 = vector.load %arg11[%c0_313, %c7_314, %c3_315, %c0_316] : memref<3x8x8x100xf32, #tpu.memory_space<vmem>>, vector<3x1x1x100xf32>
    %259 = vector.shape_cast %258 : vector<3x1x1x100xf32> to vector<3x100xf32>
    %260 = arith.maximumf %257, %259 : vector<3x100xf32>
    %261 = arith.maximumf %255, %260 : vector<3x100xf32>
    %262 = vector.broadcast %1 : vector<1x100xf32> to vector<3x100xf32>
    %263 = arith.addf %261, %262 : vector<3x100xf32>
    %cst_317 = arith.constant 0.000000e+00 : f32
    %264 = vector.broadcast %cst_317 : f32 to vector<3x100xf32>
    %265 = arith.maximumf %263, %264 : vector<3x100xf32>
    %c0_318 = arith.constant 0 : index
    %c1300 = arith.constant 1300 : index
    %266 = vector.load %arg12[%c0_318, %c1300] : memref<3x1600xf32, #tpu.memory_space<vmem>>, vector<3x100xf32>
    tpu.vector_store %arg12[%c0_318, %c1300], %265 {strides = array<i32>} : memref<3x1600xf32, #tpu.memory_space<vmem>>, vector<3x100xf32>,
    %c0_319 = arith.constant 0 : index
    %c6_320 = arith.constant 6 : index
    %c4_321 = arith.constant 4 : index
    %c0_322 = arith.constant 0 : index
    %267 = vector.load %arg11[%c0_319, %c6_320, %c4_321, %c0_322] : memref<3x8x8x100xf32, #tpu.memory_space<vmem>>, vector<3x1x1x100xf32>
    %268 = vector.shape_cast %267 : vector<3x1x1x100xf32> to vector<3x100xf32>
    %c0_323 = arith.constant 0 : index
    %c6_324 = arith.constant 6 : index
    %c5_325 = arith.constant 5 : index
    %c0_326 = arith.constant 0 : index
    %269 = vector.load %arg11[%c0_323, %c6_324, %c5_325, %c0_326] : memref<3x8x8x100xf32, #tpu.memory_space<vmem>>, vector<3x1x1x100xf32>
    %270 = vector.shape_cast %269 : vector<3x1x1x100xf32> to vector<3x100xf32>
    %271 = arith.maximumf %268, %270 : vector<3x100xf32>
    %c0_327 = arith.constant 0 : index
    %c7_328 = arith.constant 7 : index
    %c4_329 = arith.constant 4 : index
    %c0_330 = arith.constant 0 : index
    %272 = vector.load %arg11[%c0_327, %c7_328, %c4_329, %c0_330] : memref<3x8x8x100xf32, #tpu.memory_space<vmem>>, vector<3x1x1x100xf32>
    %273 = vector.shape_cast %272 : vector<3x1x1x100xf32> to vector<3x100xf32>
    %c0_331 = arith.constant 0 : index
    %c7_332 = arith.constant 7 : index
    %c5_333 = arith.constant 5 : index
    %c0_334 = arith.constant 0 : index
    %274 = vector.load %arg11[%c0_331, %c7_332, %c5_333, %c0_334] : memref<3x8x8x100xf32, #tpu.memory_space<vmem>>, vector<3x1x1x100xf32>
    %275 = vector.shape_cast %274 : vector<3x1x1x100xf32> to vector<3x100xf32>
    %276 = arith.maximumf %273, %275 : vector<3x100xf32>
    %277 = arith.maximumf %271, %276 : vector<3x100xf32>
    %278 = vector.broadcast %1 : vector<1x100xf32> to vector<3x100xf32>
    %279 = arith.addf %277, %278 : vector<3x100xf32>
    %cst_335 = arith.constant 0.000000e+00 : f32
    %280 = vector.broadcast %cst_335 : f32 to vector<3x100xf32>
    %281 = arith.maximumf %279, %280 : vector<3x100xf32>
    %c0_336 = arith.constant 0 : index
    %c1400 = arith.constant 1400 : index
    %282 = vector.load %arg12[%c0_336, %c1400] : memref<3x1600xf32, #tpu.memory_space<vmem>>, vector<3x100xf32>
    tpu.vector_store %arg12[%c0_336, %c1400], %281 {strides = array<i32>} : memref<3x1600xf32, #tpu.memory_space<vmem>>, vector<3x100xf32>,
    %c0_337 = arith.constant 0 : index
    %c6_338 = arith.constant 6 : index
    %c6_339 = arith.constant 6 : index
    %c0_340 = arith.constant 0 : index
    %283 = vector.load %arg11[%c0_337, %c6_338, %c6_339, %c0_340] : memref<3x8x8x100xf32, #tpu.memory_space<vmem>>, vector<3x1x1x100xf32>
    %284 = vector.shape_cast %283 : vector<3x1x1x100xf32> to vector<3x100xf32>
    %c0_341 = arith.constant 0 : index
    %c6_342 = arith.constant 6 : index
    %c7_343 = arith.constant 7 : index
    %c0_344 = arith.constant 0 : index
    %285 = vector.load %arg11[%c0_341, %c6_342, %c7_343, %c0_344] : memref<3x8x8x100xf32, #tpu.memory_space<vmem>>, vector<3x1x1x100xf32>
    %286 = vector.shape_cast %285 : vector<3x1x1x100xf32> to vector<3x100xf32>
    %287 = arith.maximumf %284, %286 : vector<3x100xf32>
    %c0_345 = arith.constant 0 : index
    %c7_346 = arith.constant 7 : index
    %c6_347 = arith.constant 6 : index
    %c0_348 = arith.constant 0 : index
    %288 = vector.load %arg11[%c0_345, %c7_346, %c6_347, %c0_348] : memref<3x8x8x100xf32, #tpu.memory_space<vmem>>, vector<3x1x1x100xf32>
    %289 = vector.shape_cast %288 : vector<3x1x1x100xf32> to vector<3x100xf32>
    %c0_349 = arith.constant 0 : index
    %c7_350 = arith.constant 7 : index
    %c7_351 = arith.constant 7 : index
    %c0_352 = arith.constant 0 : index
    %290 = vector.load %arg11[%c0_349, %c7_350, %c7_351, %c0_352] : memref<3x8x8x100xf32, #tpu.memory_space<vmem>>, vector<3x1x1x100xf32>
    %291 = vector.shape_cast %290 : vector<3x1x1x100xf32> to vector<3x100xf32>
    %292 = arith.maximumf %289, %291 : vector<3x100xf32>
    %293 = arith.maximumf %287, %292 : vector<3x100xf32>
    %294 = vector.broadcast %1 : vector<1x100xf32> to vector<3x100xf32>
    %295 = arith.addf %293, %294 : vector<3x100xf32>
    %cst_353 = arith.constant 0.000000e+00 : f32
    %296 = vector.broadcast %cst_353 : f32 to vector<3x100xf32>
    %297 = arith.maximumf %295, %296 : vector<3x100xf32>
    %c0_354 = arith.constant 0 : index
    %c1500 = arith.constant 1500 : index
    %298 = vector.load %arg12[%c0_354, %c1500] : memref<3x1600xf32, #tpu.memory_space<vmem>>, vector<3x100xf32>
    tpu.vector_store %arg12[%c0_354, %c1500], %297 {strides = array<i32>} : memref<3x1600xf32, #tpu.memory_space<vmem>>, vector<3x100xf32>,
    %c0_355 = arith.constant 0 : index
    %c0_356 = arith.constant 0 : index
    %299 = vector.load %arg12[%c0_355, %c0_356] : memref<3x1600xf32, #tpu.memory_space<vmem>>, vector<3x1600xf32>
    %c0_357 = arith.constant 0 : index
    %c0_358 = arith.constant 0 : index
    %300 = vector.load %arg6[%c0_357, %c0_358] : memref<1600x10xf32, #tpu.memory_space<vmem>>, vector<1600x10xf32>
    %cst_359 = arith.constant dense<0.000000e+00> : vector<3x10xf32>
    %301 = tpu.matmul %299, %300, %cst_359 {dimension_numbers = #tpu.dot_dimension_numbers<[1], [0], [0], [1], [0, 0, 1, 1], [], []>} : vector<3x1600xf32>, vector<1600x10xf32>, vector<3x10xf32> -> vector<3x10xf32>
    %c0_360 = arith.constant 0 : index
    %c0_361 = arith.constant 0 : index
    %302 = vector.load %arg7[%c0_360, %c0_361] : memref<1x10xf32, #tpu.memory_space<vmem>>, vector<1x10xf32>
    %303 = vector.broadcast %302 : vector<1x10xf32> to vector<3x10xf32>
    %304 = arith.addf %301, %303 : vector<3x10xf32>
    %305 = vector.shape_cast %304 : vector<3x10xf32> to vector<3x1x10xf32>
    %c0_362 = arith.constant 0 : index
    %c0_363 = arith.constant 0 : index
    %c0_364 = arith.constant 0 : index
    %306 = vector.load %arg8[%c0_362, %c0_363, %c0_364] : memref<3x1x10xf32, #tpu.memory_space<vmem>>, vector<3x1x10xf32>
    tpu.vector_store %arg8[%c0_362, %c0_363, %c0_364], %305 {strides = array<i32>} : memref<3x1x10xf32, #tpu.memory_space<vmem>>, vector<3x1x10xf32>,
    return
  }
  func.func @transform_0(%arg0: i32) -> (i32, i32, i32, i32) {
    %c0_i32 = arith.constant 0 : i32
    %c0_i32_0 = arith.constant 0 : i32
    %c0_i32_1 = arith.constant 0 : i32
    %c0_i32_2 = arith.constant 0 : i32
    return %arg0, %c0_i32, %c0_i32_0, %c0_i32_1 : i32, i32, i32, i32
  }
  func.func @transform_1(%arg0: i32) -> (i32, i32, i32) {
    %c0_i32 = arith.constant 0 : i32
    %c0_i32_0 = arith.constant 0 : i32
    %c0_i32_1 = arith.constant 0 : i32
    %c0_i32_2 = arith.constant 0 : i32
    return %c0_i32, %c0_i32_0, %c0_i32_1 : i32, i32, i32
  }
  func.func @transform_2(%arg0: i32) -> (i32, i32) {
    %c0_i32 = arith.constant 0 : i32
    %c0_i32_0 = arith.constant 0 : i32
    %c0_i32_1 = arith.constant 0 : i32
    return %c0_i32, %c0_i32_0 : i32, i32
  }
  func.func @transform_3(%arg0: i32) -> (i32, i32, i32) {
    %c0_i32 = arith.constant 0 : i32
    %c0_i32_0 = arith.constant 0 : i32
    %c0_i32_1 = arith.constant 0 : i32
    %c0_i32_2 = arith.constant 0 : i32
    return %c0_i32, %c0_i32_0, %c0_i32_1 : i32, i32, i32
  }
  func.func @transform_4(%arg0: i32) -> (i32, i32) {
    %c0_i32 = arith.constant 0 : i32
    %c0_i32_0 = arith.constant 0 : i32
    %c0_i32_1 = arith.constant 0 : i32
    return %c0_i32, %c0_i32_0 : i32, i32
  }
  func.func @transform_5(%arg0: i32) -> (i32, i32) {
    %c0_i32 = arith.constant 0 : i32
    %c0_i32_0 = arith.constant 0 : i32
    %c0_i32_1 = arith.constant 0 : i32
    return %c0_i32, %c0_i32_0 : i32, i32
  }
  func.func @transform_6(%arg0: i32) -> (i32, i32) {
    %c0_i32 = arith.constant 0 : i32
    %c0_i32_0 = arith.constant 0 : i32
    %c0_i32_1 = arith.constant 0 : i32
    return %c0_i32, %c0_i32_0 : i32, i32
  }
  func.func @transform_7(%arg0: i32) -> (i32, i32, i32) {
    %c0_i32 = arith.constant 0 : i32
    %c0_i32_0 = arith.constant 0 : i32
    %c0_i32_1 = arith.constant 0 : i32
    return %arg0, %c0_i32, %c0_i32_0 : i32, i32, i32
  }
}

</mosaic_0001>

<llo_original>
// kernel: _forward_impl.1
$region0: #{_forward_impl.1}
  #allocation0 [shape = 'u32[]', space=smem, size = 0x4, offset = 0x4, fixed_abs, tag = 'smem constant byte address 0x4 - core index']
  #allocation1 [shape = 'u32[72,128]{1,0:T(1,128)}', space=vmem, size = 0x9000, scoped, tag = 'internal scratch']
  #allocation2 [shape = 'f32[3,16,16,50]{3,2,1,0:T(8,128)}', space=vmem, size = 0x60000, scoped, tag = 'scratch operand']
  #allocation3 [shape = 'f32[3,10,10,50]{3,2,1,0:T(8,128)}', space=vmem, size = 0x3c000, scoped, tag = 'scratch operand']
  #allocation4 [shape = 'f32[3,8,8,100]{3,2,1,0:T(8,128)}', space=vmem, size = 0x18000, scoped, tag = 'scratch operand']
  #allocation5 [shape = 'f32[3,1600]{1,0:T(4,128)}', space=vmem, size = 0x6800, scoped, tag = 'scratch operand']
  %s0 = inlined_call_operand.vmem [shape: f32[6,18,18,1], index: 0, kind: input, shape index: {}]
  %s1 = inlined_call_operand.vmem [shape: f32[9,1,50], index: 1, kind: input, shape index: {}]
  %s2 = inlined_call_operand.vmem [shape: f32[1,50], index: 2, kind: input, shape index: {}]
  %s3 = inlined_call_operand.vmem [shape: f32[9,50,100], index: 3, kind: input, shape index: {}]
  %s4 = inlined_call_operand.vmem [shape: f32[1,100], index: 4, kind: input, shape index: {}]
  %s5 = inlined_call_operand.vmem [shape: f32[1600,10], index: 5, kind: input, shape index: {}]
  %s6 = inlined_call_operand.vmem [shape: f32[1,10], index: 6, kind: input, shape index: {}]
  %s7 = inlined_call_operand.vmem [shape: f32[6,1,10], index: 7, kind: output, shape index: {}]
  %s8 = sld [smem:[#allocation0]]
  $region75: #{_forward_impl.1} parent=0
    _
  %s10 = ssub.s32 1, %s8
  %s11 = scalar_select 0, %s10, %s8
  loop: start=0, step=1, limit=4
  $region2: #{_forward_impl.1} parent=0 // loop_pre_header
    _
  $region3: #{_forward_impl.1} parent=0 // loop_header
    %s13 = sphi 0, %s17
    %p14 = scmp.ge.s32.totalorder %s13, 4
    %s23 = sphi 0, %s25
    %s26 = sphi 0, %s23
    %s27 = sphi 0, %s26
    %s43 = sphi 0, %s27
    %s47 = sphi 0, %s47
    %s49 = sphi 0, %s47
    %s50 = sphi 0, %s49
    %s64 = sphi 0, %s50
    %s68 = sphi 0, %s68
    %s70 = sphi 0, %s68
    %s71 = sphi 0, %s70
    %s85 = sphi 0, %s71
    %s89 = sphi 0, %s89
    %s91 = sphi 0, %s89
    %s92 = sphi 0, %s91
    %s106 = sphi 0, %s92
    %s110 = sphi 0, %s110
    %s112 = sphi 0, %s110
    %s113 = sphi 0, %s112
    %s127 = sphi 0, %s113
    %s131 = sphi 0, %s131
    %s133 = sphi 0, %s131
    %s134 = sphi 0, %s133
    %s148 = sphi 0, %s134
    %s152 = sphi 0, %s152
    %s154 = sphi 0, %s152
    %s155 = sphi 0, %s154
    %s169 = sphi 0, %s155
    %s175 = sphi 0, %s177
    %s178 = sphi 0, %s175
    %s179 = sphi 0, %s178
    %s195 = sphi 0, %s179
  $region4: #{_forward_impl.1} parent=0 // loop_header_branch
    %16 = sbr.rel (%p14) target = $region8
  $region5: #{_forward_impl.1} parent=0 // loop_body
    %s18 = ssub.s32 %s13, 1
    %s19 = ssub.s32 %s13, 2
    %s20 = sadd.s32 %s13, 1
    %s21 = ssub.s32 %s13, %s20
    %p22 = scmp.eq.s32.totalorder %s21, 0
    %s24 = sadd.s32 %s23, 1
    %s25 = scalar_select %p22, %s23, %s24
    %p28 = pneg %p22
    %p29 = scmp.eq.s32.totalorder %s13, 1
    %p30 = por %p28, %p29
    %p31 = scmp.ne.s32.totalorder %s23, %s26
    %p32 = scmp.eq.s32.totalorder %s13, 0
    %p33 = por %p31, %p32
    %p34 = scmp.ne.s32.totalorder %s23, %s26
    %p35 = scmp.eq.s32.totalorder %s18, 1
    %p36 = por %p34, %p35
    %p37 = scmp.ne.s32.totalorder %s26, %s27
    %p38 = scmp.eq.s32.totalorder %s18, 0
    %p39 = por %p37, %p38
    %p40 = scmp.ne.s32.totalorder %s26, %s27
    %p41 = scmp.eq.s32.totalorder %s19, 1
    %p42 = por %p40, %p41
    %p44 = scmp.ne.s32.totalorder %s27, %s43
    %p45 = scmp.eq.s32.totalorder %s19, 0
    %p46 = por %p44, %p45
    %s48 = sadd.s32 %s47, 1
    %p51 = scmp.eq.s32.totalorder %s13, 1
    %p52 = scmp.ne.s32.totalorder %s47, %s49
    %p53 = scmp.eq.s32.totalorder %s13, 0
    %p54 = por %p52, %p53
    %p55 = scmp.ne.s32.totalorder %s47, %s49
    %p56 = scmp.eq.s32.totalorder %s18, 1
    %p57 = por %p55, %p56
    %p58 = scmp.ne.s32.totalorder %s49, %s50
    %p59 = scmp.eq.s32.totalorder %s18, 0
    %p60 = por %p58, %p59
    %p61 = scmp.ne.s32.totalorder %s49, %s50
    %p62 = scmp.eq.s32.totalorder %s19, 1
    %p63 = por %p61, %p62
    %p65 = scmp.ne.s32.totalorder %s50, %s64
    %p66 = scmp.eq.s32.totalorder %s19, 0
    %p67 = por %p65, %p66
    %s69 = sadd.s32 %s68, 1
    %p72 = scmp.eq.s32.totalorder %s13, 1
    %p73 = scmp.ne.s32.totalorder %s68, %s70
    %p74 = scmp.eq.s32.totalorder %s13, 0
    %p75 = por %p73, %p74
    %p76 = scmp.ne.s32.totalorder %s68, %s70
    %p77 = scmp.eq.s32.totalorder %s18, 1
    %p78 = por %p76, %p77
    %p79 = scmp.ne.s32.totalorder %s70, %s71
    %p80 = scmp.eq.s32.totalorder %s18, 0
    %p81 = por %p79, %p80
    %p82 = scmp.ne.s32.totalorder %s70, %s71
    %p83 = scmp.eq.s32.totalorder %s19, 1
    %p84 = por %p82, %p83
    %p86 = scmp.ne.s32.totalorder %s71, %s85
    %p87 = scmp.eq.s32.totalorder %s19, 0
    %p88 = por %p86, %p87
    %s90 = sadd.s32 %s89, 1
    %p93 = scmp.eq.s32.totalorder %s13, 1
    %p94 = scmp.ne.s32.totalorder %s89, %s91
    %p95 = scmp.eq.s32.totalorder %s13, 0
    %p96 = por %p94, %p95
    %p97 = scmp.ne.s32.totalorder %s89, %s91
    %p98 = scmp.eq.s32.totalorder %s18, 1
    %p99 = por %p97, %p98
    %p100 = scmp.ne.s32.totalorder %s91, %s92
    %p101 = scmp.eq.s32.totalorder %s18, 0
    %p102 = por %p100, %p101
    %p103 = scmp.ne.s32.totalorder %s91, %s92
    %p104 = scmp.eq.s32.totalorder %s19, 1
    %p105 = por %p103, %p104
    %p107 = scmp.ne.s32.totalorder %s92, %s106
    %p108 = scmp.eq.s32.totalorder %s19, 0
    %p109 = por %p107, %p108
    %s111 = sadd.s32 %s110, 1
    %p114 = scmp.eq.s32.totalorder %s13, 1
    %p115 = scmp.ne.s32.totalorder %s110, %s112
    %p116 = scmp.eq.s32.totalorder %s13, 0
    %p117 = por %p115, %p116
    %p118 = scmp.ne.s32.totalorder %s110, %s112
    %p119 = scmp.eq.s32.totalorder %s18, 1
    %p120 = por %p118, %p119
    %p121 = scmp.ne.s32.totalorder %s112, %s113
    %p122 = scmp.eq.s32.totalorder %s18, 0
    %p123 = por %p121, %p122
    %p124 = scmp.ne.s32.totalorder %s112, %s113
    %p125 = scmp.eq.s32.totalorder %s19, 1
    %p126 = por %p124, %p125
    %p128 = scmp.ne.s32.totalorder %s113, %s127
    %p129 = scmp.eq.s32.totalorder %s19, 0
    %p130 = por %p128, %p129
    %s132 = sadd.s32 %s131, 1
    %p135 = scmp.eq.s32.totalorder %s13, 1
    %p136 = scmp.ne.s32.totalorder %s131, %s133
    %p137 = scmp.eq.s32.totalorder %s13, 0
    %p138 = por %p136, %p137
    %p139 = scmp.ne.s32.totalorder %s131, %s133
    %p140 = scmp.eq.s32.totalorder %s18, 1
    %p141 = por %p139, %p140
    %p142 = scmp.ne.s32.totalorder %s133, %s134
    %p143 = scmp.eq.s32.totalorder %s18, 0
    %p144 = por %p142, %p143
    %p145 = scmp.ne.s32.totalorder %s133, %s134
    %p146 = scmp.eq.s32.totalorder %s19, 1
    %p147 = por %p145, %p146
    %p149 = scmp.ne.s32.totalorder %s134, %s148
    %p150 = scmp.eq.s32.totalorder %s19, 0
    %p151 = por %p149, %p150
    %s153 = sadd.s32 %s152, 1
    %p156 = scmp.eq.s32.totalorder %s13, 1
    %p157 = scmp.ne.s32.totalorder %s152, %s154
    %p158 = scmp.eq.s32.totalorder %s13, 0
    %p159 = por %p157, %p158
    %p160 = scmp.ne.s32.totalorder %s152, %s154
    %p161 = scmp.eq.s32.totalorder %s18, 1
    %p162 = por %p160, %p161
    %p163 = scmp.ne.s32.totalorder %s154, %s155
    %p164 = scmp.eq.s32.totalorder %s18, 0
    %p165 = por %p163, %p164
    %p166 = scmp.ne.s32.totalorder %s154, %s155
    %p167 = scmp.eq.s32.totalorder %s19, 1
    %p168 = por %p166, %p167
    %p170 = scmp.ne.s32.totalorder %s155, %s169
    %p171 = scmp.eq.s32.totalorder %s19, 0
    %p172 = por %p170, %p171
    %s173 = ssub.s32 %s13, %s20
    %p174 = scmp.eq.s32.totalorder %s173, 0
    %s176 = sadd.s32 %s175, 1
    %s177 = scalar_select %p174, %s175, %s176
    %p180 = pneg %p174
    %p181 = scmp.eq.s32.totalorder %s13, 1
    %p182 = por %p180, %p181
    %p183 = scmp.ne.s32.totalorder %s175, %s178
    %p184 = scmp.eq.s32.totalorder %s13, 0
    %p185 = por %p183, %p184
    %p186 = scmp.ne.s32.totalorder %s175, %s178
    %p187 = scmp.eq.s32.totalorder %s18, 1
    %p188 = por %p186, %p187
    %p189 = scmp.ne.s32.totalorder %s178, %s179
    %p190 = scmp.eq.s32.totalorder %s18, 0
    %p191 = por %p189, %p190
    %p192 = scmp.ne.s32.totalorder %s178, %s179
    %p193 = scmp.eq.s32.totalorder %s19, 1
    %p194 = por %p192, %p193
    %p196 = scmp.ne.s32.totalorder %s179, %s195
    %p197 = scmp.eq.s32.totalorder %s19, 0
    %p198 = por %p196, %p197
    %p199 = scmp.le.s32.totalorder 1, %s13
    %p200 = scmp.lt.s32.totalorder %s13, 3
    %p201 = pnand %p199, %p200
    %p202 = pneg %p201
    // Predicated region
    $region9: #{_forward_impl.1} parent=5 // pred_check
      _
    $region10: #{_forward_impl.1} parent=5 // pred_check_branch
      %204 = sbr.rel (%p201) target = $region12
    $region11: #{_forward_impl.1} parent=5 // pred_region
      %s205 = ssub.s32 %s13, 1
      // Predicated region
      $region13: #{_forward_impl.1} parent=11 // pred_check
        %p206 = pneg %p60
      $region14: #{_forward_impl.1} parent=11 // pred_check_branch
        %208 = sbr.rel (%p206) target = $region16
      $region15: #{_forward_impl.1} parent=11 // pred_region
        _
      $region16: #{_forward_impl.1} parent=11 // pred_fallthru
        _
      // Predicated region
      $region17: #{_forward_impl.1} parent=11 // pred_check
        %p209 = pneg %p81
      $region18: #{_forward_impl.1} parent=11 // pred_check_branch
        %211 = sbr.rel (%p209) target = $region20
      $region19: #{_forward_impl.1} parent=11 // pred_region
        _
      $region20: #{_forward_impl.1} parent=11 // pred_fallthru
        _
      // Predicated region
      $region21: #{_forward_impl.1} parent=11 // pred_check
        %p212 = pneg %p102
      $region22: #{_forward_impl.1} parent=11 // pred_check_branch
        %214 = sbr.rel (%p212) target = $region24
      $region23: #{_forward_impl.1} parent=11 // pred_region
        _
      $region24: #{_forward_impl.1} parent=11 // pred_fallthru
        _
      // Predicated region
      $region25: #{_forward_impl.1} parent=11 // pred_check
        %p215 = pneg %p123
      $region26: #{_forward_impl.1} parent=11 // pred_check_branch
        %217 = sbr.rel (%p215) target = $region28
      $region27: #{_forward_impl.1} parent=11 // pred_region
        _
      $region28: #{_forward_impl.1} parent=11 // pred_fallthru
        _
      // Predicated region
      $region29: #{_forward_impl.1} parent=11 // pred_check
        %p218 = pneg %p144
      $region30: #{_forward_impl.1} parent=11 // pred_check_branch
        %220 = sbr.rel (%p218) target = $region32
      $region31: #{_forward_impl.1} parent=11 // pred_region
        _
      $region32: #{_forward_impl.1} parent=11 // pred_fallthru
        _
      // Predicated region
      $region33: #{_forward_impl.1} parent=11 // pred_check
        %p221 = pneg %p165
      $region34: #{_forward_impl.1} parent=11 // pred_check_branch
        %223 = sbr.rel (%p221) target = $region36
      $region35: #{_forward_impl.1} parent=11 // pred_region
        _
      $region36: #{_forward_impl.1} parent=11 // pred_fallthru
        _
    $region12: #{_forward_impl.1} parent=5 // pred_fallthru
      _
    %p224 = scmp.lt.s32.totalorder %s13, 2
    // Predicated region
    $region37: #{_forward_impl.1} parent=5 // pred_check
      %p225 = pneg %p224
    $region38: #{_forward_impl.1} parent=5 // pred_check_branch
      %227 = sbr.rel (%p225) target = $region40
    $region39: #{_forward_impl.1} parent=5 // pred_region
      // Predicated region
      $region41: #{_forward_impl.1} parent=39 // pred_check
        %p228 = pneg %p33
      $region42: #{_forward_impl.1} parent=39 // pred_check_branch
        %230 = sbr.rel (%p228) target = $region44
      $region43: #{_forward_impl.1} parent=39 // pred_region
        %s231 = smul.u32 3, %s13
        %p232 = scmp.lt.s32.totalorder %s231, 5
        %s233 = scalar_select %p232, %s231, 5
        %s234 = smul.addr %s233, 54
        %s235 = smul.addr %s234, 8
        %s236 = scalar_lea.vmem %s0, %s235
        %s237 = smul.u32 3, %s13
      $region44: #{_forward_impl.1} parent=39 // pred_fallthru
        _
    $region40: #{_forward_impl.1} parent=5 // pred_fallthru
      _
    %p238 = scmp.le.s32.totalorder 1, %s13
    %p239 = scmp.lt.s32.totalorder %s13, 3
    %p240 = pnand %p238, %p239
    %p241 = pneg %p240
    // Predicated region
    $region45: #{_forward_impl.1} parent=5 // pred_check
      _
    $region46: #{_forward_impl.1} parent=5 // pred_check_branch
      %243 = sbr.rel (%p240) target = $region48
    $region47: #{_forward_impl.1} parent=5 // pred_region
      %s244 = ssub.s32 %s13, 1
      %s245 = smul.u32 3, %s18
      %p246 = scmp.lt.s32.totalorder %s245, 5
      %s247 = scalar_select %p246, %s245, 5
      %s248 = smul.addr %s247, 54
      %s249 = smul.addr %s248, 8
      %s250 = scalar_lea.vmem %s0, %s249
      %p251 = pneg %p39
      %p252 = pneg %p36
      %p253 = pneg %p60
      %p254 = pneg %p57
      %p255 = pneg %p81
      %p256 = pneg %p78
      %p257 = pneg %p102
      %p258 = pneg %p99
      %p259 = pneg %p123
      %p260 = pneg %p120
      %p261 = pneg %p144
      %p262 = pneg %p141
      %p263 = pneg %p165
      %p264 = pneg %p162
      %p265 = pneg %p191
      %p266 = pneg %p188
      %s267 = smul.u32 3, %s18
      %p268 = scmp.lt.s32.totalorder %s267, 5
      %s269 = scalar_select %p268, %s267, 5
      %s270 = scalar_lea.vmem %s7, %s269
      %s271 = smul.u32 3, %s18
      %p272 = scmp.lt.s32.totalorder %s271, 5
      %s273 = scalar_select %p272, %s271, 5
      %s274 = smul.addr %s273, 54
      %s275 = smul.addr %s274, 8
      %s276 = scalar_lea.vmem %s0, %s275
      %s277 = smul.u32 3, %s18
      %s278 = smul.u32 3, %s18
      %p279 = scmp.lt.s32.totalorder %s278, 5
      %s280 = scalar_select %p279, %s278, 5
      %s281 = scalar_lea.vmem %s7, %s280
      %s282 = smul.u32 3, %s18
      %v283 = vld [vmem:[%s2] sm:$0x1]
      %v284 = vld [vmem:[%s4] sm:$0x1]
      %v285 = vld [vmem:[%s1] sm:$0x1]
      %s286 = scalar_lea.vmem %s1, 1
      %v287 = vld [vmem:[%s286] sm:$0x1]
      %s288 = scalar_lea.vmem %s1, 2
      %v289 = vld [vmem:[%s288] sm:$0x1]
      %s290 = scalar_lea.vmem %s1, 3
      %v291 = vld [vmem:[%s290] sm:$0x1]
      %s292 = scalar_lea.vmem %s1, 4
      %v293 = vld [vmem:[%s292] sm:$0x1]
      %s294 = scalar_lea.vmem %s1, 5
      %v295 = vld [vmem:[%s294] sm:$0x1]
      %s296 = scalar_lea.vmem %s1, 6
      %v297 = vld [vmem:[%s296] sm:$0x1]
      %s298 = scalar_lea.vmem %s1, 7
      %v299 = vld [vmem:[%s298] sm:$0x1]
      %s300 = scalar_lea.vmem %s1, 8
      %v301 = vld [vmem:[%s300] sm:$0x1]
      loop: start=0, step=1, limit=3
      $region49: #{_forward_impl.1} parent=47 // loop_pre_header
        _
      $region50: #{_forward_impl.1} parent=47 // loop_header
        %s303 = sphi 0, %s307
        %p304 = scmp.ge.s32.totalorder %s303, 3
      $region51: #{_forward_impl.1} parent=47 // loop_header_branch
        %306 = sbr.rel (%p304) target = $region55
      $region52: #{_forward_impl.1} parent=47 // loop_body
        %s308 = smul.u32 %s303, 432
        %s309 = scalar_lea.vmem %s276, %s308
        %v310 = vld [vmem:[%s309] sm:$0xff]
        %v311 = vld [vmem:[%s309 + $0x8] sm:$0xff]
        %v312 = vld [vmem:[%s309 + $0x18] sm:$0xff]
        %v313 = vld [vmem:[%s309 + $0x20] sm:$0xff]
        %v314 = vld [vmem:[%s309 + $0x30] sm:$0xff]
        %v315 = vld [vmem:[%s309 + $0x38] sm:$0xff]
        %v316 = vld [vmem:[%s309 + $0x48] sm:$0xff]
        %v317 = vld [vmem:[%s309 + $0x50] sm:$0xff]
        %v318 = vld [vmem:[%s309 + $0x60] sm:$0xff]
        %v319 = vld [vmem:[%s309 + $0x68] sm:$0xff]
        %v320 = vld [vmem:[%s309 + $0x78] sm:$0xff]
        %v321 = vld [vmem:[%s309 + $0x80] sm:$0xff]
        %v322 = vld [vmem:[%s309 + $0x90] sm:$0xff]
        %v323 = vld [vmem:[%s309 + $0x98] sm:$0xff]
        %v324 = vld [vmem:[%s309 + $0xa8] sm:$0xff]
        %v325 = vld [vmem:[%s309 + $0xb0] sm:$0xff]
        %v326 = vld [vmem:[%s309 + $0xc0] sm:$0xff]
        %v327 = vld [vmem:[%s309 + $0xc8] sm:$0xff]
        %v328 = vld [vmem:[%s309 + $0xd8] sm:$0xff]
        %v329 = vld [vmem:[%s309 + $0xe0] sm:$0xff]
        %v330 = vld [vmem:[%s309 + $0xf0] sm:$0xff]
        %v331 = vld [vmem:[%s309 + $0xf8] sm:$0xff]
        %v332 = vld [vmem:[%s309 + $0x108] sm:$0xff]
        %v333 = vld [vmem:[%s309 + $0x110] sm:$0xff]
        %v334 = vld [vmem:[%s309 + $0x120] sm:$0xff]
        %v335 = vld [vmem:[%s309 + $0x128] sm:$0xff]
        %v336 = vld [vmem:[%s309 + $0x138] sm:$0xff]
        %v337 = vld [vmem:[%s309 + $0x140] sm:$0xff]
        %v338 = vld [vmem:[%s309 + $0x150] sm:$0xff]
        %v339 = vld [vmem:[%s309 + $0x158] sm:$0xff]
        %v340 = vld [vmem:[%s309 + $0x168] sm:$0xff]
        %v341 = vld [vmem:[%s309 + $0x170] sm:$0xff]
        %343 = vset.pattern.permute.xlu0 0
        %344 = vperm.xlu0 %343, %v310
        %v345 = vpop.permute.xlu0 %344
        %348 = vset.pattern.permute.xlu0 0
        %349 = vperm.xlu0 %348, %v311
        %v350 = vpop.permute.xlu0 %349
        %353 = vset.pattern.permute.xlu0 0
        %354 = vperm.xlu0 %353, %v312
        %v355 = vpop.permute.xlu0 %354
        %358 = vset.pattern.permute.xlu0 0
        %359 = vperm.xlu0 %358, %v313
        %v360 = vpop.permute.xlu0 %359
        %363 = vset.pattern.permute.xlu0 0
        %364 = vperm.xlu0 %363, %v314
        %v365 = vpop.permute.xlu0 %364
        %368 = vset.pattern.permute.xlu0 0
        %369 = vperm.xlu0 %368, %v315
        %v370 = vpop.permute.xlu0 %369
        %373 = vset.pattern.permute.xlu0 0
        %374 = vperm.xlu0 %373, %v316
        %v375 = vpop.permute.xlu0 %374
        %378 = vset.pattern.permute.xlu0 0
        %379 = vperm.xlu0 %378, %v317
        %v380 = vpop.permute.xlu0 %379
        %383 = vset.pattern.permute.xlu0 0
        %384 = vperm.xlu0 %383, %v318
        %v385 = vpop.permute.xlu0 %384
        %388 = vset.pattern.permute.xlu0 0
        %389 = vperm.xlu0 %388, %v319
        %v390 = vpop.permute.xlu0 %389
        %393 = vset.pattern.permute.xlu0 0
        %394 = vperm.xlu0 %393, %v320
        %v395 = vpop.permute.xlu0 %394
        %398 = vset.pattern.permute.xlu0 0
        %399 = vperm.xlu0 %398, %v321
        %v400 = vpop.permute.xlu0 %399
        %403 = vset.pattern.permute.xlu0 0
        %404 = vperm.xlu0 %403, %v322
        %v405 = vpop.permute.xlu0 %404
        %408 = vset.pattern.permute.xlu0 0
        %409 = vperm.xlu0 %408, %v323
        %v410 = vpop.permute.xlu0 %409
        %413 = vset.pattern.permute.xlu0 0
        %414 = vperm.xlu0 %413, %v324
        %v415 = vpop.permute.xlu0 %414
        %418 = vset.pattern.permute.xlu0 0
        %419 = vperm.xlu0 %418, %v325
        %v420 = vpop.permute.xlu0 %419
        %423 = vset.pattern.permute.xlu0 0
        %424 = vperm.xlu0 %423, %v326
        %v425 = vpop.permute.xlu0 %424
        %428 = vset.pattern.permute.xlu0 0
        %429 = vperm.xlu0 %428, %v327
        %v430 = vpop.permute.xlu0 %429
        %433 = vset.pattern.permute.xlu0 0
        %434 = vperm.xlu0 %433, %v328
        %v435 = vpop.permute.xlu0 %434
        %438 = vset.pattern.permute.xlu0 0
        %439 = vperm.xlu0 %438, %v329
        %v440 = vpop.permute.xlu0 %439
        %443 = vset.pattern.permute.xlu0 0
        %444 = vperm.xlu0 %443, %v330
        %v445 = vpop.permute.xlu0 %444
        %448 = vset.pattern.permute.xlu0 0
        %449 = vperm.xlu0 %448, %v331
        %v450 = vpop.permute.xlu0 %449
        %453 = vset.pattern.permute.xlu0 0
        %454 = vperm.xlu0 %453, %v332
        %v455 = vpop.permute.xlu0 %454
        %458 = vset.pattern.permute.xlu0 0
        %459 = vperm.xlu0 %458, %v333
        %v460 = vpop.permute.xlu0 %459
        %463 = vset.pattern.permute.xlu0 0
        %464 = vperm.xlu0 %463, %v334
        %v465 = vpop.permute.xlu0 %464
        %468 = vset.pattern.permute.xlu0 0
        %469 = vperm.xlu0 %468, %v335
        %v470 = vpop.permute.xlu0 %469
        %473 = vset.pattern.permute.xlu0 0
        %474 = vperm.xlu0 %473, %v336
        %v475 = vpop.permute.xlu0 %474
        %478 = vset.pattern.permute.xlu0 0
        %479 = vperm.xlu0 %478, %v337
        %v480 = vpop.permute.xlu0 %479
        %483 = vset.pattern.permute.xlu0 0
        %484 = vperm.xlu0 %483, %v338
        %v485 = vpop.permute.xlu0 %484
        %488 = vset.pattern.permute.xlu0 0
        %489 = vperm.xlu0 %488, %v339
        %v490 = vpop.permute.xlu0 %489
        %493 = vset.pattern.permute.xlu0 0
        %494 = vperm.xlu0 %493, %v340
        %v495 = vpop.permute.xlu0 %494
        %498 = vset.pattern.permute.xlu0 0
        %499 = vperm.xlu0 %498, %v341
        %v500 = vpop.permute.xlu0 %499
        %v503 = vperm.slane %v285, 0
        %v505 = vmul.f32 %v345, %v503
        %v506 = vmul.f32 %v350, %v503
        %v507 = vmul.f32 %v355, %v503
        %v508 = vmul.f32 %v360, %v503
        %v509 = vmul.f32 %v365, %v503
        %v510 = vmul.f32 %v370, %v503
        %v511 = vmul.f32 %v375, %v503
        %v512 = vmul.f32 %v380, %v503
        %v513 = vmul.f32 %v385, %v503
        %v514 = vmul.f32 %v390, %v503
        %v515 = vmul.f32 %v395, %v503
        %v516 = vmul.f32 %v400, %v503
        %v517 = vmul.f32 %v405, %v503
        %v518 = vmul.f32 %v410, %v503
        %v519 = vmul.f32 %v415, %v503
        %v520 = vmul.f32 %v420, %v503
        %v521 = vmul.f32 %v425, %v503
        %v522 = vmul.f32 %v430, %v503
        %v523 = vmul.f32 %v435, %v503
        %v524 = vmul.f32 %v440, %v503
        %v525 = vmul.f32 %v445, %v503
        %v526 = vmul.f32 %v450, %v503
        %v527 = vmul.f32 %v455, %v503
        %v528 = vmul.f32 %v460, %v503
        %v529 = vmul.f32 %v465, %v503
        %v530 = vmul.f32 %v470, %v503
        %v531 = vmul.f32 %v475, %v503
        %v532 = vmul.f32 %v480, %v503
        %v533 = vmul.f32 %v485, %v503
        %v534 = vmul.f32 %v490, %v503
        %v535 = vmul.f32 %v495, %v503
        %v536 = vmul.f32 %v500, %v503
        %v537 = vld [vmem:[%s309 + $0x1] sm:$0xff]
        %v538 = vld [vmem:[%s309 + $0x9] sm:$0xff]
        %v539 = vld [vmem:[%s309 + $0x19] sm:$0xff]
        %v540 = vld [vmem:[%s309 + $0x21] sm:$0xff]
        %v541 = vld [vmem:[%s309 + $0x31] sm:$0xff]
        %v542 = vld [vmem:[%s309 + $0x39] sm:$0xff]
        %v543 = vld [vmem:[%s309 + $0x49] sm:$0xff]
        %v544 = vld [vmem:[%s309 + $0x51] sm:$0xff]
        %v545 = vld [vmem:[%s309 + $0x61] sm:$0xff]
        %v546 = vld [vmem:[%s309 + $0x69] sm:$0xff]
        %v547 = vld [vmem:[%s309 + $0x79] sm:$0xff]
        %v548 = vld [vmem:[%s309 + $0x81] sm:$0xff]
        %v549 = vld [vmem:[%s309 + $0x91] sm:$0xff]
        %v550 = vld [vmem:[%s309 + $0x99] sm:$0xff]
        %v551 = vld [vmem:[%s309 + $0xa9] sm:$0xff]
        %v552 = vld [vmem:[%s309 + $0xb1] sm:$0xff]
        %v553 = vld [vmem:[%s309 + $0xc1] sm:$0xff]
        %v554 = vld [vmem:[%s309 + $0xc9] sm:$0xff]
        %v555 = vld [vmem:[%s309 + $0xd9] sm:$0xff]
        %v556 = vld [vmem:[%s309 + $0xe1] sm:$0xff]
        %v557 = vld [vmem:[%s309 + $0xf1] sm:$0xff]
        %v558 = vld [vmem:[%s309 + $0xf9] sm:$0xff]
        %v559 = vld [vmem:[%s309 + $0x109] sm:$0xff]
        %v560 = vld [vmem:[%s309 + $0x111] sm:$0xff]
        %v561 = vld [vmem:[%s309 + $0x121] sm:$0xff]
        %v562 = vld [vmem:[%s309 + $0x129] sm:$0xff]
        %v563 = vld [vmem:[%s309 + $0x139] sm:$0xff]
        %v564 = vld [vmem:[%s309 + $0x141] sm:$0xff]
        %v565 = vld [vmem:[%s309 + $0x151] sm:$0xff]
        %v566 = vld [vmem:[%s309 + $0x159] sm:$0xff]
        %v567 = vld [vmem:[%s309 + $0x169] sm:$0xff]
        %v568 = vld [vmem:[%s309 + $0x171] sm:$0xff]
        %570 = vset.pattern.permute.xlu0 0
        %571 = vperm.xlu0 %570, %v537
        %v572 = vpop.permute.xlu0 %571
        %575 = vset.pattern.permute.xlu0 0
        %576 = vperm.xlu0 %575, %v538
        %v577 = vpop.permute.xlu0 %576
        %580 = vset.pattern.permute.xlu0 0
        %581 = vperm.xlu0 %580, %v539
        %v582 = vpop.permute.xlu0 %581
        %585 = vset.pattern.permute.xlu0 0
        %586 = vperm.xlu0 %585, %v540
        %v587 = vpop.permute.xlu0 %586
        %590 = vset.pattern.permute.xlu0 0
        %591 = vperm.xlu0 %590, %v541
        %v592 = vpop.permute.xlu0 %591
        %595 = vset.pattern.permute.xlu0 0
        %596 = vperm.xlu0 %595, %v542
        %v597 = vpop.permute.xlu0 %596
        %600 = vset.pattern.permute.xlu0 0
        %601 = vperm.xlu0 %600, %v543
        %v602 = vpop.permute.xlu0 %601
        %605 = vset.pattern.permute.xlu0 0
        %606 = vperm.xlu0 %605, %v544
        %v607 = vpop.permute.xlu0 %606
        %610 = vset.pattern.permute.xlu0 0
        %611 = vperm.xlu0 %610, %v545
        %v612 = vpop.permute.xlu0 %611
        %615 = vset.pattern.permute.xlu0 0
        %616 = vperm.xlu0 %615, %v546
        %v617 = vpop.permute.xlu0 %616
        %620 = vset.pattern.permute.xlu0 0
        %621 = vperm.xlu0 %620, %v547
        %v622 = vpop.permute.xlu0 %621
        %625 = vset.pattern.permute.xlu0 0
        %626 = vperm.xlu0 %625, %v548
        %v627 = vpop.permute.xlu0 %626
        %630 = vset.pattern.permute.xlu0 0
        %631 = vperm.xlu0 %630, %v549
        %v632 = vpop.permute.xlu0 %631
        %635 = vset.pattern.permute.xlu0 0
        %636 = vperm.xlu0 %635, %v550
        %v637 = vpop.permute.xlu0 %636
        %640 = vset.pattern.permute.xlu0 0
        %641 = vperm.xlu0 %640, %v551
        %v642 = vpop.permute.xlu0 %641
        %645 = vset.pattern.permute.xlu0 0
        %646 = vperm.xlu0 %645, %v552
        %v647 = vpop.permute.xlu0 %646
        %650 = vset.pattern.permute.xlu0 0
        %651 = vperm.xlu0 %650, %v553
        %v652 = vpop.permute.xlu0 %651
        %655 = vset.pattern.permute.xlu0 0
        %656 = vperm.xlu0 %655, %v554
        %v657 = vpop.permute.xlu0 %656
        %660 = vset.pattern.permute.xlu0 0
        %661 = vperm.xlu0 %660, %v555
        %v662 = vpop.permute.xlu0 %661
        %665 = vset.pattern.permute.xlu0 0
        %666 = vperm.xlu0 %665, %v556
        %v667 = vpop.permute.xlu0 %666
        %670 = vset.pattern.permute.xlu0 0
        %671 = vperm.xlu0 %670, %v557
        %v672 = vpop.permute.xlu0 %671
        %675 = vset.pattern.permute.xlu0 0
        %676 = vperm.xlu0 %675, %v558
        %v677 = vpop.permute.xlu0 %676
        %680 = vset.pattern.permute.xlu0 0
        %681 = vperm.xlu0 %680, %v559
        %v682 = vpop.permute.xlu0 %681
        %685 = vset.pattern.permute.xlu0 0
        %686 = vperm.xlu0 %685, %v560
        %v687 = vpop.permute.xlu0 %686
        %690 = vset.pattern.permute.xlu0 0
        %691 = vperm.xlu0 %690, %v561
        %v692 = vpop.permute.xlu0 %691
        %695 = vset.pattern.permute.xlu0 0
        %696 = vperm.xlu0 %695, %v562
        %v697 = vpop.permute.xlu0 %696
        %700 = vset.pattern.permute.xlu0 0
        %701 = vperm.xlu0 %700, %v563
        %v702 = vpop.permute.xlu0 %701
        %705 = vset.pattern.permute.xlu0 0
        %706 = vperm.xlu0 %705, %v564
        %v707 = vpop.permute.xlu0 %706
        %710 = vset.pattern.permute.xlu0 0
        %711 = vperm.xlu0 %710, %v565
        %v712 = vpop.permute.xlu0 %711
        %715 = vset.pattern.permute.xlu0 0
        %716 = vperm.xlu0 %715, %v566
        %v717 = vpop.permute.xlu0 %716
        %720 = vset.pattern.permute.xlu0 0
        %721 = vperm.xlu0 %720, %v567
        %v722 = vpop.permute.xlu0 %721
        %725 = vset.pattern.permute.xlu0 0
        %726 = vperm.xlu0 %725, %v568
        %v727 = vpop.permute.xlu0 %726
        %v730 = vperm.slane %v287, 0
        %v732 = vmul.f32 %v572, %v730
        %v733 = vmul.f32 %v577, %v730
        %v734 = vmul.f32 %v582, %v730
        %v735 = vmul.f32 %v587, %v730
        %v736 = vmul.f32 %v592, %v730
        %v737 = vmul.f32 %v597, %v730
        %v738 = vmul.f32 %v602, %v730
        %v739 = vmul.f32 %v607, %v730
        %v740 = vmul.f32 %v612, %v730
        %v741 = vmul.f32 %v617, %v730
        %v742 = vmul.f32 %v622, %v730
        %v743 = vmul.f32 %v627, %v730
        %v744 = vmul.f32 %v632, %v730
        %v745 = vmul.f32 %v637, %v730
        %v746 = vmul.f32 %v642, %v730
        %v747 = vmul.f32 %v647, %v730
        %v748 = vmul.f32 %v652, %v730
        %v749 = vmul.f32 %v657, %v730
        %v750 = vmul.f32 %v662, %v730
        %v751 = vmul.f32 %v667, %v730
        %v752 = vmul.f32 %v672, %v730
        %v753 = vmul.f32 %v677, %v730
        %v754 = vmul.f32 %v682, %v730
        %v755 = vmul.f32 %v687, %v730
        %v756 = vmul.f32 %v692, %v730
        %v757 = vmul.f32 %v697, %v730
        %v758 = vmul.f32 %v702, %v730
        %v759 = vmul.f32 %v707, %v730
        %v760 = vmul.f32 %v712, %v730
        %v761 = vmul.f32 %v717, %v730
        %v762 = vmul.f32 %v722, %v730
        %v763 = vmul.f32 %v727, %v730
        %v764 = vadd.f32 %v505, %v732
        %v765 = vadd.f32 %v506, %v733
        %v766 = vadd.f32 %v507, %v734
        %v767 = vadd.f32 %v508, %v735
        %v768 = vadd.f32 %v509, %v736
        %v769 = vadd.f32 %v510, %v737
        %v770 = vadd.f32 %v511, %v738
        %v771 = vadd.f32 %v512, %v739
        %v772 = vadd.f32 %v513, %v740
        %v773 = vadd.f32 %v514, %v741
        %v774 = vadd.f32 %v515, %v742
        %v775 = vadd.f32 %v516, %v743
        %v776 = vadd.f32 %v517, %v744
        %v777 = vadd.f32 %v518, %v745
        %v778 = vadd.f32 %v519, %v746
        %v779 = vadd.f32 %v520, %v747
        %v780 = vadd.f32 %v521, %v748
        %v781 = vadd.f32 %v522, %v749
        %v782 = vadd.f32 %v523, %v750
        %v783 = vadd.f32 %v524, %v751
        %v784 = vadd.f32 %v525, %v752
        %v785 = vadd.f32 %v526, %v753
        %v786 = vadd.f32 %v527, %v754
        %v787 = vadd.f32 %v528, %v755
        %v788 = vadd.f32 %v529, %v756
        %v789 = vadd.f32 %v530, %v757
        %v790 = vadd.f32 %v531, %v758
        %v791 = vadd.f32 %v532, %v759
        %v792 = vadd.f32 %v533, %v760
        %v793 = vadd.f32 %v534, %v761
        %v794 = vadd.f32 %v535, %v762
        %v795 = vadd.f32 %v536, %v763
        %v796 = vld [vmem:[%s309 + $0x2] sm:$0xff]
        %v797 = vld [vmem:[%s309 + $0xa] sm:$0xff]
        %v798 = vld [vmem:[%s309 + $0x1a] sm:$0xff]
        %v799 = vld [vmem:[%s309 + $0x22] sm:$0xff]
        %v800 = vld [vmem:[%s309 + $0x32] sm:$0xff]
        %v801 = vld [vmem:[%s309 + $0x3a] sm:$0xff]
        %v802 = vld [vmem:[%s309 + $0x4a] sm:$0xff]
        %v803 = vld [vmem:[%s309 + $0x52] sm:$0xff]
        %v804 = vld [vmem:[%s309 + $0x62] sm:$0xff]
        %v805 = vld [vmem:[%s309 + $0x6a] sm:$0xff]
        %v806 = vld [vmem:[%s309 + $0x7a] sm:$0xff]
        %v807 = vld [vmem:[%s309 + $0x82] sm:$0xff]
        %v808 = vld [vmem:[%s309 + $0x92] sm:$0xff]
        %v809 = vld [vmem:[%s309 + $0x9a] sm:$0xff]
        %v810 = vld [vmem:[%s309 + $0xaa] sm:$0xff]
        %v811 = vld [vmem:[%s309 + $0xb2] sm:$0xff]
        %v812 = vld [vmem:[%s309 + $0xc2] sm:$0xff]
        %v813 = vld [vmem:[%s309 + $0xca] sm:$0xff]
        %v814 = vld [vmem:[%s309 + $0xda] sm:$0xff]
        %v815 = vld [vmem:[%s309 + $0xe2] sm:$0xff]
        %v816 = vld [vmem:[%s309 + $0xf2] sm:$0xff]
        %v817 = vld [vmem:[%s309 + $0xfa] sm:$0xff]
        %v818 = vld [vmem:[%s309 + $0x10a] sm:$0xff]
        %v819 = vld [vmem:[%s309 + $0x112] sm:$0xff]
        %v820 = vld [vmem:[%s309 + $0x122] sm:$0xff]
        %v821 = vld [vmem:[%s309 + $0x12a] sm:$0xff]
        %v822 = vld [vmem:[%s309 + $0x13a] sm:$0xff]
        %v823 = vld [vmem:[%s309 + $0x142] sm:$0xff]
        %v824 = vld [vmem:[%s309 + $0x152] sm:$0xff]
        %v825 = vld [vmem:[%s309 + $0x15a] sm:$0xff]
        %v826 = vld [vmem:[%s309 + $0x16a] sm:$0xff]
        %v827 = vld [vmem:[%s309 + $0x172] sm:$0xff]
        %829 = vset.pattern.permute.xlu0 0
        %830 = vperm.xlu0 %829, %v796
        %v831 = vpop.permute.xlu0 %830
        %834 = vset.pattern.permute.xlu0 0
        %835 = vperm.xlu0 %834, %v797
        %v836 = vpop.permute.xlu0 %835
        %839 = vset.pattern.permute.xlu0 0
        %840 = vperm.xlu0 %839, %v798
        %v841 = vpop.permute.xlu0 %840
        %844 = vset.pattern.permute.xlu0 0
        %845 = vperm.xlu0 %844, %v799
        %v846 = vpop.permute.xlu0 %845
        %849 = vset.pattern.permute.xlu0 0
        %850 = vperm.xlu0 %849, %v800
        %v851 = vpop.permute.xlu0 %850
        %854 = vset.pattern.permute.xlu0 0
        %855 = vperm.xlu0 %854, %v801
        %v856 = vpop.permute.xlu0 %855
        %859 = vset.pattern.permute.xlu0 0
        %860 = vperm.xlu0 %859, %v802
        %v861 = vpop.permute.xlu0 %860
        %864 = vset.pattern.permute.xlu0 0
        %865 = vperm.xlu0 %864, %v803
        %v866 = vpop.permute.xlu0 %865
        %869 = vset.pattern.permute.xlu0 0
        %870 = vperm.xlu0 %869, %v804
        %v871 = vpop.permute.xlu0 %870
        %874 = vset.pattern.permute.xlu0 0
        %875 = vperm.xlu0 %874, %v805
        %v876 = vpop.permute.xlu0 %875
        %879 = vset.pattern.permute.xlu0 0
        %880 = vperm.xlu0 %879, %v806
        %v881 = vpop.permute.xlu0 %880
        %884 = vset.pattern.permute.xlu0 0
        %885 = vperm.xlu0 %884, %v807
        %v886 = vpop.permute.xlu0 %885
        %889 = vset.pattern.permute.xlu0 0
        %890 = vperm.xlu0 %889, %v808
        %v891 = vpop.permute.xlu0 %890
        %894 = vset.pattern.permute.xlu0 0
        %895 = vperm.xlu0 %894, %v809
        %v896 = vpop.permute.xlu0 %895
        %899 = vset.pattern.permute.xlu0 0
        %900 = vperm.xlu0 %899, %v810
        %v901 = vpop.permute.xlu0 %900
        %904 = vset.pattern.permute.xlu0 0
        %905 = vperm.xlu0 %904, %v811
        %v906 = vpop.permute.xlu0 %905
        %909 = vset.pattern.permute.xlu0 0
        %910 = vperm.xlu0 %909, %v812
        %v911 = vpop.permute.xlu0 %910
        %914 = vset.pattern.permute.xlu0 0
        %915 = vperm.xlu0 %914, %v813
        %v916 = vpop.permute.xlu0 %915
        %919 = vset.pattern.permute.xlu0 0
        %920 = vperm.xlu0 %919, %v814
        %v921 = vpop.permute.xlu0 %920
        %924 = vset.pattern.permute.xlu0 0
        %925 = vperm.xlu0 %924, %v815
        %v926 = vpop.permute.xlu0 %925
        %929 = vset.pattern.permute.xlu0 0
        %930 = vperm.xlu0 %929, %v816
        %v931 = vpop.permute.xlu0 %930
        %934 = vset.pattern.permute.xlu0 0
        %935 = vperm.xlu0 %934, %v817
        %v936 = vpop.permute.xlu0 %935
        %939 = vset.pattern.permute.xlu0 0
        %940 = vperm.xlu0 %939, %v818
        %v941 = vpop.permute.xlu0 %940
        %944 = vset.pattern.permute.xlu0 0
        %945 = vperm.xlu0 %944, %v819
        %v946 = vpop.permute.xlu0 %945
        %949 = vset.pattern.permute.xlu0 0
        %950 = vperm.xlu0 %949, %v820
        %v951 = vpop.permute.xlu0 %950
        %954 = vset.pattern.permute.xlu0 0
        %955 = vperm.xlu0 %954, %v821
        %v956 = vpop.permute.xlu0 %955
        %959 = vset.pattern.permute.xlu0 0
        %960 = vperm.xlu0 %959, %v822
        %v961 = vpop.permute.xlu0 %960
        %964 = vset.pattern.permute.xlu0 0
        %965 = vperm.xlu0 %964, %v823
        %v966 = vpop.permute.xlu0 %965
        %969 = vset.pattern.permute.xlu0 0
        %970 = vperm.xlu0 %969, %v824
        %v971 = vpop.permute.xlu0 %970
        %974 = vset.pattern.permute.xlu0 0
        %975 = vperm.xlu0 %974, %v825
        %v976 = vpop.permute.xlu0 %975
        %979 = vset.pattern.permute.xlu0 0
        %980 = vperm.xlu0 %979, %v826
        %v981 = vpop.permute.xlu0 %980
        %984 = vset.pattern.permute.xlu0 0
        %985 = vperm.xlu0 %984, %v827
        %v986 = vpop.permute.xlu0 %985
        %v989 = vperm.slane %v289, 0
        %v991 = vmul.f32 %v831, %v989
        %v992 = vmul.f32 %v836, %v989
        %v993 = vmul.f32 %v841, %v989
        %v994 = vmul.f32 %v846, %v989
        %v995 = vmul.f32 %v851, %v989
        %v996 = vmul.f32 %v856, %v989
        %v997 = vmul.f32 %v861, %v989
        %v998 = vmul.f32 %v866, %v989
        %v999 = vmul.f32 %v871, %v989
        %v1000 = vmul.f32 %v876, %v989
        %v1001 = vmul.f32 %v881, %v989
        %v1002 = vmul.f32 %v886, %v989
        %v1003 = vmul.f32 %v891, %v989
        %v1004 = vmul.f32 %v896, %v989
        %v1005 = vmul.f32 %v901, %v989
        %v1006 = vmul.f32 %v906, %v989
        %v1007 = vmul.f32 %v911, %v989
        %v1008 = vmul.f32 %v916, %v989
        %v1009 = vmul.f32 %v921, %v989
        %v1010 = vmul.f32 %v926, %v989
        %v1011 = vmul.f32 %v931, %v989
        %v1012 = vmul.f32 %v936, %v989
        %v1013 = vmul.f32 %v941, %v989
        %v1014 = vmul.f32 %v946, %v989
        %v1015 = vmul.f32 %v951, %v989
        %v1016 = vmul.f32 %v956, %v989
        %v1017 = vmul.f32 %v961, %v989
        %v1018 = vmul.f32 %v966, %v989
        %v1019 = vmul.f32 %v971, %v989
        %v1020 = vmul.f32 %v976, %v989
        %v1021 = vmul.f32 %v981, %v989
        %v1022 = vmul.f32 %v986, %v989
        %v1023 = vadd.f32 %v764, %v991
        %v1024 = vadd.f32 %v765, %v992
        %v1025 = vadd.f32 %v766, %v993
        %v1026 = vadd.f32 %v767, %v994
        %v1027 = vadd.f32 %v768, %v995
        %v1028 = vadd.f32 %v769, %v996
        %v1029 = vadd.f32 %v770, %v997
        %v1030 = vadd.f32 %v771, %v998
        %v1031 = vadd.f32 %v772, %v999
        %v1032 = vadd.f32 %v773, %v1000
        %v1033 = vadd.f32 %v774, %v1001
        %v1034 = vadd.f32 %v775, %v1002
        %v1035 = vadd.f32 %v776, %v1003
        %v1036 = vadd.f32 %v777, %v1004
        %v1037 = vadd.f32 %v778, %v1005
        %v1038 = vadd.f32 %v779, %v1006
        %v1039 = vadd.f32 %v780, %v1007
        %v1040 = vadd.f32 %v781, %v1008
        %v1041 = vadd.f32 %v782, %v1009
        %v1042 = vadd.f32 %v783, %v1010
        %v1043 = vadd.f32 %v784, %v1011
        %v1044 = vadd.f32 %v785, %v1012
        %v1045 = vadd.f32 %v786, %v1013
        %v1046 = vadd.f32 %v787, %v1014
        %v1047 = vadd.f32 %v788, %v1015
        %v1048 = vadd.f32 %v789, %v1016
        %v1049 = vadd.f32 %v790, %v1017
        %v1050 = vadd.f32 %v791, %v1018
        %v1051 = vadd.f32 %v792, %v1019
        %v1052 = vadd.f32 %v793, %v1020
        %v1053 = vadd.f32 %v794, %v1021
        %v1054 = vadd.f32 %v795, %v1022
        %s1055 = sadd.s32 24, %s308
        %s1056 = scalar_lea.vmem %s276, %s1055
        %v1057 = vld [vmem:[%s1056] sm:$0xff]
        %v1058 = vld [vmem:[%s1056 + $0x8] sm:$0xff]
        %v1059 = vld [vmem:[%s1056 + $0x18] sm:$0xff]
        %v1060 = vld [vmem:[%s1056 + $0x20] sm:$0xff]
        %v1061 = vld [vmem:[%s1056 + $0x30] sm:$0xff]
        %v1062 = vld [vmem:[%s1056 + $0x38] sm:$0xff]
        %v1063 = vld [vmem:[%s1056 + $0x48] sm:$0xff]
        %v1064 = vld [vmem:[%s1056 + $0x50] sm:$0xff]
        %v1065 = vld [vmem:[%s1056 + $0x60] sm:$0xff]
        %v1066 = vld [vmem:[%s1056 + $0x68] sm:$0xff]
        %v1067 = vld [vmem:[%s1056 + $0x78] sm:$0xff]
        %v1068 = vld [vmem:[%s1056 + $0x80] sm:$0xff]
        %v1069 = vld [vmem:[%s1056 + $0x90] sm:$0xff]
        %v1070 = vld [vmem:[%s1056 + $0x98] sm:$0xff]
        %v1071 = vld [vmem:[%s1056 + $0xa8] sm:$0xff]
        %v1072 = vld [vmem:[%s1056 + $0xb0] sm:$0xff]
        %v1073 = vld [vmem:[%s1056 + $0xc0] sm:$0xff]
        %v1074 = vld [vmem:[%s1056 + $0xc8] sm:$0xff]
        %v1075 = vld [vmem:[%s1056 + $0xd8] sm:$0xff]
        %v1076 = vld [vmem:[%s1056 + $0xe0] sm:$0xff]
        %v1077 = vld [vmem:[%s1056 + $0xf0] sm:$0xff]
        %v1078 = vld [vmem:[%s1056 + $0xf8] sm:$0xff]
        %v1079 = vld [vmem:[%s1056 + $0x108] sm:$0xff]
        %v1080 = vld [vmem:[%s1056 + $0x110] sm:$0xff]
        %v1081 = vld [vmem:[%s1056 + $0x120] sm:$0xff]
        %v1082 = vld [vmem:[%s1056 + $0x128] sm:$0xff]
        %v1083 = vld [vmem:[%s1056 + $0x138] sm:$0xff]
        %v1084 = vld [vmem:[%s1056 + $0x140] sm:$0xff]
        %v1085 = vld [vmem:[%s1056 + $0x150] sm:$0xff]
        %v1086 = vld [vmem:[%s1056 + $0x158] sm:$0xff]
        %v1087 = vld [vmem:[%s1056 + $0x168] sm:$0xff]
        %v1088 = vld [vmem:[%s1056 + $0x170] sm:$0xff]
        %1090 = vset.pattern.permute.xlu0 0
        %1091 = vperm.xlu0 %1090, %v1057
        %v1092 = vpop.permute.xlu0 %1091
        %1095 = vset.pattern.permute.xlu0 0
        %1096 = vperm.xlu0 %1095, %v1058
        %v1097 = vpop.permute.xlu0 %1096
        %1100 = vset.pattern.permute.xlu0 0
        %1101 = vperm.xlu0 %1100, %v1059
        %v1102 = vpop.permute.xlu0 %1101
        %1105 = vset.pattern.permute.xlu0 0
        %1106 = vperm.xlu0 %1105, %v1060
        %v1107 = vpop.permute.xlu0 %1106
        %1110 = vset.pattern.permute.xlu0 0
        %1111 = vperm.xlu0 %1110, %v1061
        %v1112 = vpop.permute.xlu0 %1111
        %1115 = vset.pattern.permute.xlu0 0
        %1116 = vperm.xlu0 %1115, %v1062
        %v1117 = vpop.permute.xlu0 %1116
        %1120 = vset.pattern.permute.xlu0 0
        %1121 = vperm.xlu0 %1120, %v1063
        %v1122 = vpop.permute.xlu0 %1121
        %1125 = vset.pattern.permute.xlu0 0
        %1126 = vperm.xlu0 %1125, %v1064
        %v1127 = vpop.permute.xlu0 %1126
        %1130 = vset.pattern.permute.xlu0 0
        %1131 = vperm.xlu0 %1130, %v1065
        %v1132 = vpop.permute.xlu0 %1131
        %1135 = vset.pattern.permute.xlu0 0
        %1136 = vperm.xlu0 %1135, %v1066
        %v1137 = vpop.permute.xlu0 %1136
        %1140 = vset.pattern.permute.xlu0 0
        %1141 = vperm.xlu0 %1140, %v1067
        %v1142 = vpop.permute.xlu0 %1141
        %1145 = vset.pattern.permute.xlu0 0
        %1146 = vperm.xlu0 %1145, %v1068
        %v1147 = vpop.permute.xlu0 %1146
        %1150 = vset.pattern.permute.xlu0 0
        %1151 = vperm.xlu0 %1150, %v1069
        %v1152 = vpop.permute.xlu0 %1151
        %1155 = vset.pattern.permute.xlu0 0
        %1156 = vperm.xlu0 %1155, %v1070
        %v1157 = vpop.permute.xlu0 %1156
        %1160 = vset.pattern.permute.xlu0 0
        %1161 = vperm.xlu0 %1160, %v1071
        %v1162 = vpop.permute.xlu0 %1161
        %1165 = vset.pattern.permute.xlu0 0
        %1166 = vperm.xlu0 %1165, %v1072
        %v1167 = vpop.permute.xlu0 %1166
        %1170 = vset.pattern.permute.xlu0 0
        %1171 = vperm.xlu0 %1170, %v1073
        %v1172 = vpop.permute.xlu0 %1171
        %1175 = vset.pattern.permute.xlu0 0
        %1176 = vperm.xlu0 %1175, %v1074
        %v1177 = vpop.permute.xlu0 %1176
        %1180 = vset.pattern.permute.xlu0 0
        %1181 = vperm.xlu0 %1180, %v1075
        %v1182 = vpop.permute.xlu0 %1181
        %1185 = vset.pattern.permute.xlu0 0
        %1186 = vperm.xlu0 %1185, %v1076
        %v1187 = vpop.permute.xlu0 %1186
        %1190 = vset.pattern.permute.xlu0 0
        %1191 = vperm.xlu0 %1190, %v1077
        %v1192 = vpop.permute.xlu0 %1191
        %1195 = vset.pattern.permute.xlu0 0
        %1196 = vperm.xlu0 %1195, %v1078
        %v1197 = vpop.permute.xlu0 %1196
        %1200 = vset.pattern.permute.xlu0 0
        %1201 = vperm.xlu0 %1200, %v1079
        %v1202 = vpop.permute.xlu0 %1201
        %1205 = vset.pattern.permute.xlu0 0
        %1206 = vperm.xlu0 %1205, %v1080
        %v1207 = vpop.permute.xlu0 %1206
        %1210 = vset.pattern.permute.xlu0 0
        %1211 = vperm.xlu0 %1210, %v1081
        %v1212 = vpop.permute.xlu0 %1211
        %1215 = vset.pattern.permute.xlu0 0
        %1216 = vperm.xlu0 %1215, %v1082
        %v1217 = vpop.permute.xlu0 %1216
        %1220 = vset.pattern.permute.xlu0 0
        %1221 = vperm.xlu0 %1220, %v1083
        %v1222 = vpop.permute.xlu0 %1221
        %1225 = vset.pattern.permute.xlu0 0
        %1226 = vperm.xlu0 %1225, %v1084
        %v1227 = vpop.permute.xlu0 %1226
        %1230 = vset.pattern.permute.xlu0 0
        %1231 = vperm.xlu0 %1230, %v1085
        %v1232 = vpop.permute.xlu0 %1231
        %1235 = vset.pattern.permute.xlu0 0
        %1236 = vperm.xlu0 %1235, %v1086
        %v1237 = vpop.permute.xlu0 %1236
        %1240 = vset.pattern.permute.xlu0 0
        %1241 = vperm.xlu0 %1240, %v1087
        %v1242 = vpop.permute.xlu0 %1241
        %1245 = vset.pattern.permute.xlu0 0
        %1246 = vperm.xlu0 %1245, %v1088
        %v1247 = vpop.permute.xlu0 %1246
        %v1250 = vperm.slane %v291, 0
        %v1252 = vmul.f32 %v1092, %v1250
        %v1253 = vmul.f32 %v1097, %v1250
        %v1254 = vmul.f32 %v1102, %v1250
        %v1255 = vmul.f32 %v1107, %v1250
        %v1256 = vmul.f32 %v1112, %v1250
        %v1257 = vmul.f32 %v1117, %v1250
        %v1258 = vmul.f32 %v1122, %v1250
        %v1259 = vmul.f32 %v1127, %v1250
        %v1260 = vmul.f32 %v1132, %v1250
        %v1261 = vmul.f32 %v1137, %v1250
        %v1262 = vmul.f32 %v1142, %v1250
        %v1263 = vmul.f32 %v1147, %v1250
        %v1264 = vmul.f32 %v1152, %v1250
        %v1265 = vmul.f32 %v1157, %v1250
        %v1266 = vmul.f32 %v1162, %v1250
        %v1267 = vmul.f32 %v1167, %v1250
        %v1268 = vmul.f32 %v1172, %v1250
        %v1269 = vmul.f32 %v1177, %v1250
        %v1270 = vmul.f32 %v1182, %v1250
        %v1271 = vmul.f32 %v1187, %v1250
        %v1272 = vmul.f32 %v1192, %v1250
        %v1273 = vmul.f32 %v1197, %v1250
        %v1274 = vmul.f32 %v1202, %v1250
        %v1275 = vmul.f32 %v1207, %v1250
        %v1276 = vmul.f32 %v1212, %v1250
        %v1277 = vmul.f32 %v1217, %v1250
        %v1278 = vmul.f32 %v1222, %v1250
        %v1279 = vmul.f32 %v1227, %v1250
        %v1280 = vmul.f32 %v1232, %v1250
        %v1281 = vmul.f32 %v1237, %v1250
        %v1282 = vmul.f32 %v1242, %v1250
        %v1283 = vmul.f32 %v1247, %v1250
        %v1284 = vadd.f32 %v1023, %v1252
        %v1285 = vadd.f32 %v1024, %v1253
        %v1286 = vadd.f32 %v1025, %v1254
        %v1287 = vadd.f32 %v1026, %v1255
        %v1288 = vadd.f32 %v1027, %v1256
        %v1289 = vadd.f32 %v1028, %v1257
        %v1290 = vadd.f32 %v1029, %v1258
        %v1291 = vadd.f32 %v1030, %v1259
        %v1292 = vadd.f32 %v1031, %v1260
        %v1293 = vadd.f32 %v1032, %v1261
        %v1294 = vadd.f32 %v1033, %v1262
        %v1295 = vadd.f32 %v1034, %v1263
        %v1296 = vadd.f32 %v1035, %v1264
        %v1297 = vadd.f32 %v1036, %v1265
        %v1298 = vadd.f32 %v1037, %v1266
        %v1299 = vadd.f32 %v1038, %v1267
        %v1300 = vadd.f32 %v1039, %v1268
        %v1301 = vadd.f32 %v1040, %v1269
        %v1302 = vadd.f32 %v1041, %v1270
        %v1303 = vadd.f32 %v1042, %v1271
        %v1304 = vadd.f32 %v1043, %v1272
        %v1305 = vadd.f32 %v1044, %v1273
        %v1306 = vadd.f32 %v1045, %v1274
        %v1307 = vadd.f32 %v1046, %v1275
        %v1308 = vadd.f32 %v1047, %v1276
        %v1309 = vadd.f32 %v1048, %v1277
        %v1310 = vadd.f32 %v1049, %v1278
        %v1311 = vadd.f32 %v1050, %v1279
        %v1312 = vadd.f32 %v1051, %v1280
        %v1313 = vadd.f32 %v1052, %v1281
        %v1314 = vadd.f32 %v1053, %v1282
        %v1315 = vadd.f32 %v1054, %v1283
        %v1316 = vld [vmem:[%s1056 + $0x1] sm:$0xff]
        %v1317 = vld [vmem:[%s1056 + $0x9] sm:$0xff]
        %v1318 = vld [vmem:[%s1056 + $0x19] sm:$0xff]
        %v1319 = vld [vmem:[%s1056 + $0x21] sm:$0xff]
        %v1320 = vld [vmem:[%s1056 + $0x31] sm:$0xff]
        %v1321 = vld [vmem:[%s1056 + $0x39] sm:$0xff]
        %v1322 = vld [vmem:[%s1056 + $0x49] sm:$0xff]
        %v1323 = vld [vmem:[%s1056 + $0x51] sm:$0xff]
        %v1324 = vld [vmem:[%s1056 + $0x61] sm:$0xff]
        %v1325 = vld [vmem:[%s1056 + $0x69] sm:$0xff]
        %v1326 = vld [vmem:[%s1056 + $0x79] sm:$0xff]
        %v1327 = vld [vmem:[%s1056 + $0x81] sm:$0xff]
        %v1328 = vld [vmem:[%s1056 + $0x91] sm:$0xff]
        %v1329 = vld [vmem:[%s1056 + $0x99] sm:$0xff]
        %v1330 = vld [vmem:[%s1056 + $0xa9] sm:$0xff]
        %v1331 = vld [vmem:[%s1056 + $0xb1] sm:$0xff]
        %v1332 = vld [vmem:[%s1056 + $0xc1] sm:$0xff]
        %v1333 = vld [vmem:[%s1056 + $0xc9] sm:$0xff]
        %v1334 = vld [vmem:[%s1056 + $0xd9] sm:$0xff]
        %v1335 = vld [vmem:[%s1056 + $0xe1] sm:$0xff]
        %v1336 = vld [vmem:[%s1056 + $0xf1] sm:$0xff]
        %v1337 = vld [vmem:[%s1056 + $0xf9] sm:$0xff]
        %v1338 = vld [vmem:[%s1056 + $0x109] sm:$0xff]
        %v1339 = vld [vmem:[%s1056 + $0x111] sm:$0xff]
        %v1340 = vld [vmem:[%s1056 + $0x121] sm:$0xff]
        %v1341 = vld [vmem:[%s1056 + $0x129] sm:$0xff]
        %v1342 = vld [vmem:[%s1056 + $0x139] sm:$0xff]
        %v1343 = vld [vmem:[%s1056 + $0x141] sm:$0xff]
        %v1344 = vld [vmem:[%s1056 + $0x151] sm:$0xff]
        %v1345 = vld [vmem:[%s1056 + $0x159] sm:$0xff]
        %v1346 = vld [vmem:[%s1056 + $0x169] sm:$0xff]
        %v1347 = vld [vmem:[%s1056 + $0x171] sm:$0xff]
        %1349 = vset.pattern.permute.xlu0 0
        %1350 = vperm.xlu0 %1349, %v1316
        %v1351 = vpop.permute.xlu0 %1350
        %1354 = vset.pattern.permute.xlu0 0
        %1355 = vperm.xlu0 %1354, %v1317
        %v1356 = vpop.permute.xlu0 %1355
        %1359 = vset.pattern.permute.xlu0 0
        %1360 = vperm.xlu0 %1359, %v1318
        %v1361 = vpop.permute.xlu0 %1360
        %1364 = vset.pattern.permute.xlu0 0
        %1365 = vperm.xlu0 %1364, %v1319
        %v1366 = vpop.permute.xlu0 %1365
        %1369 = vset.pattern.permute.xlu0 0
        %1370 = vperm.xlu0 %1369, %v1320
        %v1371 = vpop.permute.xlu0 %1370
        %1374 = vset.pattern.permute.xlu0 0
        %1375 = vperm.xlu0 %1374, %v1321
        %v1376 = vpop.permute.xlu0 %1375
        %1379 = vset.pattern.permute.xlu0 0
        %1380 = vperm.xlu0 %1379, %v1322
        %v1381 = vpop.permute.xlu0 %1380
        %1384 = vset.pattern.permute.xlu0 0
        %1385 = vperm.xlu0 %1384, %v1323
        %v1386 = vpop.permute.xlu0 %1385
        %1389 = vset.pattern.permute.xlu0 0
        %1390 = vperm.xlu0 %1389, %v1324
        %v1391 = vpop.permute.xlu0 %1390
        %1394 = vset.pattern.permute.xlu0 0
        %1395 = vperm.xlu0 %1394, %v1325
        %v1396 = vpop.permute.xlu0 %1395
        %1399 = vset.pattern.permute.xlu0 0
        %1400 = vperm.xlu0 %1399, %v1326
        %v1401 = vpop.permute.xlu0 %1400
        %1404 = vset.pattern.permute.xlu0 0
        %1405 = vperm.xlu0 %1404, %v1327
        %v1406 = vpop.permute.xlu0 %1405
        %1409 = vset.pattern.permute.xlu0 0
        %1410 = vperm.xlu0 %1409, %v1328
        %v1411 = vpop.permute.xlu0 %1410
        %1414 = vset.pattern.permute.xlu0 0
        %1415 = vperm.xlu0 %1414, %v1329
        %v1416 = vpop.permute.xlu0 %1415
        %1419 = vset.pattern.permute.xlu0 0
        %1420 = vperm.xlu0 %1419, %v1330
        %v1421 = vpop.permute.xlu0 %1420
        %1424 = vset.pattern.permute.xlu0 0
        %1425 = vperm.xlu0 %1424, %v1331
        %v1426 = vpop.permute.xlu0 %1425
        %1429 = vset.pattern.permute.xlu0 0
        %1430 = vperm.xlu0 %1429, %v1332
        %v1431 = vpop.permute.xlu0 %1430
        %1434 = vset.pattern.permute.xlu0 0
        %1435 = vperm.xlu0 %1434, %v1333
        %v1436 = vpop.permute.xlu0 %1435
        %1439 = vset.pattern.permute.xlu0 0
        %1440 = vperm.xlu0 %1439, %v1334
        %v1441 = vpop.permute.xlu0 %1440
        %1444 = vset.pattern.permute.xlu0 0
        %1445 = vperm.xlu0 %1444, %v1335
        %v1446 = vpop.permute.xlu0 %1445
        %1449 = vset.pattern.permute.xlu0 0
        %1450 = vperm.xlu0 %1449, %v1336
        %v1451 = vpop.permute.xlu0 %1450
        %1454 = vset.pattern.permute.xlu0 0
        %1455 = vperm.xlu0 %1454, %v1337
        %v1456 = vpop.permute.xlu0 %1455
        %1459 = vset.pattern.permute.xlu0 0
        %1460 = vperm.xlu0 %1459, %v1338
        %v1461 = vpop.permute.xlu0 %1460
        %1464 = vset.pattern.permute.xlu0 0
        %1465 = vperm.xlu0 %1464, %v1339
        %v1466 = vpop.permute.xlu0 %1465
        %1469 = vset.pattern.permute.xlu0 0
        %1470 = vperm.xlu0 %1469, %v1340
        %v1471 = vpop.permute.xlu0 %1470
        %1474 = vset.pattern.permute.xlu0 0
        %1475 = vperm.xlu0 %1474, %v1341
        %v1476 = vpop.permute.xlu0 %1475
        %1479 = vset.pattern.permute.xlu0 0
        %1480 = vperm.xlu0 %1479, %v1342
        %v1481 = vpop.permute.xlu0 %1480
        %1484 = vset.pattern.permute.xlu0 0
        %1485 = vperm.xlu0 %1484, %v1343
        %v1486 = vpop.permute.xlu0 %1485
        %1489 = vset.pattern.permute.xlu0 0
        %1490 = vperm.xlu0 %1489, %v1344
        %v1491 = vpop.permute.xlu0 %1490
        %1494 = vset.pattern.permute.xlu0 0
        %1495 = vperm.xlu0 %1494, %v1345
        %v1496 = vpop.permute.xlu0 %1495
        %1499 = vset.pattern.permute.xlu0 0
        %1500 = vperm.xlu0 %1499, %v1346
        %v1501 = vpop.permute.xlu0 %1500
        %1504 = vset.pattern.permute.xlu0 0
        %1505 = vperm.xlu0 %1504, %v1347
        %v1506 = vpop.permute.xlu0 %1505
        %v1509 = vperm.slane %v293, 0
        %v1511 = vmul.f32 %v1351, %v1509
        %v1512 = vmul.f32 %v1356, %v1509
        %v1513 = vmul.f32 %v1361, %v1509
        %v1514 = vmul.f32 %v1366, %v1509
        %v1515 = vmul.f32 %v1371, %v1509
        %v1516 = vmul.f32 %v1376, %v1509
        %v1517 = vmul.f32 %v1381, %v1509
        %v1518 = vmul.f32 %v1386, %v1509
        %v1519 = vmul.f32 %v1391, %v1509
        %v1520 = vmul.f32 %v1396, %v1509
        %v1521 = vmul.f32 %v1401, %v1509
        %v1522 = vmul.f32 %v1406, %v1509
        %v1523 = vmul.f32 %v1411, %v1509
        %v1524 = vmul.f32 %v1416, %v1509
        %v1525 = vmul.f32 %v1421, %v1509
        %v1526 = vmul.f32 %v1426, %v1509
        %v1527 = vmul.f32 %v1431, %v1509
        %v1528 = vmul.f32 %v1436, %v1509
        %v1529 = vmul.f32 %v1441, %v1509
        %v1530 = vmul.f32 %v1446, %v1509
        %v1531 = vmul.f32 %v1451, %v1509
        %v1532 = vmul.f32 %v1456, %v1509
        %v1533 = vmul.f32 %v1461, %v1509
        %v1534 = vmul.f32 %v1466, %v1509
        %v1535 = vmul.f32 %v1471, %v1509
        %v1536 = vmul.f32 %v1476, %v1509
        %v1537 = vmul.f32 %v1481, %v1509
        %v1538 = vmul.f32 %v1486, %v1509
        %v1539 = vmul.f32 %v1491, %v1509
        %v1540 = vmul.f32 %v1496, %v1509
        %v1541 = vmul.f32 %v1501, %v1509
        %v1542 = vmul.f32 %v1506, %v1509
        %v1543 = vadd.f32 %v1284, %v1511
        %v1544 = vadd.f32 %v1285, %v1512
        %v1545 = vadd.f32 %v1286, %v1513
        %v1546 = vadd.f32 %v1287, %v1514
        %v1547 = vadd.f32 %v1288, %v1515
        %v1548 = vadd.f32 %v1289, %v1516
        %v1549 = vadd.f32 %v1290, %v1517
        %v1550 = vadd.f32 %v1291, %v1518
        %v1551 = vadd.f32 %v1292, %v1519
        %v1552 = vadd.f32 %v1293, %v1520
        %v1553 = vadd.f32 %v1294, %v1521
        %v1554 = vadd.f32 %v1295, %v1522
        %v1555 = vadd.f32 %v1296, %v1523
        %v1556 = vadd.f32 %v1297, %v1524
        %v1557 = vadd.f32 %v1298, %v1525
        %v1558 = vadd.f32 %v1299, %v1526
        %v1559 = vadd.f32 %v1300, %v1527
        %v1560 = vadd.f32 %v1301, %v1528
        %v1561 = vadd.f32 %v1302, %v1529
        %v1562 = vadd.f32 %v1303, %v1530
        %v1563 = vadd.f32 %v1304, %v1531
        %v1564 = vadd.f32 %v1305, %v1532
        %v1565 = vadd.f32 %v1306, %v1533
        %v1566 = vadd.f32 %v1307, %v1534
        %v1567 = vadd.f32 %v1308, %v1535
        %v1568 = vadd.f32 %v1309, %v1536
        %v1569 = vadd.f32 %v1310, %v1537
        %v1570 = vadd.f32 %v1311, %v1538
        %v1571 = vadd.f32 %v1312, %v1539
        %v1572 = vadd.f32 %v1313, %v1540
        %v1573 = vadd.f32 %v1314, %v1541
        %v1574 = vadd.f32 %v1315, %v1542
        %v1575 = vld [vmem:[%s1056 + $0x2] sm:$0xff]
        %v1576 = vld [vmem:[%s1056 + $0xa] sm:$0xff]
        %v1577 = vld [vmem:[%s1056 + $0x1a] sm:$0xff]
        %v1578 = vld [vmem:[%s1056 + $0x22] sm:$0xff]
        %v1579 = vld [vmem:[%s1056 + $0x32] sm:$0xff]
        %v1580 = vld [vmem:[%s1056 + $0x3a] sm:$0xff]
        %v1581 = vld [vmem:[%s1056 + $0x4a] sm:$0xff]
        %v1582 = vld [vmem:[%s1056 + $0x52] sm:$0xff]
        %v1583 = vld [vmem:[%s1056 + $0x62] sm:$0xff]
        %v1584 = vld [vmem:[%s1056 + $0x6a] sm:$0xff]
        %v1585 = vld [vmem:[%s1056 + $0x7a] sm:$0xff]
        %v1586 = vld [vmem:[%s1056 + $0x82] sm:$0xff]
        %v1587 = vld [vmem:[%s1056 + $0x92] sm:$0xff]
        %v1588 = vld [vmem:[%s1056 + $0x9a] sm:$0xff]
        %v1589 = vld [vmem:[%s1056 + $0xaa] sm:$0xff]
        %v1590 = vld [vmem:[%s1056 + $0xb2] sm:$0xff]
        %v1591 = vld [vmem:[%s1056 + $0xc2] sm:$0xff]
        %v1592 = vld [vmem:[%s1056 + $0xca] sm:$0xff]
        %v1593 = vld [vmem:[%s1056 + $0xda] sm:$0xff]
        %v1594 = vld [vmem:[%s1056 + $0xe2] sm:$0xff]
        %v1595 = vld [vmem:[%s1056 + $0xf2] sm:$0xff]
        %v1596 = vld [vmem:[%s1056 + $0xfa] sm:$0xff]
        %v1597 = vld [vmem:[%s1056 + $0x10a] sm:$0xff]
        %v1598 = vld [vmem:[%s1056 + $0x112] sm:$0xff]
        %v1599 = vld [vmem:[%s1056 + $0x122] sm:$0xff]
        %v1600 = vld [vmem:[%s1056 + $0x12a] sm:$0xff]
        %v1601 = vld [vmem:[%s1056 + $0x13a] sm:$0xff]
        %v1602 = vld [vmem:[%s1056 + $0x142] sm:$0xff]
        %v1603 = vld [vmem:[%s1056 + $0x152] sm:$0xff]
        %v1604 = vld [vmem:[%s1056 + $0x15a] sm:$0xff]
        %v1605 = vld [vmem:[%s1056 + $0x16a] sm:$0xff]
        %v1606 = vld [vmem:[%s1056 + $0x172] sm:$0xff]
        %1608 = vset.pattern.permute.xlu0 0
        %1609 = vperm.xlu0 %1608, %v1575
        %v1610 = vpop.permute.xlu0 %1609
        %1613 = vset.pattern.permute.xlu0 0
        %1614 = vperm.xlu0 %1613, %v1576
        %v1615 = vpop.permute.xlu0 %1614
        %1618 = vset.pattern.permute.xlu0 0
        %1619 = vperm.xlu0 %1618, %v1577
        %v1620 = vpop.permute.xlu0 %1619
        %1623 = vset.pattern.permute.xlu0 0
        %1624 = vperm.xlu0 %1623, %v1578
        %v1625 = vpop.permute.xlu0 %1624
        %1628 = vset.pattern.permute.xlu0 0
        %1629 = vperm.xlu0 %1628, %v1579
        %v1630 = vpop.permute.xlu0 %1629
        %1633 = vset.pattern.permute.xlu0 0
        %1634 = vperm.xlu0 %1633, %v1580
        %v1635 = vpop.permute.xlu0 %1634
        %1638 = vset.pattern.permute.xlu0 0
        %1639 = vperm.xlu0 %1638, %v1581
        %v1640 = vpop.permute.xlu0 %1639
        %1643 = vset.pattern.permute.xlu0 0
        %1644 = vperm.xlu0 %1643, %v1582
        %v1645 = vpop.permute.xlu0 %1644
        %1648 = vset.pattern.permute.xlu0 0
        %1649 = vperm.xlu0 %1648, %v1583
        %v1650 = vpop.permute.xlu0 %1649
        %1653 = vset.pattern.permute.xlu0 0
        %1654 = vperm.xlu0 %1653, %v1584
        %v1655 = vpop.permute.xlu0 %1654
        %1658 = vset.pattern.permute.xlu0 0
        %1659 = vperm.xlu0 %1658, %v1585
        %v1660 = vpop.permute.xlu0 %1659
        %1663 = vset.pattern.permute.xlu0 0
        %1664 = vperm.xlu0 %1663, %v1586
        %v1665 = vpop.permute.xlu0 %1664
        %1668 = vset.pattern.permute.xlu0 0
        %1669 = vperm.xlu0 %1668, %v1587
        %v1670 = vpop.permute.xlu0 %1669
        %1673 = vset.pattern.permute.xlu0 0
        %1674 = vperm.xlu0 %1673, %v1588
        %v1675 = vpop.permute.xlu0 %1674
        %1678 = vset.pattern.permute.xlu0 0
        %1679 = vperm.xlu0 %1678, %v1589
        %v1680 = vpop.permute.xlu0 %1679
        %1683 = vset.pattern.permute.xlu0 0
        %1684 = vperm.xlu0 %1683, %v1590
        %v1685 = vpop.permute.xlu0 %1684
        %1688 = vset.pattern.permute.xlu0 0
        %1689 = vperm.xlu0 %1688, %v1591
        %v1690 = vpop.permute.xlu0 %1689
        %1693 = vset.pattern.permute.xlu0 0
        %1694 = vperm.xlu0 %1693, %v1592
        %v1695 = vpop.permute.xlu0 %1694
        %1698 = vset.pattern.permute.xlu0 0
        %1699 = vperm.xlu0 %1698, %v1593
        %v1700 = vpop.permute.xlu0 %1699
        %1703 = vset.pattern.permute.xlu0 0
        %1704 = vperm.xlu0 %1703, %v1594
        %v1705 = vpop.permute.xlu0 %1704
        %1708 = vset.pattern.permute.xlu0 0
        %1709 = vperm.xlu0 %1708, %v1595
        %v1710 = vpop.permute.xlu0 %1709
        %1713 = vset.pattern.permute.xlu0 0
        %1714 = vperm.xlu0 %1713, %v1596
        %v1715 = vpop.permute.xlu0 %1714
        %1718 = vset.pattern.permute.xlu0 0
        %1719 = vperm.xlu0 %1718, %v1597
        %v1720 = vpop.permute.xlu0 %1719
        %1723 = vset.pattern.permute.xlu0 0
        %1724 = vperm.xlu0 %1723, %v1598
        %v1725 = vpop.permute.xlu0 %1724
        %1728 = vset.pattern.permute.xlu0 0
        %1729 = vperm.xlu0 %1728, %v1599
        %v1730 = vpop.permute.xlu0 %1729
        %1733 = vset.pattern.permute.xlu0 0
        %1734 = vperm.xlu0 %1733, %v1600
        %v1735 = vpop.permute.xlu0 %1734
        %1738 = vset.pattern.permute.xlu0 0
        %1739 = vperm.xlu0 %1738, %v1601
        %v1740 = vpop.permute.xlu0 %1739
        %1743 = vset.pattern.permute.xlu0 0
        %1744 = vperm.xlu0 %1743, %v1602
        %v1745 = vpop.permute.xlu0 %1744
        %1748 = vset.pattern.permute.xlu0 0
        %1749 = vperm.xlu0 %1748, %v1603
        %v1750 = vpop.permute.xlu0 %1749
        %1753 = vset.pattern.permute.xlu0 0
        %1754 = vperm.xlu0 %1753, %v1604
        %v1755 = vpop.permute.xlu0 %1754
        %1758 = vset.pattern.permute.xlu0 0
        %1759 = vperm.xlu0 %1758, %v1605
        %v1760 = vpop.permute.xlu0 %1759
        %1763 = vset.pattern.permute.xlu0 0
        %1764 = vperm.xlu0 %1763, %v1606
        %v1765 = vpop.permute.xlu0 %1764
        %v1768 = vperm.slane %v295, 0
        %v1770 = vmul.f32 %v1610, %v1768
        %v1771 = vmul.f32 %v1615, %v1768
        %v1772 = vmul.f32 %v1620, %v1768
        %v1773 = vmul.f32 %v1625, %v1768
        %v1774 = vmul.f32 %v1630, %v1768
        %v1775 = vmul.f32 %v1635, %v1768
        %v1776 = vmul.f32 %v1640, %v1768
        %v1777 = vmul.f32 %v1645, %v1768
        %v1778 = vmul.f32 %v1650, %v1768
        %v1779 = vmul.f32 %v1655, %v1768
        %v1780 = vmul.f32 %v1660, %v1768
        %v1781 = vmul.f32 %v1665, %v1768
        %v1782 = vmul.f32 %v1670, %v1768
        %v1783 = vmul.f32 %v1675, %v1768
        %v1784 = vmul.f32 %v1680, %v1768
        %v1785 = vmul.f32 %v1685, %v1768
        %v1786 = vmul.f32 %v1690, %v1768
        %v1787 = vmul.f32 %v1695, %v1768
        %v1788 = vmul.f32 %v1700, %v1768
        %v1789 = vmul.f32 %v1705, %v1768
        %v1790 = vmul.f32 %v1710, %v1768
        %v1791 = vmul.f32 %v1715, %v1768
        %v1792 = vmul.f32 %v1720, %v1768
        %v1793 = vmul.f32 %v1725, %v1768
        %v1794 = vmul.f32 %v1730, %v1768
        %v1795 = vmul.f32 %v1735, %v1768
        %v1796 = vmul.f32 %v1740, %v1768
        %v1797 = vmul.f32 %v1745, %v1768
        %v1798 = vmul.f32 %v1750, %v1768
        %v1799 = vmul.f32 %v1755, %v1768
        %v1800 = vmul.f32 %v1760, %v1768
        %v1801 = vmul.f32 %v1765, %v1768
        %v1802 = vadd.f32 %v1543, %v1770
        %v1803 = vadd.f32 %v1544, %v1771
        %v1804 = vadd.f32 %v1545, %v1772
        %v1805 = vadd.f32 %v1546, %v1773
        %v1806 = vadd.f32 %v1547, %v1774
        %v1807 = vadd.f32 %v1548, %v1775
        %v1808 = vadd.f32 %v1549, %v1776
        %v1809 = vadd.f32 %v1550, %v1777
        %v1810 = vadd.f32 %v1551, %v1778
        %v1811 = vadd.f32 %v1552, %v1779
        %v1812 = vadd.f32 %v1553, %v1780
        %v1813 = vadd.f32 %v1554, %v1781
        %v1814 = vadd.f32 %v1555, %v1782
        %v1815 = vadd.f32 %v1556, %v1783
        %v1816 = vadd.f32 %v1557, %v1784
        %v1817 = vadd.f32 %v1558, %v1785
        %v1818 = vadd.f32 %v1559, %v1786
        %v1819 = vadd.f32 %v1560, %v1787
        %v1820 = vadd.f32 %v1561, %v1788
        %v1821 = vadd.f32 %v1562, %v1789
        %v1822 = vadd.f32 %v1563, %v1790
        %v1823 = vadd.f32 %v1564, %v1791
        %v1824 = vadd.f32 %v1565, %v1792
        %v1825 = vadd.f32 %v1566, %v1793
        %v1826 = vadd.f32 %v1567, %v1794
        %v1827 = vadd.f32 %v1568, %v1795
        %v1828 = vadd.f32 %v1569, %v1796
        %v1829 = vadd.f32 %v1570, %v1797
        %v1830 = vadd.f32 %v1571, %v1798
        %v1831 = vadd.f32 %v1572, %v1799
        %v1832 = vadd.f32 %v1573, %v1800
        %v1833 = vadd.f32 %v1574, %v1801
        %s1834 = sadd.s32 48, %s308
        %s1835 = scalar_lea.vmem %s276, %s1834
        %v1836 = vld [vmem:[%s1835] sm:$0xff]
        %v1837 = vld [vmem:[%s1835 + $0x8] sm:$0xff]
        %v1838 = vld [vmem:[%s1835 + $0x18] sm:$0xff]
        %v1839 = vld [vmem:[%s1835 + $0x20] sm:$0xff]
        %v1840 = vld [vmem:[%s1835 + $0x30] sm:$0xff]
        %v1841 = vld [vmem:[%s1835 + $0x38] sm:$0xff]
        %v1842 = vld [vmem:[%s1835 + $0x48] sm:$0xff]
        %v1843 = vld [vmem:[%s1835 + $0x50] sm:$0xff]
        %v1844 = vld [vmem:[%s1835 + $0x60] sm:$0xff]
        %v1845 = vld [vmem:[%s1835 + $0x68] sm:$0xff]
        %v1846 = vld [vmem:[%s1835 + $0x78] sm:$0xff]
        %v1847 = vld [vmem:[%s1835 + $0x80] sm:$0xff]
        %v1848 = vld [vmem:[%s1835 + $0x90] sm:$0xff]
        %v1849 = vld [vmem:[%s1835 + $0x98] sm:$0xff]
        %v1850 = vld [vmem:[%s1835 + $0xa8] sm:$0xff]
        %v1851 = vld [vmem:[%s1835 + $0xb0] sm:$0xff]
        %v1852 = vld [vmem:[%s1835 + $0xc0] sm:$0xff]
        %v1853 = vld [vmem:[%s1835 + $0xc8] sm:$0xff]
        %v1854 = vld [vmem:[%s1835 + $0xd8] sm:$0xff]
        %v1855 = vld [vmem:[%s1835 + $0xe0] sm:$0xff]
        %v1856 = vld [vmem:[%s1835 + $0xf0] sm:$0xff]
        %v1857 = vld [vmem:[%s1835 + $0xf8] sm:$0xff]
        %v1858 = vld [vmem:[%s1835 + $0x108] sm:$0xff]
        %v1859 = vld [vmem:[%s1835 + $0x110] sm:$0xff]
        %v1860 = vld [vmem:[%s1835 + $0x120] sm:$0xff]
        %v1861 = vld [vmem:[%s1835 + $0x128] sm:$0xff]
        %v1862 = vld [vmem:[%s1835 + $0x138] sm:$0xff]
        %v1863 = vld [vmem:[%s1835 + $0x140] sm:$0xff]
        %v1864 = vld [vmem:[%s1835 + $0x150] sm:$0xff]
        %v1865 = vld [vmem:[%s1835 + $0x158] sm:$0xff]
        %v1866 = vld [vmem:[%s1835 + $0x168] sm:$0xff]
        %v1867 = vld [vmem:[%s1835 + $0x170] sm:$0xff]
        %1869 = vset.pattern.permute.xlu0 0
        %1870 = vperm.xlu0 %1869, %v1836
        %v1871 = vpop.permute.xlu0 %1870
        %1874 = vset.pattern.permute.xlu0 0
        %1875 = vperm.xlu0 %1874, %v1837
        %v1876 = vpop.permute.xlu0 %1875
        %1879 = vset.pattern.permute.xlu0 0
        %1880 = vperm.xlu0 %1879, %v1838
        %v1881 = vpop.permute.xlu0 %1880
        %1884 = vset.pattern.permute.xlu0 0
        %1885 = vperm.xlu0 %1884, %v1839
        %v1886 = vpop.permute.xlu0 %1885
        %1889 = vset.pattern.permute.xlu0 0
        %1890 = vperm.xlu0 %1889, %v1840
        %v1891 = vpop.permute.xlu0 %1890
        %1894 = vset.pattern.permute.xlu0 0
        %1895 = vperm.xlu0 %1894, %v1841
        %v1896 = vpop.permute.xlu0 %1895
        %1899 = vset.pattern.permute.xlu0 0
        %1900 = vperm.xlu0 %1899, %v1842
        %v1901 = vpop.permute.xlu0 %1900
        %1904 = vset.pattern.permute.xlu0 0
        %1905 = vperm.xlu0 %1904, %v1843
        %v1906 = vpop.permute.xlu0 %1905
        %1909 = vset.pattern.permute.xlu0 0
        %1910 = vperm.xlu0 %1909, %v1844
        %v1911 = vpop.permute.xlu0 %1910
        %1914 = vset.pattern.permute.xlu0 0
        %1915 = vperm.xlu0 %1914, %v1845
        %v1916 = vpop.permute.xlu0 %1915
        %1919 = vset.pattern.permute.xlu0 0
        %1920 = vperm.xlu0 %1919, %v1846
        %v1921 = vpop.permute.xlu0 %1920
        %1924 = vset.pattern.permute.xlu0 0
        %1925 = vperm.xlu0 %1924, %v1847
        %v1926 = vpop.permute.xlu0 %1925
        %1929 = vset.pattern.permute.xlu0 0
        %1930 = vperm.xlu0 %1929, %v1848
        %v1931 = vpop.permute.xlu0 %1930
        %1934 = vset.pattern.permute.xlu0 0
        %1935 = vperm.xlu0 %1934, %v1849
        %v1936 = vpop.permute.xlu0 %1935
        %1939 = vset.pattern.permute.xlu0 0
        %1940 = vperm.xlu0 %1939, %v1850
        %v1941 = vpop.permute.xlu0 %1940
        %1944 = vset.pattern.permute.xlu0 0
        %1945 = vperm.xlu0 %1944, %v1851
        %v1946 = vpop.permute.xlu0 %1945
        %1949 = vset.pattern.permute.xlu0 0
        %1950 = vperm.xlu0 %1949, %v1852
        %v1951 = vpop.permute.xlu0 %1950
        %1954 = vset.pattern.permute.xlu0 0
        %1955 = vperm.xlu0 %1954, %v1853
        %v1956 = vpop.permute.xlu0 %1955
        %1959 = vset.pattern.permute.xlu0 0
        %1960 = vperm.xlu0 %1959, %v1854
        %v1961 = vpop.permute.xlu0 %1960
        %1964 = vset.pattern.permute.xlu0 0
        %1965 = vperm.xlu0 %1964, %v1855
        %v1966 = vpop.permute.xlu0 %1965
        %1969 = vset.pattern.permute.xlu0 0
        %1970 = vperm.xlu0 %1969, %v1856
        %v1971 = vpop.permute.xlu0 %1970
        %1974 = vset.pattern.permute.xlu0 0
        %1975 = vperm.xlu0 %1974, %v1857
        %v1976 = vpop.permute.xlu0 %1975
        %1979 = vset.pattern.permute.xlu0 0
        %1980 = vperm.xlu0 %1979, %v1858
        %v1981 = vpop.permute.xlu0 %1980
        %1984 = vset.pattern.permute.xlu0 0
        %1985 = vperm.xlu0 %1984, %v1859
        %v1986 = vpop.permute.xlu0 %1985
        %1989 = vset.pattern.permute.xlu0 0
        %1990 = vperm.xlu0 %1989, %v1860
        %v1991 = vpop.permute.xlu0 %1990
        %1994 = vset.pattern.permute.xlu0 0
        %1995 = vperm.xlu0 %1994, %v1861
        %v1996 = vpop.permute.xlu0 %1995
        %1999 = vset.pattern.permute.xlu0 0
        %2000 = vperm.xlu0 %1999, %v1862
        %v2001 = vpop.permute.xlu0 %2000
        %2004 = vset.pattern.permute.xlu0 0
        %2005 = vperm.xlu0 %2004, %v1863
        %v2006 = vpop.permute.xlu0 %2005
        %2009 = vset.pattern.permute.xlu0 0
        %2010 = vperm.xlu0 %2009, %v1864
        %v2011 = vpop.permute.xlu0 %2010
        %2014 = vset.pattern.permute.xlu0 0
        %2015 = vperm.xlu0 %2014, %v1865
        %v2016 = vpop.permute.xlu0 %2015
        %2019 = vset.pattern.permute.xlu0 0
        %2020 = vperm.xlu0 %2019, %v1866
        %v2021 = vpop.permute.xlu0 %2020
        %2024 = vset.pattern.permute.xlu0 0
        %2025 = vperm.xlu0 %2024, %v1867
        %v2026 = vpop.permute.xlu0 %2025
        %v2029 = vperm.slane %v297, 0
        %v2031 = vmul.f32 %v1871, %v2029
        %v2032 = vmul.f32 %v1876, %v2029
        %v2033 = vmul.f32 %v1881, %v2029
        %v2034 = vmul.f32 %v1886, %v2029
        %v2035 = vmul.f32 %v1891, %v2029
        %v2036 = vmul.f32 %v1896, %v2029
        %v2037 = vmul.f32 %v1901, %v2029
        %v2038 = vmul.f32 %v1906, %v2029
        %v2039 = vmul.f32 %v1911, %v2029
        %v2040 = vmul.f32 %v1916, %v2029
        %v2041 = vmul.f32 %v1921, %v2029
        %v2042 = vmul.f32 %v1926, %v2029
        %v2043 = vmul.f32 %v1931, %v2029
        %v2044 = vmul.f32 %v1936, %v2029
        %v2045 = vmul.f32 %v1941, %v2029
        %v2046 = vmul.f32 %v1946, %v2029
        %v2047 = vmul.f32 %v1951, %v2029
        %v2048 = vmul.f32 %v1956, %v2029
        %v2049 = vmul.f32 %v1961, %v2029
        %v2050 = vmul.f32 %v1966, %v2029
        %v2051 = vmul.f32 %v1971, %v2029
        %v2052 = vmul.f32 %v1976, %v2029
        %v2053 = vmul.f32 %v1981, %v2029
        %v2054 = vmul.f32 %v1986, %v2029
        %v2055 = vmul.f32 %v1991, %v2029
        %v2056 = vmul.f32 %v1996, %v2029
        %v2057 = vmul.f32 %v2001, %v2029
        %v2058 = vmul.f32 %v2006, %v2029
        %v2059 = vmul.f32 %v2011, %v2029
        %v2060 = vmul.f32 %v2016, %v2029
        %v2061 = vmul.f32 %v2021, %v2029
        %v2062 = vmul.f32 %v2026, %v2029
        %v2063 = vadd.f32 %v1802, %v2031
        %v2064 = vadd.f32 %v1803, %v2032
        %v2065 = vadd.f32 %v1804, %v2033
        %v2066 = vadd.f32 %v1805, %v2034
        %v2067 = vadd.f32 %v1806, %v2035
        %v2068 = vadd.f32 %v1807, %v2036
        %v2069 = vadd.f32 %v1808, %v2037
        %v2070 = vadd.f32 %v1809, %v2038
        %v2071 = vadd.f32 %v1810, %v2039
        %v2072 = vadd.f32 %v1811, %v2040
        %v2073 = vadd.f32 %v1812, %v2041
        %v2074 = vadd.f32 %v1813, %v2042
        %v2075 = vadd.f32 %v1814, %v2043
        %v2076 = vadd.f32 %v1815, %v2044
        %v2077 = vadd.f32 %v1816, %v2045
        %v2078 = vadd.f32 %v1817, %v2046
        %v2079 = vadd.f32 %v1818, %v2047
        %v2080 = vadd.f32 %v1819, %v2048
        %v2081 = vadd.f32 %v1820, %v2049
        %v2082 = vadd.f32 %v1821, %v2050
        %v2083 = vadd.f32 %v1822, %v2051
        %v2084 = vadd.f32 %v1823, %v2052
        %v2085 = vadd.f32 %v1824, %v2053
        %v2086 = vadd.f32 %v1825, %v2054
        %v2087 = vadd.f32 %v1826, %v2055
        %v2088 = vadd.f32 %v1827, %v2056
        %v2089 = vadd.f32 %v1828, %v2057
        %v2090 = vadd.f32 %v1829, %v2058
        %v2091 = vadd.f32 %v1830, %v2059
        %v2092 = vadd.f32 %v1831, %v2060
        %v2093 = vadd.f32 %v1832, %v2061
        %v2094 = vadd.f32 %v1833, %v2062
        %v2095 = vld [vmem:[%s1835 + $0x1] sm:$0xff]
        %v2096 = vld [vmem:[%s1835 + $0x9] sm:$0xff]
        %v2097 = vld [vmem:[%s1835 + $0x19] sm:$0xff]
        %v2098 = vld [vmem:[%s1835 + $0x21] sm:$0xff]
        %v2099 = vld [vmem:[%s1835 + $0x31] sm:$0xff]
        %v2100 = vld [vmem:[%s1835 + $0x39] sm:$0xff]
        %v2101 = vld [vmem:[%s1835 + $0x49] sm:$0xff]
        %v2102 = vld [vmem:[%s1835 + $0x51] sm:$0xff]
        %v2103 = vld [vmem:[%s1835 + $0x61] sm:$0xff]
        %v2104 = vld [vmem:[%s1835 + $0x69] sm:$0xff]
        %v2105 = vld [vmem:[%s1835 + $0x79] sm:$0xff]
        %v2106 = vld [vmem:[%s1835 + $0x81] sm:$0xff]
        %v2107 = vld [vmem:[%s1835 + $0x91] sm:$0xff]
        %v2108 = vld [vmem:[%s1835 + $0x99] sm:$0xff]
        %v2109 = vld [vmem:[%s1835 + $0xa9] sm:$0xff]
        %v2110 = vld [vmem:[%s1835 + $0xb1] sm:$0xff]
        %v2111 = vld [vmem:[%s1835 + $0xc1] sm:$0xff]
        %v2112 = vld [vmem:[%s1835 + $0xc9] sm:$0xff]
        %v2113 = vld [vmem:[%s1835 + $0xd9] sm:$0xff]
        %v2114 = vld [vmem:[%s1835 + $0xe1] sm:$0xff]
        %v2115 = vld [vmem:[%s1835 + $0xf1] sm:$0xff]
        %v2116 = vld [vmem:[%s1835 + $0xf9] sm:$0xff]
        %v2117 = vld [vmem:[%s1835 + $0x109] sm:$0xff]
        %v2118 = vld [vmem:[%s1835 + $0x111] sm:$0xff]
        %v2119 = vld [vmem:[%s1835 + $0x121] sm:$0xff]
        %v2120 = vld [vmem:[%s1835 + $0x129] sm:$0xff]
        %v2121 = vld [vmem:[%s1835 + $0x139] sm:$0xff]
        %v2122 = vld [vmem:[%s1835 + $0x141] sm:$0xff]
        %v2123 = vld [vmem:[%s1835 + $0x151] sm:$0xff]
        %v2124 = vld [vmem:[%s1835 + $0x159] sm:$0xff]
        %v2125 = vld [vmem:[%s1835 + $0x169] sm:$0xff]
        %v2126 = vld [vmem:[%s1835 + $0x171] sm:$0xff]
        %2128 = vset.pattern.permute.xlu0 0
        %2129 = vperm.xlu0 %2128, %v2095
        %v2130 = vpop.permute.xlu0 %2129
        %2133 = vset.pattern.permute.xlu0 0
        %2134 = vperm.xlu0 %2133, %v2096
        %v2135 = vpop.permute.xlu0 %2134
        %2138 = vset.pattern.permute.xlu0 0
        %2139 = vperm.xlu0 %2138, %v2097
        %v2140 = vpop.permute.xlu0 %2139
        %2143 = vset.pattern.permute.xlu0 0
        %2144 = vperm.xlu0 %2143, %v2098
        %v2145 = vpop.permute.xlu0 %2144
        %2148 = vset.pattern.permute.xlu0 0
        %2149 = vperm.xlu0 %2148, %v2099
        %v2150 = vpop.permute.xlu0 %2149
        %2153 = vset.pattern.permute.xlu0 0
        %2154 = vperm.xlu0 %2153, %v2100
        %v2155 = vpop.permute.xlu0 %2154
        %2158 = vset.pattern.permute.xlu0 0
        %2159 = vperm.xlu0 %2158, %v2101
        %v2160 = vpop.permute.xlu0 %2159
        %2163 = vset.pattern.permute.xlu0 0
        %2164 = vperm.xlu0 %2163, %v2102
        %v2165 = vpop.permute.xlu0 %2164
        %2168 = vset.pattern.permute.xlu0 0
        %2169 = vperm.xlu0 %2168, %v2103
        %v2170 = vpop.permute.xlu0 %2169
        %2173 = vset.pattern.permute.xlu0 0
        %2174 = vperm.xlu0 %2173, %v2104
        %v2175 = vpop.permute.xlu0 %2174
        %2178 = vset.pattern.permute.xlu0 0
        %2179 = vperm.xlu0 %2178, %v2105
        %v2180 = vpop.permute.xlu0 %2179
        %2183 = vset.pattern.permute.xlu0 0
        %2184 = vperm.xlu0 %2183, %v2106
        %v2185 = vpop.permute.xlu0 %2184
        %2188 = vset.pattern.permute.xlu0 0
        %2189 = vperm.xlu0 %2188, %v2107
        %v2190 = vpop.permute.xlu0 %2189
        %2193 = vset.pattern.permute.xlu0 0
        %2194 = vperm.xlu0 %2193, %v2108
        %v2195 = vpop.permute.xlu0 %2194
        %2198 = vset.pattern.permute.xlu0 0
        %2199 = vperm.xlu0 %2198, %v2109
        %v2200 = vpop.permute.xlu0 %2199
        %2203 = vset.pattern.permute.xlu0 0
        %2204 = vperm.xlu0 %2203, %v2110
        %v2205 = vpop.permute.xlu0 %2204
        %2208 = vset.pattern.permute.xlu0 0
        %2209 = vperm.xlu0 %2208, %v2111
        %v2210 = vpop.permute.xlu0 %2209
        %2213 = vset.pattern.permute.xlu0 0
        %2214 = vperm.xlu0 %2213, %v2112
        %v2215 = vpop.permute.xlu0 %2214
        %2218 = vset.pattern.permute.xlu0 0
        %2219 = vperm.xlu0 %2218, %v2113
        %v2220 = vpop.permute.xlu0 %2219
        %2223 = vset.pattern.permute.xlu0 0
        %2224 = vperm.xlu0 %2223, %v2114
        %v2225 = vpop.permute.xlu0 %2224
        %2228 = vset.pattern.permute.xlu0 0
        %2229 = vperm.xlu0 %2228, %v2115
        %v2230 = vpop.permute.xlu0 %2229
        %2233 = vset.pattern.permute.xlu0 0
        %2234 = vperm.xlu0 %2233, %v2116
        %v2235 = vpop.permute.xlu0 %2234
        %2238 = vset.pattern.permute.xlu0 0
        %2239 = vperm.xlu0 %2238, %v2117
        %v2240 = vpop.permute.xlu0 %2239
        %2243 = vset.pattern.permute.xlu0 0
        %2244 = vperm.xlu0 %2243, %v2118
        %v2245 = vpop.permute.xlu0 %2244
        %2248 = vset.pattern.permute.xlu0 0
        %2249 = vperm.xlu0 %2248, %v2119
        %v2250 = vpop.permute.xlu0 %2249
        %2253 = vset.pattern.permute.xlu0 0
        %2254 = vperm.xlu0 %2253, %v2120
        %v2255 = vpop.permute.xlu0 %2254
        %2258 = vset.pattern.permute.xlu0 0
        %2259 = vperm.xlu0 %2258, %v2121
        %v2260 = vpop.permute.xlu0 %2259
        %2263 = vset.pattern.permute.xlu0 0
        %2264 = vperm.xlu0 %2263, %v2122
        %v2265 = vpop.permute.xlu0 %2264
        %2268 = vset.pattern.permute.xlu0 0
        %2269 = vperm.xlu0 %2268, %v2123
        %v2270 = vpop.permute.xlu0 %2269
        %2273 = vset.pattern.permute.xlu0 0
        %2274 = vperm.xlu0 %2273, %v2124
        %v2275 = vpop.permute.xlu0 %2274
        %2278 = vset.pattern.permute.xlu0 0
        %2279 = vperm.xlu0 %2278, %v2125
        %v2280 = vpop.permute.xlu0 %2279
        %2283 = vset.pattern.permute.xlu0 0
        %2284 = vperm.xlu0 %2283, %v2126
        %v2285 = vpop.permute.xlu0 %2284
        %v2288 = vperm.slane %v299, 0
        %v2290 = vmul.f32 %v2130, %v2288
        %v2291 = vmul.f32 %v2135, %v2288
        %v2292 = vmul.f32 %v2140, %v2288
        %v2293 = vmul.f32 %v2145, %v2288
        %v2294 = vmul.f32 %v2150, %v2288
        %v2295 = vmul.f32 %v2155, %v2288
        %v2296 = vmul.f32 %v2160, %v2288
        %v2297 = vmul.f32 %v2165, %v2288
        %v2298 = vmul.f32 %v2170, %v2288
        %v2299 = vmul.f32 %v2175, %v2288
        %v2300 = vmul.f32 %v2180, %v2288
        %v2301 = vmul.f32 %v2185, %v2288
        %v2302 = vmul.f32 %v2190, %v2288
        %v2303 = vmul.f32 %v2195, %v2288
        %v2304 = vmul.f32 %v2200, %v2288
        %v2305 = vmul.f32 %v2205, %v2288
        %v2306 = vmul.f32 %v2210, %v2288
        %v2307 = vmul.f32 %v2215, %v2288
        %v2308 = vmul.f32 %v2220, %v2288
        %v2309 = vmul.f32 %v2225, %v2288
        %v2310 = vmul.f32 %v2230, %v2288
        %v2311 = vmul.f32 %v2235, %v2288
        %v2312 = vmul.f32 %v2240, %v2288
        %v2313 = vmul.f32 %v2245, %v2288
        %v2314 = vmul.f32 %v2250, %v2288
        %v2315 = vmul.f32 %v2255, %v2288
        %v2316 = vmul.f32 %v2260, %v2288
        %v2317 = vmul.f32 %v2265, %v2288
        %v2318 = vmul.f32 %v2270, %v2288
        %v2319 = vmul.f32 %v2275, %v2288
        %v2320 = vmul.f32 %v2280, %v2288
        %v2321 = vmul.f32 %v2285, %v2288
        %v2322 = vadd.f32 %v2063, %v2290
        %v2323 = vadd.f32 %v2064, %v2291
        %v2324 = vadd.f32 %v2065, %v2292
        %v2325 = vadd.f32 %v2066, %v2293
        %v2326 = vadd.f32 %v2067, %v2294
        %v2327 = vadd.f32 %v2068, %v2295
        %v2328 = vadd.f32 %v2069, %v2296
        %v2329 = vadd.f32 %v2070, %v2297
        %v2330 = vadd.f32 %v2071, %v2298
        %v2331 = vadd.f32 %v2072, %v2299
        %v2332 = vadd.f32 %v2073, %v2300
        %v2333 = vadd.f32 %v2074, %v2301
        %v2334 = vadd.f32 %v2075, %v2302
        %v2335 = vadd.f32 %v2076, %v2303
        %v2336 = vadd.f32 %v2077, %v2304
        %v2337 = vadd.f32 %v2078, %v2305
        %v2338 = vadd.f32 %v2079, %v2306
        %v2339 = vadd.f32 %v2080, %v2307
        %v2340 = vadd.f32 %v2081, %v2308
        %v2341 = vadd.f32 %v2082, %v2309
        %v2342 = vadd.f32 %v2083, %v2310
        %v2343 = vadd.f32 %v2084, %v2311
        %v2344 = vadd.f32 %v2085, %v2312
        %v2345 = vadd.f32 %v2086, %v2313
        %v2346 = vadd.f32 %v2087, %v2314
        %v2347 = vadd.f32 %v2088, %v2315
        %v2348 = vadd.f32 %v2089, %v2316
        %v2349 = vadd.f32 %v2090, %v2317
        %v2350 = vadd.f32 %v2091, %v2318
        %v2351 = vadd.f32 %v2092, %v2319
        %v2352 = vadd.f32 %v2093, %v2320
        %v2353 = vadd.f32 %v2094, %v2321
        %v2354 = vld [vmem:[%s1835 + $0x2] sm:$0xff]
        %v2355 = vld [vmem:[%s1835 + $0xa] sm:$0xff]
        %v2356 = vld [vmem:[%s1835 + $0x1a] sm:$0xff]
        %v2357 = vld [vmem:[%s1835 + $0x22] sm:$0xff]
        %v2358 = vld [vmem:[%s1835 + $0x32] sm:$0xff]
        %v2359 = vld [vmem:[%s1835 + $0x3a] sm:$0xff]
        %v2360 = vld [vmem:[%s1835 + $0x4a] sm:$0xff]
        %v2361 = vld [vmem:[%s1835 + $0x52] sm:$0xff]
        %v2362 = vld [vmem:[%s1835 + $0x62] sm:$0xff]
        %v2363 = vld [vmem:[%s1835 + $0x6a] sm:$0xff]
        %v2364 = vld [vmem:[%s1835 + $0x7a] sm:$0xff]
        %v2365 = vld [vmem:[%s1835 + $0x82] sm:$0xff]
        %v2366 = vld [vmem:[%s1835 + $0x92] sm:$0xff]
        %v2367 = vld [vmem:[%s1835 + $0x9a] sm:$0xff]
        %v2368 = vld [vmem:[%s1835 + $0xaa] sm:$0xff]
        %v2369 = vld [vmem:[%s1835 + $0xb2] sm:$0xff]
        %v2370 = vld [vmem:[%s1835 + $0xc2] sm:$0xff]
        %v2371 = vld [vmem:[%s1835 + $0xca] sm:$0xff]
        %v2372 = vld [vmem:[%s1835 + $0xda] sm:$0xff]
        %v2373 = vld [vmem:[%s1835 + $0xe2] sm:$0xff]
        %v2374 = vld [vmem:[%s1835 + $0xf2] sm:$0xff]
        %v2375 = vld [vmem:[%s1835 + $0xfa] sm:$0xff]
        %v2376 = vld [vmem:[%s1835 + $0x10a] sm:$0xff]
        %v2377 = vld [vmem:[%s1835 + $0x112] sm:$0xff]
        %v2378 = vld [vmem:[%s1835 + $0x122] sm:$0xff]
        %v2379 = vld [vmem:[%s1835 + $0x12a] sm:$0xff]
        %v2380 = vld [vmem:[%s1835 + $0x13a] sm:$0xff]
        %v2381 = vld [vmem:[%s1835 + $0x142] sm:$0xff]
        %v2382 = vld [vmem:[%s1835 + $0x152] sm:$0xff]
        %v2383 = vld [vmem:[%s1835 + $0x15a] sm:$0xff]
        %v2384 = vld [vmem:[%s1835 + $0x16a] sm:$0xff]
        %v2385 = vld [vmem:[%s1835 + $0x172] sm:$0xff]
        %2387 = vset.pattern.permute.xlu0 0
        %2388 = vperm.xlu0 %2387, %v2354
        %v2389 = vpop.permute.xlu0 %2388
        %2392 = vset.pattern.permute.xlu0 0
        %2393 = vperm.xlu0 %2392, %v2355
        %v2394 = vpop.permute.xlu0 %2393
        %2397 = vset.pattern.permute.xlu0 0
        %2398 = vperm.xlu0 %2397, %v2356
        %v2399 = vpop.permute.xlu0 %2398
        %2402 = vset.pattern.permute.xlu0 0
        %2403 = vperm.xlu0 %2402, %v2357
        %v2404 = vpop.permute.xlu0 %2403
        %2407 = vset.pattern.permute.xlu0 0
        %2408 = vperm.xlu0 %2407, %v2358
        %v2409 = vpop.permute.xlu0 %2408
        %2412 = vset.pattern.permute.xlu0 0
        %2413 = vperm.xlu0 %2412, %v2359
        %v2414 = vpop.permute.xlu0 %2413
        %2417 = vset.pattern.permute.xlu0 0
        %2418 = vperm.xlu0 %2417, %v2360
        %v2419 = vpop.permute.xlu0 %2418
        %2422 = vset.pattern.permute.xlu0 0
        %2423 = vperm.xlu0 %2422, %v2361
        %v2424 = vpop.permute.xlu0 %2423
        %2427 = vset.pattern.permute.xlu0 0
        %2428 = vperm.xlu0 %2427, %v2362
        %v2429 = vpop.permute.xlu0 %2428
        %2432 = vset.pattern.permute.xlu0 0
        %2433 = vperm.xlu0 %2432, %v2363
        %v2434 = vpop.permute.xlu0 %2433
        %2437 = vset.pattern.permute.xlu0 0
        %2438 = vperm.xlu0 %2437, %v2364
        %v2439 = vpop.permute.xlu0 %2438
        %2442 = vset.pattern.permute.xlu0 0
        %2443 = vperm.xlu0 %2442, %v2365
        %v2444 = vpop.permute.xlu0 %2443
        %2447 = vset.pattern.permute.xlu0 0
        %2448 = vperm.xlu0 %2447, %v2366
        %v2449 = vpop.permute.xlu0 %2448
        %2452 = vset.pattern.permute.xlu0 0
        %2453 = vperm.xlu0 %2452, %v2367
        %v2454 = vpop.permute.xlu0 %2453
        %2457 = vset.pattern.permute.xlu0 0
        %2458 = vperm.xlu0 %2457, %v2368
        %v2459 = vpop.permute.xlu0 %2458
        %2462 = vset.pattern.permute.xlu0 0
        %2463 = vperm.xlu0 %2462, %v2369
        %v2464 = vpop.permute.xlu0 %2463
        %2467 = vset.pattern.permute.xlu0 0
        %2468 = vperm.xlu0 %2467, %v2370
        %v2469 = vpop.permute.xlu0 %2468
        %2472 = vset.pattern.permute.xlu0 0
        %2473 = vperm.xlu0 %2472, %v2371
        %v2474 = vpop.permute.xlu0 %2473
        %2477 = vset.pattern.permute.xlu0 0
        %2478 = vperm.xlu0 %2477, %v2372
        %v2479 = vpop.permute.xlu0 %2478
        %2482 = vset.pattern.permute.xlu0 0
        %2483 = vperm.xlu0 %2482, %v2373
        %v2484 = vpop.permute.xlu0 %2483
        %2487 = vset.pattern.permute.xlu0 0
        %2488 = vperm.xlu0 %2487, %v2374
        %v2489 = vpop.permute.xlu0 %2488
        %2492 = vset.pattern.permute.xlu0 0
        %2493 = vperm.xlu0 %2492, %v2375
        %v2494 = vpop.permute.xlu0 %2493
        %2497 = vset.pattern.permute.xlu0 0
        %2498 = vperm.xlu0 %2497, %v2376
        %v2499 = vpop.permute.xlu0 %2498
        %2502 = vset.pattern.permute.xlu0 0
        %2503 = vperm.xlu0 %2502, %v2377
        %v2504 = vpop.permute.xlu0 %2503
        %2507 = vset.pattern.permute.xlu0 0
        %2508 = vperm.xlu0 %2507, %v2378
        %v2509 = vpop.permute.xlu0 %2508
        %2512 = vset.pattern.permute.xlu0 0
        %2513 = vperm.xlu0 %2512, %v2379
        %v2514 = vpop.permute.xlu0 %2513
        %2517 = vset.pattern.permute.xlu0 0
        %2518 = vperm.xlu0 %2517, %v2380
        %v2519 = vpop.permute.xlu0 %2518
        %2522 = vset.pattern.permute.xlu0 0
        %2523 = vperm.xlu0 %2522, %v2381
        %v2524 = vpop.permute.xlu0 %2523
        %2527 = vset.pattern.permute.xlu0 0
        %2528 = vperm.xlu0 %2527, %v2382
        %v2529 = vpop.permute.xlu0 %2528
        %2532 = vset.pattern.permute.xlu0 0
        %2533 = vperm.xlu0 %2532, %v2383
        %v2534 = vpop.permute.xlu0 %2533
        %2537 = vset.pattern.permute.xlu0 0
        %2538 = vperm.xlu0 %2537, %v2384
        %v2539 = vpop.permute.xlu0 %2538
        %2542 = vset.pattern.permute.xlu0 0
        %2543 = vperm.xlu0 %2542, %v2385
        %v2544 = vpop.permute.xlu0 %2543
        %v2547 = vperm.slane %v301, 0
        %v2549 = vmul.f32 %v2389, %v2547
        %v2550 = vmul.f32 %v2394, %v2547
        %v2551 = vmul.f32 %v2399, %v2547
        %v2552 = vmul.f32 %v2404, %v2547
        %v2553 = vmul.f32 %v2409, %v2547
        %v2554 = vmul.f32 %v2414, %v2547
        %v2555 = vmul.f32 %v2419, %v2547
        %v2556 = vmul.f32 %v2424, %v2547
        %v2557 = vmul.f32 %v2429, %v2547
        %v2558 = vmul.f32 %v2434, %v2547
        %v2559 = vmul.f32 %v2439, %v2547
        %v2560 = vmul.f32 %v2444, %v2547
        %v2561 = vmul.f32 %v2449, %v2547
        %v2562 = vmul.f32 %v2454, %v2547
        %v2563 = vmul.f32 %v2459, %v2547
        %v2564 = vmul.f32 %v2464, %v2547
        %v2565 = vmul.f32 %v2469, %v2547
        %v2566 = vmul.f32 %v2474, %v2547
        %v2567 = vmul.f32 %v2479, %v2547
        %v2568 = vmul.f32 %v2484, %v2547
        %v2569 = vmul.f32 %v2489, %v2547
        %v2570 = vmul.f32 %v2494, %v2547
        %v2571 = vmul.f32 %v2499, %v2547
        %v2572 = vmul.f32 %v2504, %v2547
        %v2573 = vmul.f32 %v2509, %v2547
        %v2574 = vmul.f32 %v2514, %v2547
        %v2575 = vmul.f32 %v2519, %v2547
        %v2576 = vmul.f32 %v2524, %v2547
        %v2577 = vmul.f32 %v2529, %v2547
        %v2578 = vmul.f32 %v2534, %v2547
        %v2579 = vmul.f32 %v2539, %v2547
        %v2580 = vmul.f32 %v2544, %v2547
        %v2581 = vadd.f32 %v2322, %v2549
        %v2582 = vadd.f32 %v2323, %v2550
        %v2583 = vadd.f32 %v2324, %v2551
        %v2584 = vadd.f32 %v2325, %v2552
        %v2585 = vadd.f32 %v2326, %v2553
        %v2586 = vadd.f32 %v2327, %v2554
        %v2587 = vadd.f32 %v2328, %v2555
        %v2588 = vadd.f32 %v2329, %v2556
        %v2589 = vadd.f32 %v2330, %v2557
        %v2590 = vadd.f32 %v2331, %v2558
        %v2591 = vadd.f32 %v2332, %v2559
        %v2592 = vadd.f32 %v2333, %v2560
        %v2593 = vadd.f32 %v2334, %v2561
        %v2594 = vadd.f32 %v2335, %v2562
        %v2595 = vadd.f32 %v2336, %v2563
        %v2596 = vadd.f32 %v2337, %v2564
        %v2597 = vadd.f32 %v2338, %v2565
        %v2598 = vadd.f32 %v2339, %v2566
        %v2599 = vadd.f32 %v2340, %v2567
        %v2600 = vadd.f32 %v2341, %v2568
        %v2601 = vadd.f32 %v2342, %v2569
        %v2602 = vadd.f32 %v2343, %v2570
        %v2603 = vadd.f32 %v2344, %v2571
        %v2604 = vadd.f32 %v2345, %v2572
        %v2605 = vadd.f32 %v2346, %v2573
        %v2606 = vadd.f32 %v2347, %v2574
        %v2607 = vadd.f32 %v2348, %v2575
        %v2608 = vadd.f32 %v2349, %v2576
        %v2609 = vadd.f32 %v2350, %v2577
        %v2610 = vadd.f32 %v2351, %v2578
        %v2611 = vadd.f32 %v2352, %v2579
        %v2612 = vadd.f32 %v2353, %v2580
        %s2613 = smul.u32 %s303, 256
        %s2614 = scalar_lea.vmem [#allocation2], %s2613
        %vm2615 = vcmask 408576
        %2616 = vst.msk [vmem:[%s2614] sm:$0xff] %vm2615, %v2581
        %2617 = vst.msk [vmem:[%s2614 + $0x8] sm:$0xff] %vm2615, %v2582
        %2618 = vst.msk [vmem:[%s2614 + $0x10] sm:$0xff] %vm2615, %v2583
        %2619 = vst.msk [vmem:[%s2614 + $0x18] sm:$0xff] %vm2615, %v2584
        %2620 = vst.msk [vmem:[%s2614 + $0x20] sm:$0xff] %vm2615, %v2585
        %2621 = vst.msk [vmem:[%s2614 + $0x28] sm:$0xff] %vm2615, %v2586
        %2622 = vst.msk [vmem:[%s2614 + $0x30] sm:$0xff] %vm2615, %v2587
        %2623 = vst.msk [vmem:[%s2614 + $0x38] sm:$0xff] %vm2615, %v2588
        %2624 = vst.msk [vmem:[%s2614 + $0x40] sm:$0xff] %vm2615, %v2589
        %2625 = vst.msk [vmem:[%s2614 + $0x48] sm:$0xff] %vm2615, %v2590
        %2626 = vst.msk [vmem:[%s2614 + $0x50] sm:$0xff] %vm2615, %v2591
        %2627 = vst.msk [vmem:[%s2614 + $0x58] sm:$0xff] %vm2615, %v2592
        %2628 = vst.msk [vmem:[%s2614 + $0x60] sm:$0xff] %vm2615, %v2593
        %2629 = vst.msk [vmem:[%s2614 + $0x68] sm:$0xff] %vm2615, %v2594
        %2630 = vst.msk [vmem:[%s2614 + $0x70] sm:$0xff] %vm2615, %v2595
        %2631 = vst.msk [vmem:[%s2614 + $0x78] sm:$0xff] %vm2615, %v2596
        %2632 = vst.msk [vmem:[%s2614 + $0x80] sm:$0xff] %vm2615, %v2597
        %2633 = vst.msk [vmem:[%s2614 + $0x88] sm:$0xff] %vm2615, %v2598
        %2634 = vst.msk [vmem:[%s2614 + $0x90] sm:$0xff] %vm2615, %v2599
        %2635 = vst.msk [vmem:[%s2614 + $0x98] sm:$0xff] %vm2615, %v2600
        %2636 = vst.msk [vmem:[%s2614 + $0xa0] sm:$0xff] %vm2615, %v2601
        %2637 = vst.msk [vmem:[%s2614 + $0xa8] sm:$0xff] %vm2615, %v2602
        %2638 = vst.msk [vmem:[%s2614 + $0xb0] sm:$0xff] %vm2615, %v2603
        %2639 = vst.msk [vmem:[%s2614 + $0xb8] sm:$0xff] %vm2615, %v2604
        %2640 = vst.msk [vmem:[%s2614 + $0xc0] sm:$0xff] %vm2615, %v2605
        %2641 = vst.msk [vmem:[%s2614 + $0xc8] sm:$0xff] %vm2615, %v2606
        %2642 = vst.msk [vmem:[%s2614 + $0xd0] sm:$0xff] %vm2615, %v2607
        %2643 = vst.msk [vmem:[%s2614 + $0xd8] sm:$0xff] %vm2615, %v2608
        %2644 = vst.msk [vmem:[%s2614 + $0xe0] sm:$0xff] %vm2615, %v2609
        %2645 = vst.msk [vmem:[%s2614 + $0xe8] sm:$0xff] %vm2615, %v2610
        %2646 = vst.msk [vmem:[%s2614 + $0xf0] sm:$0xff] %vm2615, %v2611
        %2647 = vst.msk [vmem:[%s2614 + $0xf8] sm:$0xff] %vm2615, %v2612
      $region53: #{_forward_impl.1} parent=47 // loop_footer
        %s307 = sadd.s32 1, %s303
      $region54: #{_forward_impl.1} parent=47 // loop_footer_branch
        %302 = sbr.rel target = $region50
      $region55: #{_forward_impl.1} parent=47 // loop_exit
        _
      %v2648 = vld [vmem:[#allocation2] ss:$2 sm:$0xff]
      %s2649 = scalar_lea.vmem [#allocation2], 32
      %v2650 = vld [vmem:[%s2649] ss:$2 sm:$0xff]
      %s2651 = scalar_lea.vmem [#allocation2], 64
      %v2652 = vld [vmem:[%s2651] ss:$2 sm:$0xff]
      %s2653 = scalar_lea.vmem [#allocation2], 96
      %v2654 = vld [vmem:[%s2653] ss:$2 sm:$0xff]
      %s2655 = scalar_lea.vmem [#allocation2], 128
      %v2656 = vld [vmem:[%s2655] ss:$2 sm:$0xff]
      %s2657 = scalar_lea.vmem [#allocation2], 160
      %v2658 = vld [vmem:[%s2657] ss:$2 sm:$0xff]
      %s2659 = scalar_lea.vmem [#allocation2], 192
      %v2660 = vld [vmem:[%s2659] ss:$2 sm:$0xff]
      %s2661 = scalar_lea.vmem [#allocation2], 224
      %v2662 = vld [vmem:[%s2661] ss:$2 sm:$0xff]
      %s2663 = scalar_lea.vmem [#allocation2], 256
      %v2664 = vld [vmem:[%s2663] ss:$2 sm:$0xff]
      %s2665 = scalar_lea.vmem [#allocation2], 288
      %v2666 = vld [vmem:[%s2665] ss:$2 sm:$0xff]
      %s2667 = scalar_lea.vmem [#allocation2], 320
      %v2668 = vld [vmem:[%s2667] ss:$2 sm:$0xff]
      %s2669 = scalar_lea.vmem [#allocation2], 352
      %v2670 = vld [vmem:[%s2669] ss:$2 sm:$0xff]
      %s2671 = scalar_lea.vmem [#allocation2], 384
      %v2672 = vld [vmem:[%s2671] ss:$2 sm:$0xff]
      %s2673 = scalar_lea.vmem [#allocation2], 416
      %v2674 = vld [vmem:[%s2673] ss:$2 sm:$0xff]
      %s2675 = scalar_lea.vmem [#allocation2], 448
      %v2676 = vld [vmem:[%s2675] ss:$2 sm:$0xff]
      %s2677 = scalar_lea.vmem [#allocation2], 480
      %v2678 = vld [vmem:[%s2677] ss:$2 sm:$0xff]
      %s2679 = scalar_lea.vmem [#allocation2], 512
      %v2680 = vld [vmem:[%s2679] ss:$2 sm:$0xff]
      %s2681 = scalar_lea.vmem [#allocation2], 544
      %v2682 = vld [vmem:[%s2681] ss:$2 sm:$0xff]
      %s2683 = scalar_lea.vmem [#allocation2], 576
      %v2684 = vld [vmem:[%s2683] ss:$2 sm:$0xff]
      %s2685 = scalar_lea.vmem [#allocation2], 608
      %v2686 = vld [vmem:[%s2685] ss:$2 sm:$0xff]
      %s2687 = scalar_lea.vmem [#allocation2], 640
      %v2688 = vld [vmem:[%s2687] ss:$2 sm:$0xff]
      %s2689 = scalar_lea.vmem [#allocation2], 672
      %v2690 = vld [vmem:[%s2689] ss:$2 sm:$0xff]
      %s2691 = scalar_lea.vmem [#allocation2], 704
      %v2692 = vld [vmem:[%s2691] ss:$2 sm:$0xff]
      %s2693 = scalar_lea.vmem [#allocation2], 736
      %v2694 = vld [vmem:[%s2693] ss:$2 sm:$0xff]
      %s2695 = scalar_lea.vmem [#allocation2], 1
      %v2696 = vld [vmem:[%s2695] ss:$2 sm:$0xff]
      %s2697 = scalar_lea.vmem [#allocation2], 33
      %v2698 = vld [vmem:[%s2697] ss:$2 sm:$0xff]
      %s2699 = scalar_lea.vmem [#allocation2], 65
      %v2700 = vld [vmem:[%s2699] ss:$2 sm:$0xff]
      %s2701 = scalar_lea.vmem [#allocation2], 97
      %v2702 = vld [vmem:[%s2701] ss:$2 sm:$0xff]
      %s2703 = scalar_lea.vmem [#allocation2], 129
      %v2704 = vld [vmem:[%s2703] ss:$2 sm:$0xff]
      %s2705 = scalar_lea.vmem [#allocation2], 161
      %v2706 = vld [vmem:[%s2705] ss:$2 sm:$0xff]
      %s2707 = scalar_lea.vmem [#allocation2], 193
      %v2708 = vld [vmem:[%s2707] ss:$2 sm:$0xff]
      %s2709 = scalar_lea.vmem [#allocation2], 225
      %v2710 = vld [vmem:[%s2709] ss:$2 sm:$0xff]
      %s2711 = scalar_lea.vmem [#allocation2], 257
      %v2712 = vld [vmem:[%s2711] ss:$2 sm:$0xff]
      %s2713 = scalar_lea.vmem [#allocation2], 289
      %v2714 = vld [vmem:[%s2713] ss:$2 sm:$0xff]
      %s2715 = scalar_lea.vmem [#allocation2], 321
      %v2716 = vld [vmem:[%s2715] ss:$2 sm:$0xff]
      %s2717 = scalar_lea.vmem [#allocation2], 353
      %v2718 = vld [vmem:[%s2717] ss:$2 sm:$0xff]
      %s2719 = scalar_lea.vmem [#allocation2], 385
      %v2720 = vld [vmem:[%s2719] ss:$2 sm:$0xff]
      %s2721 = scalar_lea.vmem [#allocation2], 417
      %v2722 = vld [vmem:[%s2721] ss:$2 sm:$0xff]
      %s2723 = scalar_lea.vmem [#allocation2], 449
      %v2724 = vld [vmem:[%s2723] ss:$2 sm:$0xff]
      %s2725 = scalar_lea.vmem [#allocation2], 481
      %v2726 = vld [vmem:[%s2725] ss:$2 sm:$0xff]
      %s2727 = scalar_lea.vmem [#allocation2], 513
      %v2728 = vld [vmem:[%s2727] ss:$2 sm:$0xff]
      %s2729 = scalar_lea.vmem [#allocation2], 545
      %v2730 = vld [vmem:[%s2729] ss:$2 sm:$0xff]
      %s2731 = scalar_lea.vmem [#allocation2], 577
      %v2732 = vld [vmem:[%s2731] ss:$2 sm:$0xff]
      %s2733 = scalar_lea.vmem [#allocation2], 609
      %v2734 = vld [vmem:[%s2733] ss:$2 sm:$0xff]
      %s2735 = scalar_lea.vmem [#allocation2], 641
      %v2736 = vld [vmem:[%s2735] ss:$2 sm:$0xff]
      %s2737 = scalar_lea.vmem [#allocation2], 673
      %v2738 = vld [vmem:[%s2737] ss:$2 sm:$0xff]
      %s2739 = scalar_lea.vmem [#allocation2], 705
      %v2740 = vld [vmem:[%s2739] ss:$2 sm:$0xff]
      %s2741 = scalar_lea.vmem [#allocation2], 737
      %v2742 = vld [vmem:[%s2741] ss:$2 sm:$0xff]
      %v2743 = vmax.f32 %v2648, %v2696
      %v2744 = vmax.f32 %v2650, %v2698
      %v2745 = vmax.f32 %v2652, %v2700
      %v2746 = vmax.f32 %v2654, %v2702
      %v2747 = vmax.f32 %v2656, %v2704
      %v2748 = vmax.f32 %v2658, %v2706
      %v2749 = vmax.f32 %v2660, %v2708
      %v2750 = vmax.f32 %v2662, %v2710
      %v2751 = vmax.f32 %v2664, %v2712
      %v2752 = vmax.f32 %v2666, %v2714
      %v2753 = vmax.f32 %v2668, %v2716
      %v2754 = vmax.f32 %v2670, %v2718
      %v2755 = vmax.f32 %v2672, %v2720
      %v2756 = vmax.f32 %v2674, %v2722
      %v2757 = vmax.f32 %v2676, %v2724
      %v2758 = vmax.f32 %v2678, %v2726
      %v2759 = vmax.f32 %v2680, %v2728
      %v2760 = vmax.f32 %v2682, %v2730
      %v2761 = vmax.f32 %v2684, %v2732
      %v2762 = vmax.f32 %v2686, %v2734
      %v2763 = vmax.f32 %v2688, %v2736
      %v2764 = vmax.f32 %v2690, %v2738
      %v2765 = vmax.f32 %v2692, %v2740
      %v2766 = vmax.f32 %v2694, %v2742
      %s2767 = scalar_lea.vmem [#allocation2], 16
      %v2768 = vld [vmem:[%s2767] ss:$2 sm:$0xff]
      %s2769 = scalar_lea.vmem %s2767, 32 [#allocation2]
      %v2770 = vld [vmem:[%s2769] ss:$2 sm:$0xff]
      %s2771 = scalar_lea.vmem %s2767, 64 [#allocation2]
      %v2772 = vld [vmem:[%s2771] ss:$2 sm:$0xff]
      %s2773 = scalar_lea.vmem %s2767, 96 [#allocation2]
      %v2774 = vld [vmem:[%s2773] ss:$2 sm:$0xff]
      %s2775 = scalar_lea.vmem %s2767, 128 [#allocation2]
      %v2776 = vld [vmem:[%s2775] ss:$2 sm:$0xff]
      %s2777 = scalar_lea.vmem %s2767, 160 [#allocation2]
      %v2778 = vld [vmem:[%s2777] ss:$2 sm:$0xff]
      %s2779 = scalar_lea.vmem %s2767, 192 [#allocation2]
      %v2780 = vld [vmem:[%s2779] ss:$2 sm:$0xff]
      %s2781 = scalar_lea.vmem %s2767, 224 [#allocation2]
      %v2782 = vld [vmem:[%s2781] ss:$2 sm:$0xff]
      %s2783 = scalar_lea.vmem %s2767, 256 [#allocation2]
      %v2784 = vld [vmem:[%s2783] ss:$2 sm:$0xff]
      %s2785 = scalar_lea.vmem %s2767, 288 [#allocation2]
      %v2786 = vld [vmem:[%s2785] ss:$2 sm:$0xff]
      %s2787 = scalar_lea.vmem %s2767, 320 [#allocation2]
      %v2788 = vld [vmem:[%s2787] ss:$2 sm:$0xff]
      %s2789 = scalar_lea.vmem %s2767, 352 [#allocation2]
      %v2790 = vld [vmem:[%s2789] ss:$2 sm:$0xff]
      %s2791 = scalar_lea.vmem %s2767, 384 [#allocation2]
      %v2792 = vld [vmem:[%s2791] ss:$2 sm:$0xff]
      %s2793 = scalar_lea.vmem %s2767, 416 [#allocation2]
      %v2794 = vld [vmem:[%s2793] ss:$2 sm:$0xff]
      %s2795 = scalar_lea.vmem %s2767, 448 [#allocation2]
      %v2796 = vld [vmem:[%s2795] ss:$2 sm:$0xff]
      %s2797 = scalar_lea.vmem %s2767, 480 [#allocation2]
      %v2798 = vld [vmem:[%s2797] ss:$2 sm:$0xff]
      %s2799 = scalar_lea.vmem %s2767, 512 [#allocation2]
      %v2800 = vld [vmem:[%s2799] ss:$2 sm:$0xff]
      %s2801 = scalar_lea.vmem %s2767, 544 [#allocation2]
      %v2802 = vld [vmem:[%s2801] ss:$2 sm:$0xff]
      %s2803 = scalar_lea.vmem %s2767, 576 [#allocation2]
      %v2804 = vld [vmem:[%s2803] ss:$2 sm:$0xff]
      %s2805 = scalar_lea.vmem %s2767, 608 [#allocation2]
      %v2806 = vld [vmem:[%s2805] ss:$2 sm:$0xff]
      %s2807 = scalar_lea.vmem %s2767, 640 [#allocation2]
      %v2808 = vld [vmem:[%s2807] ss:$2 sm:$0xff]
      %s2809 = scalar_lea.vmem %s2767, 672 [#allocation2]
      %v2810 = vld [vmem:[%s2809] ss:$2 sm:$0xff]
      %s2811 = scalar_lea.vmem %s2767, 704 [#allocation2]
      %v2812 = vld [vmem:[%s2811] ss:$2 sm:$0xff]
      %s2813 = scalar_lea.vmem %s2767, 736 [#allocation2]
      %v2814 = vld [vmem:[%s2813] ss:$2 sm:$0xff]
      %s2815 = scalar_lea.vmem %s2767, 1 [#allocation2]
      %v2816 = vld [vmem:[%s2815] ss:$2 sm:$0xff]
      %s2817 = scalar_lea.vmem %s2767, 33 [#allocation2]
      %v2818 = vld [vmem:[%s2817] ss:$2 sm:$0xff]
      %s2819 = scalar_lea.vmem %s2767, 65 [#allocation2]
      %v2820 = vld [vmem:[%s2819] ss:$2 sm:$0xff]
      %s2821 = scalar_lea.vmem %s2767, 97 [#allocation2]
      %v2822 = vld [vmem:[%s2821] ss:$2 sm:$0xff]
      %s2823 = scalar_lea.vmem %s2767, 129 [#allocation2]
      %v2824 = vld [vmem:[%s2823] ss:$2 sm:$0xff]
      %s2825 = scalar_lea.vmem %s2767, 161 [#allocation2]
      %v2826 = vld [vmem:[%s2825] ss:$2 sm:$0xff]
      %s2827 = scalar_lea.vmem %s2767, 193 [#allocation2]
      %v2828 = vld [vmem:[%s2827] ss:$2 sm:$0xff]
      %s2829 = scalar_lea.vmem %s2767, 225 [#allocation2]
      %v2830 = vld [vmem:[%s2829] ss:$2 sm:$0xff]
      %s2831 = scalar_lea.vmem %s2767, 257 [#allocation2]
      %v2832 = vld [vmem:[%s2831] ss:$2 sm:$0xff]
      %s2833 = scalar_lea.vmem %s2767, 289 [#allocation2]
      %v2834 = vld [vmem:[%s2833] ss:$2 sm:$0xff]
      %s2835 = scalar_lea.vmem %s2767, 321 [#allocation2]
      %v2836 = vld [vmem:[%s2835] ss:$2 sm:$0xff]
      %s2837 = scalar_lea.vmem %s2767, 353 [#allocation2]
      %v2838 = vld [vmem:[%s2837] ss:$2 sm:$0xff]
      %s2839 = scalar_lea.vmem %s2767, 385 [#allocation2]
      %v2840 = vld [vmem:[%s2839] ss:$2 sm:$0xff]
      %s2841 = scalar_lea.vmem %s2767, 417 [#allocation2]
      %v2842 = vld [vmem:[%s2841] ss:$2 sm:$0xff]
      %s2843 = scalar_lea.vmem %s2767, 449 [#allocation2]
      %v2844 = vld [vmem:[%s2843] ss:$2 sm:$0xff]
      %s2845 = scalar_lea.vmem %s2767, 481 [#allocation2]
      %v2846 = vld [vmem:[%s2845] ss:$2 sm:$0xff]
      %s2847 = scalar_lea.vmem %s2767, 513 [#allocation2]
      %v2848 = vld [vmem:[%s2847] ss:$2 sm:$0xff]
      %s2849 = scalar_lea.vmem %s2767, 545 [#allocation2]
      %v2850 = vld [vmem:[%s2849] ss:$2 sm:$0xff]
      %s2851 = scalar_lea.vmem %s2767, 577 [#allocation2]
      %v2852 = vld [vmem:[%s2851] ss:$2 sm:$0xff]
      %s2853 = scalar_lea.vmem %s2767, 609 [#allocation2]
      %v2854 = vld [vmem:[%s2853] ss:$2 sm:$0xff]
      %s2855 = scalar_lea.vmem %s2767, 641 [#allocation2]
      %v2856 = vld [vmem:[%s2855] ss:$2 sm:$0xff]
      %s2857 = scalar_lea.vmem %s2767, 673 [#allocation2]
      %v2858 = vld [vmem:[%s2857] ss:$2 sm:$0xff]
      %s2859 = scalar_lea.vmem %s2767, 705 [#allocation2]
      %v2860 = vld [vmem:[%s2859] ss:$2 sm:$0xff]
      %s2861 = scalar_lea.vmem %s2767, 737 [#allocation2]
      %v2862 = vld [vmem:[%s2861] ss:$2 sm:$0xff]
      %v2863 = vmax.f32 %v2768, %v2816
      %v2864 = vmax.f32 %v2770, %v2818
      %v2865 = vmax.f32 %v2772, %v2820
      %v2866 = vmax.f32 %v2774, %v2822
      %v2867 = vmax.f32 %v2776, %v2824
      %v2868 = vmax.f32 %v2778, %v2826
      %v2869 = vmax.f32 %v2780, %v2828
      %v2870 = vmax.f32 %v2782, %v2830
      %v2871 = vmax.f32 %v2784, %v2832
      %v2872 = vmax.f32 %v2786, %v2834
      %v2873 = vmax.f32 %v2788, %v2836
      %v2874 = vmax.f32 %v2790, %v2838
      %v2875 = vmax.f32 %v2792, %v2840
      %v2876 = vmax.f32 %v2794, %v2842
      %v2877 = vmax.f32 %v2796, %v2844
      %v2878 = vmax.f32 %v2798, %v2846
      %v2879 = vmax.f32 %v2800, %v2848
      %v2880 = vmax.f32 %v2802, %v2850
      %v2881 = vmax.f32 %v2804, %v2852
      %v2882 = vmax.f32 %v2806, %v2854
      %v2883 = vmax.f32 %v2808, %v2856
      %v2884 = vmax.f32 %v2810, %v2858
      %v2885 = vmax.f32 %v2812, %v2860
      %v2886 = vmax.f32 %v2814, %v2862
      %v2887 = vmax.f32 %v2743, %v2863
      %v2888 = vmax.f32 %v2744, %v2864
      %v2889 = vmax.f32 %v2745, %v2865
      %v2890 = vmax.f32 %v2746, %v2866
      %v2891 = vmax.f32 %v2747, %v2867
      %v2892 = vmax.f32 %v2748, %v2868
      %v2893 = vmax.f32 %v2749, %v2869
      %v2894 = vmax.f32 %v2750, %v2870
      %v2895 = vmax.f32 %v2751, %v2871
      %v2896 = vmax.f32 %v2752, %v2872
      %v2897 = vmax.f32 %v2753, %v2873
      %v2898 = vmax.f32 %v2754, %v2874
      %v2899 = vmax.f32 %v2755, %v2875
      %v2900 = vmax.f32 %v2756, %v2876
      %v2901 = vmax.f32 %v2757, %v2877
      %v2902 = vmax.f32 %v2758, %v2878
      %v2903 = vmax.f32 %v2759, %v2879
      %v2904 = vmax.f32 %v2760, %v2880
      %v2905 = vmax.f32 %v2761, %v2881
      %v2906 = vmax.f32 %v2762, %v2882
      %v2907 = vmax.f32 %v2763, %v2883
      %v2908 = vmax.f32 %v2764, %v2884
      %v2909 = vmax.f32 %v2765, %v2885
      %v2910 = vmax.f32 %v2766, %v2886
      %v2912 = vperm.slane %v283, 0
      %v2914 = vadd.f32 %v2887, %v2912
      %v2915 = vadd.f32 %v2888, %v2912
      %v2916 = vadd.f32 %v2889, %v2912
      %v2917 = vadd.f32 %v2890, %v2912
      %v2918 = vadd.f32 %v2891, %v2912
      %v2919 = vadd.f32 %v2892, %v2912
      %v2920 = vadd.f32 %v2893, %v2912
      %v2921 = vadd.f32 %v2894, %v2912
      %v2922 = vadd.f32 %v2895, %v2912
      %v2923 = vadd.f32 %v2896, %v2912
      %v2924 = vadd.f32 %v2897, %v2912
      %v2925 = vadd.f32 %v2898, %v2912
      %v2926 = vadd.f32 %v2899, %v2912
      %v2927 = vadd.f32 %v2900, %v2912
      %v2928 = vadd.f32 %v2901, %v2912
      %v2929 = vadd.f32 %v2902, %v2912
      %v2930 = vadd.f32 %v2903, %v2912
      %v2931 = vadd.f32 %v2904, %v2912
      %v2932 = vadd.f32 %v2905, %v2912
      %v2933 = vadd.f32 %v2906, %v2912
      %v2934 = vadd.f32 %v2907, %v2912
      %v2935 = vadd.f32 %v2908, %v2912
      %v2936 = vadd.f32 %v2909, %v2912
      %v2937 = vadd.f32 %v2910, %v2912
      %v2938 = vmax.f32 %v2914, 0.0
      %v2939 = vmax.f32 %v2915, 0.0
      %v2940 = vmax.f32 %v2916, 0.0
      %v2941 = vmax.f32 %v2917, 0.0
      %v2942 = vmax.f32 %v2918, 0.0
      %v2943 = vmax.f32 %v2919, 0.0
      %v2944 = vmax.f32 %v2920, 0.0
      %v2945 = vmax.f32 %v2921, 0.0
      %v2946 = vmax.f32 %v2922, 0.0
      %v2947 = vmax.f32 %v2923, 0.0
      %v2948 = vmax.f32 %v2924, 0.0
      %v2949 = vmax.f32 %v2925, 0.0
      %v2950 = vmax.f32 %v2926, 0.0
      %v2951 = vmax.f32 %v2927, 0.0
      %v2952 = vmax.f32 %v2928, 0.0
      %v2953 = vmax.f32 %v2929, 0.0
      %v2954 = vmax.f32 %v2930, 0.0
      %v2955 = vmax.f32 %v2931, 0.0
      %v2956 = vmax.f32 %v2932, 0.0
      %v2957 = vmax.f32 %v2933, 0.0
      %v2958 = vmax.f32 %v2934, 0.0
      %v2959 = vmax.f32 %v2935, 0.0
      %v2960 = vmax.f32 %v2936, 0.0
      %v2961 = vmax.f32 %v2937, 0.0
      %vm2962 = vcmask 408576
      %2963 = vst.msk [vmem:[#allocation3] sm:$0xff] %vm2962, 0.0
      %vm2964 = vcmask 402432
      %2965 = vst.msk [vmem:[#allocation3 + $0x8] sm:$0x3] %vm2964, 0.0
      %2966 = vst.msk [vmem:[#allocation3 + $0xa0] sm:$0xff] %vm2962, 0.0
      %2967 = vst.msk [vmem:[#allocation3 + $0xa8] sm:$0x3] %vm2964, 0.0
      %2968 = vst.msk [vmem:[#allocation3 + $0x140] sm:$0xff] %vm2962, 0.0
      %2969 = vst.msk [vmem:[#allocation3 + $0x148] sm:$0x3] %vm2964, 0.0
      %s2970 = scalar_lea.vmem [#allocation3], 144
      %2971 = vst.msk [vmem:[%s2970] sm:$0xff] %vm2962, 0.0
      %2972 = vst.msk [vmem:[%s2970 + $0x8] sm:$0x3] %vm2964, 0.0
      %2973 = vst.msk [vmem:[%s2970 + $0xa0] sm:$0xff] %vm2962, 0.0
      %2974 = vst.msk [vmem:[%s2970 + $0xa8] sm:$0x3] %vm2964, 0.0
      %2975 = vst.msk [vmem:[%s2970 + $0x140] sm:$0xff] %vm2962, 0.0
      %2976 = vst.msk [vmem:[%s2970 + $0x148] sm:$0x3] %vm2964, 0.0
      %vm2977 = vcmask 401408
      %2978 = vst.msk [vmem:[#allocation3] sm:$0x1] %vm2977, 0.0
      %2979 = vst.msk [vmem:[#allocation3 + $0x10] sm:$0x1] %vm2977, 0.0
      %2980 = vst.msk [vmem:[#allocation3 + $0x20] sm:$0x1] %vm2977, 0.0
      %2981 = vst.msk [vmem:[#allocation3 + $0x30] sm:$0x1] %vm2977, 0.0
      %2982 = vst.msk [vmem:[#allocation3 + $0x40] sm:$0x1] %vm2977, 0.0
      %2983 = vst.msk [vmem:[#allocation3 + $0x50] sm:$0x1] %vm2977, 0.0
      %2984 = vst.msk [vmem:[#allocation3 + $0x60] sm:$0x1] %vm2977, 0.0
      %2985 = vst.msk [vmem:[#allocation3 + $0x70] sm:$0x1] %vm2977, 0.0
      %2986 = vst.msk [vmem:[#allocation3 + $0x80] sm:$0x1] %vm2977, 0.0
      %2987 = vst.msk [vmem:[#allocation3 + $0x90] sm:$0x1] %vm2977, 0.0
      %2988 = vst.msk [vmem:[#allocation3 + $0xa0] sm:$0x1] %vm2977, 0.0
      %2989 = vst.msk [vmem:[#allocation3 + $0xb0] sm:$0x1] %vm2977, 0.0
      %2990 = vst.msk [vmem:[#allocation3 + $0xc0] sm:$0x1] %vm2977, 0.0
      %2991 = vst.msk [vmem:[#allocation3 + $0xd0] sm:$0x1] %vm2977, 0.0
      %2992 = vst.msk [vmem:[#allocation3 + $0xe0] sm:$0x1] %vm2977, 0.0
      %2993 = vst.msk [vmem:[#allocation3 + $0xf0] sm:$0x1] %vm2977, 0.0
      %2994 = vst.msk [vmem:[#allocation3 + $0x100] sm:$0x1] %vm2977, 0.0
      %2995 = vst.msk [vmem:[#allocation3 + $0x110] sm:$0x1] %vm2977, 0.0
      %2996 = vst.msk [vmem:[#allocation3 + $0x120] sm:$0x1] %vm2977, 0.0
      %2997 = vst.msk [vmem:[#allocation3 + $0x130] sm:$0x1] %vm2977, 0.0
      %2998 = vst.msk [vmem:[#allocation3 + $0x140] sm:$0x1] %vm2977, 0.0
      %2999 = vst.msk [vmem:[#allocation3 + $0x150] sm:$0x1] %vm2977, 0.0
      %3000 = vst.msk [vmem:[#allocation3 + $0x160] sm:$0x1] %vm2977, 0.0
      %3001 = vst.msk [vmem:[#allocation3 + $0x170] sm:$0x1] %vm2977, 0.0
      %3002 = vst.msk [vmem:[#allocation3 + $0x180] sm:$0x1] %vm2977, 0.0
      %3003 = vst.msk [vmem:[#allocation3 + $0x190] sm:$0x1] %vm2977, 0.0
      %3004 = vst.msk [vmem:[#allocation3 + $0x1a0] sm:$0x1] %vm2977, 0.0
      %3005 = vst.msk [vmem:[#allocation3 + $0x1b0] sm:$0x1] %vm2977, 0.0
      %3006 = vst.msk [vmem:[#allocation3 + $0x1c0] sm:$0x1] %vm2977, 0.0
      %3007 = vst.msk [vmem:[#allocation3 + $0x1d0] sm:$0x1] %vm2977, 0.0
      %3008 = vst.msk [vmem:[#allocation3 + $0x9] sm:$0x1] %vm2977, 0.0
      %3009 = vst.msk [vmem:[#allocation3 + $0x19] sm:$0x1] %vm2977, 0.0
      %3010 = vst.msk [vmem:[#allocation3 + $0x29] sm:$0x1] %vm2977, 0.0
      %3011 = vst.msk [vmem:[#allocation3 + $0x39] sm:$0x1] %vm2977, 0.0
      %3012 = vst.msk [vmem:[#allocation3 + $0x49] sm:$0x1] %vm2977, 0.0
      %3013 = vst.msk [vmem:[#allocation3 + $0x59] sm:$0x1] %vm2977, 0.0
      %3014 = vst.msk [vmem:[#allocation3 + $0x69] sm:$0x1] %vm2977, 0.0
      %3015 = vst.msk [vmem:[#allocation3 + $0x79] sm:$0x1] %vm2977, 0.0
      %3016 = vst.msk [vmem:[#allocation3 + $0x89] sm:$0x1] %vm2977, 0.0
      %3017 = vst.msk [vmem:[#allocation3 + $0x99] sm:$0x1] %vm2977, 0.0
      %3018 = vst.msk [vmem:[#allocation3 + $0xa9] sm:$0x1] %vm2977, 0.0
      %3019 = vst.msk [vmem:[#allocation3 + $0xb9] sm:$0x1] %vm2977, 0.0
      %3020 = vst.msk [vmem:[#allocation3 + $0xc9] sm:$0x1] %vm2977, 0.0
      %3021 = vst.msk [vmem:[#allocation3 + $0xd9] sm:$0x1] %vm2977, 0.0
      %3022 = vst.msk [vmem:[#allocation3 + $0xe9] sm:$0x1] %vm2977, 0.0
      %3023 = vst.msk [vmem:[#allocation3 + $0xf9] sm:$0x1] %vm2977, 0.0
      %3024 = vst.msk [vmem:[#allocation3 + $0x109] sm:$0x1] %vm2977, 0.0
      %3025 = vst.msk [vmem:[#allocation3 + $0x119] sm:$0x1] %vm2977, 0.0
      %3026 = vst.msk [vmem:[#allocation3 + $0x129] sm:$0x1] %vm2977, 0.0
      %3027 = vst.msk [vmem:[#allocation3 + $0x139] sm:$0x1] %vm2977, 0.0
      %3028 = vst.msk [vmem:[#allocation3 + $0x149] sm:$0x1] %vm2977, 0.0
      %3029 = vst.msk [vmem:[#allocation3 + $0x159] sm:$0x1] %vm2977, 0.0
      %3030 = vst.msk [vmem:[#allocation3 + $0x169] sm:$0x1] %vm2977, 0.0
      %3031 = vst.msk [vmem:[#allocation3 + $0x179] sm:$0x1] %vm2977, 0.0
      %3032 = vst.msk [vmem:[#allocation3 + $0x189] sm:$0x1] %vm2977, 0.0
      %3033 = vst.msk [vmem:[#allocation3 + $0x199] sm:$0x1] %vm2977, 0.0
      %3034 = vst.msk [vmem:[#allocation3 + $0x1a9] sm:$0x1] %vm2977, 0.0
      %3035 = vst.msk [vmem:[#allocation3 + $0x1b9] sm:$0x1] %vm2977, 0.0
      %3036 = vst.msk [vmem:[#allocation3 + $0x1c9] sm:$0x1] %vm2977, 0.0
      %3037 = vst.msk [vmem:[#allocation3 + $0x1d9] sm:$0x1] %vm2977, 0.0
      %s3038 = scalar_lea.vmem [#allocation3], 16
      %3039 = vst.msk [vmem:[%s3038 + $0x1] sm:$0xff] %vm2962, %v2938
      %3040 = vst.msk [vmem:[%s3038 + $0x11] sm:$0xff] %vm2962, %v2939
      %3041 = vst.msk [vmem:[%s3038 + $0x21] sm:$0xff] %vm2962, %v2940
      %3042 = vst.msk [vmem:[%s3038 + $0x31] sm:$0xff] %vm2962, %v2941
      %3043 = vst.msk [vmem:[%s3038 + $0x41] sm:$0xff] %vm2962, %v2942
      %3044 = vst.msk [vmem:[%s3038 + $0x51] sm:$0xff] %vm2962, %v2943
      %3045 = vst.msk [vmem:[%s3038 + $0x61] sm:$0xff] %vm2962, %v2944
      %3046 = vst.msk [vmem:[%s3038 + $0x71] sm:$0xff] %vm2962, %v2945
      %3047 = vst.msk [vmem:[%s3038 + $0xa1] sm:$0xff] %vm2962, %v2946
      %3048 = vst.msk [vmem:[%s3038 + $0xb1] sm:$0xff] %vm2962, %v2947
      %3049 = vst.msk [vmem:[%s3038 + $0xc1] sm:$0xff] %vm2962, %v2948
      %3050 = vst.msk [vmem:[%s3038 + $0xd1] sm:$0xff] %vm2962, %v2949
      %3051 = vst.msk [vmem:[%s3038 + $0xe1] sm:$0xff] %vm2962, %v2950
      %3052 = vst.msk [vmem:[%s3038 + $0xf1] sm:$0xff] %vm2962, %v2951
      %3053 = vst.msk [vmem:[%s3038 + $0x101] sm:$0xff] %vm2962, %v2952
      %3054 = vst.msk [vmem:[%s3038 + $0x111] sm:$0xff] %vm2962, %v2953
      %3055 = vst.msk [vmem:[%s3038 + $0x141] sm:$0xff] %vm2962, %v2954
      %3056 = vst.msk [vmem:[%s3038 + $0x151] sm:$0xff] %vm2962, %v2955
      %3057 = vst.msk [vmem:[%s3038 + $0x161] sm:$0xff] %vm2962, %v2956
      %3058 = vst.msk [vmem:[%s3038 + $0x171] sm:$0xff] %vm2962, %v2957
      %3059 = vst.msk [vmem:[%s3038 + $0x181] sm:$0xff] %vm2962, %v2958
      %3060 = vst.msk [vmem:[%s3038 + $0x191] sm:$0xff] %vm2962, %v2959
      %3061 = vst.msk [vmem:[%s3038 + $0x1a1] sm:$0xff] %vm2962, %v2960
      %3062 = vst.msk [vmem:[%s3038 + $0x1b1] sm:$0xff] %vm2962, %v2961
      loop: start=0, step=1, limit=3
      $region56: #{_forward_impl.1} parent=47 // loop_pre_header
        _
      $region57: #{_forward_impl.1} parent=47 // loop_header
        %s3064 = sphi 0, %s3068
        %p3065 = scmp.ge.s32.totalorder %s3064, 3
      $region58: #{_forward_impl.1} parent=47 // loop_header_branch
        %3067 = sbr.rel (%p3065) target = $region62
      $region59: #{_forward_impl.1} parent=47 // loop_body
        %s3069 = smul.u32 %s3064, 160
        %s3070 = scalar_lea.vmem [#allocation3], %s3069
        %v3071 = vld [vmem:[%s3070] sm:$0xff]
        %v3072 = vld [vmem:[%s3070 + $0x10] sm:$0xff]
        %v3073 = vld [vmem:[%s3070 + $0x20] sm:$0xff]
        %v3074 = vld [vmem:[%s3070 + $0x30] sm:$0xff]
        %v3075 = vld [vmem:[%s3070 + $0x40] sm:$0xff]
        %v3076 = vld [vmem:[%s3070 + $0x50] sm:$0xff]
        %v3077 = vld [vmem:[%s3070 + $0x60] sm:$0xff]
        %v3078 = vld [vmem:[%s3070 + $0x70] sm:$0xff]
        %v3079 = vld [vmem:[%s3] sm:$0xff]
        %v3080 = vld [vmem:[%s3 + $0x8] sm:$0xff]
        %v3081 = vld [vmem:[%s3 + $0x10] sm:$0xff]
        %v3082 = vld [vmem:[%s3 + $0x18] sm:$0xff]
        %v3083 = vld [vmem:[%s3 + $0x20] sm:$0xff]
        %v3084 = vld [vmem:[%s3 + $0x28] sm:$0xff]
        %v3085 = vld [vmem:[%s3 + $0x30] sm:$0x3]
        %v3086 = vld [vmem:[%s3070 + $0x1] sm:$0xff]
        %v3087 = vld [vmem:[%s3070 + $0x11] sm:$0xff]
        %v3088 = vld [vmem:[%s3070 + $0x21] sm:$0xff]
        %v3089 = vld [vmem:[%s3070 + $0x31] sm:$0xff]
        %v3090 = vld [vmem:[%s3070 + $0x41] sm:$0xff]
        %v3091 = vld [vmem:[%s3070 + $0x51] sm:$0xff]
        %v3092 = vld [vmem:[%s3070 + $0x61] sm:$0xff]
        %v3093 = vld [vmem:[%s3070 + $0x71] sm:$0xff]
        %s3094 = scalar_lea.vmem %s3, 56
        %v3095 = vld [vmem:[%s3094] sm:$0xff]
        %v3096 = vld [vmem:[%s3094 + $0x8] sm:$0xff]
        %v3097 = vld [vmem:[%s3094 + $0x10] sm:$0xff]
        %v3098 = vld [vmem:[%s3094 + $0x18] sm:$0xff]
        %v3099 = vld [vmem:[%s3094 + $0x20] sm:$0xff]
        %v3100 = vld [vmem:[%s3094 + $0x28] sm:$0xff]
        %v3101 = vld [vmem:[%s3094 + $0x30] sm:$0x3]
        %v3103 = vsel %vm2962, %v3086, 0
        %v3106 = vsel %vm2962, %v3087, 0
        %v3109 = vsel %vm2962, %v3088, 0
        %v3112 = vsel %vm2962, %v3089, 0
        %v3115 = vsel %vm2962, %v3090, 0
        %v3118 = vsel %vm2962, %v3091, 0
        %v3121 = vsel %vm2962, %v3092, 0
        %v3124 = vsel %vm2962, %v3093, 0
        %vm3126 = vcmask 1041408
        %v3128 = vsel %vm3126, %v3101, 0
        %3130 = vmatpush.msra.mxu0 0.0
        %3131 = vmatpush.msra.mxu0 0.0
        %3132 = vmatpush.msra.mxu0 0.0
        %3133 = vmatpush.msra.mxu0 0.0
        %3134 = vmatpush.msra.mxu0 0.0
        %3135 = vmatpush.msra.mxu0 0.0
        %3136 = vmatpush.msra.mxu0 0.0
        %3137 = vmatpush.msra.mxu0 0.0
        %3138 = vmatpush.msra.mxu0 0.0
        %3139 = vmatpush.msra.mxu0 %v3128
        %3140 = vmatpush.msra.mxu0 %v3100
        %3141 = vmatpush.msra.mxu0 %v3099
        %3142 = vmatpush.msra.mxu0 %v3098
        %3143 = vmatpush.msra.mxu0 %v3097
        %3144 = vmatpush.msra.mxu0 %v3096
        %3145 = vmatpush.msra.mxu0 %v3095
        %3146 = vmatmul.f32.gmra.mxu0 %v3103
        %v3147 = vpop.f32.mrf.mxu0
        %v3148 = vadd.f32 0.0, %v3147
        %3149 = vmatmul.f32.gmra.mxu0 %v3106
        %v3150 = vpop.f32.mrf.mxu0
        %v3151 = vadd.f32 0.0, %v3150
        %3152 = vmatmul.f32.gmra.mxu0 %v3109
        %v3153 = vpop.f32.mrf.mxu0
        %v3154 = vadd.f32 0.0, %v3153
        %3155 = vmatmul.f32.gmra.mxu0 %v3112
        %v3156 = vpop.f32.mrf.mxu0
        %v3157 = vadd.f32 0.0, %v3156
        %3158 = vmatmul.f32.gmra.mxu0 %v3115
        %v3159 = vpop.f32.mrf.mxu0
        %v3160 = vadd.f32 0.0, %v3159
        %3161 = vmatmul.f32.gmra.mxu0 %v3118
        %v3162 = vpop.f32.mrf.mxu0
        %v3163 = vadd.f32 0.0, %v3162
        %3164 = vmatmul.f32.gmra.mxu0 %v3121
        %v3165 = vpop.f32.mrf.mxu0
        %v3166 = vadd.f32 0.0, %v3165
        %3167 = vmatmul.f32.gmra.mxu0 %v3124
        %v3168 = vpop.f32.mrf.mxu0
        %v3169 = vadd.f32 0.0, %v3168
        %3170 = vdwg.mxu0
        %v3172 = vsel %vm2962, %v3071, 0
        %v3175 = vsel %vm2962, %v3072, 0
        %v3178 = vsel %vm2962, %v3073, 0
        %v3181 = vsel %vm2962, %v3074, 0
        %v3184 = vsel %vm2962, %v3075, 0
        %v3187 = vsel %vm2962, %v3076, 0
        %v3190 = vsel %vm2962, %v3077, 0
        %v3193 = vsel %vm2962, %v3078, 0
        %v3196 = vsel %vm3126, %v3085, 0
        %3198 = vmatpush.msra.mxu0 0.0
        %3199 = vmatpush.msra.mxu0 0.0
        %3200 = vmatpush.msra.mxu0 0.0
        %3201 = vmatpush.msra.mxu0 0.0
        %3202 = vmatpush.msra.mxu0 0.0
        %3203 = vmatpush.msra.mxu0 0.0
        %3204 = vmatpush.msra.mxu0 0.0
        %3205 = vmatpush.msra.mxu0 0.0
        %3206 = vmatpush.msra.mxu0 0.0
        %3207 = vmatpush.msra.mxu0 %v3196
        %3208 = vmatpush.msra.mxu0 %v3084
        %3209 = vmatpush.msra.mxu0 %v3083
        %3210 = vmatpush.msra.mxu0 %v3082
        %3211 = vmatpush.msra.mxu0 %v3081
        %3212 = vmatpush.msra.mxu0 %v3080
        %3213 = vmatpush.msra.mxu0 %v3079
        %3214 = vmatmul.f32.gmra.mxu0 %v3172
        %v3215 = vpop.f32.mrf.mxu0
        %v3216 = vadd.f32 %v3148, %v3215
        %3217 = vmatmul.f32.gmra.mxu0 %v3175
        %v3218 = vpop.f32.mrf.mxu0
        %v3219 = vadd.f32 %v3151, %v3218
        %3220 = vmatmul.f32.gmra.mxu0 %v3178
        %v3221 = vpop.f32.mrf.mxu0
        %v3222 = vadd.f32 %v3154, %v3221
        %3223 = vmatmul.f32.gmra.mxu0 %v3181
        %v3224 = vpop.f32.mrf.mxu0
        %v3225 = vadd.f32 %v3157, %v3224
        %3226 = vmatmul.f32.gmra.mxu0 %v3184
        %v3227 = vpop.f32.mrf.mxu0
        %v3228 = vadd.f32 %v3160, %v3227
        %3229 = vmatmul.f32.gmra.mxu0 %v3187
        %v3230 = vpop.f32.mrf.mxu0
        %v3231 = vadd.f32 %v3163, %v3230
        %3232 = vmatmul.f32.gmra.mxu0 %v3190
        %v3233 = vpop.f32.mrf.mxu0
        %v3234 = vadd.f32 %v3166, %v3233
        %3235 = vmatmul.f32.gmra.mxu0 %v3193
        %v3236 = vpop.f32.mrf.mxu0
        %v3237 = vadd.f32 %v3169, %v3236
        %3238 = vdwg.mxu0
        %v3239 = vld [vmem:[%s3070 + $0x2] sm:$0xff]
        %v3240 = vld [vmem:[%s3070 + $0x12] sm:$0xff]
        %v3241 = vld [vmem:[%s3070 + $0x22] sm:$0xff]
        %v3242 = vld [vmem:[%s3070 + $0x32] sm:$0xff]
        %v3243 = vld [vmem:[%s3070 + $0x42] sm:$0xff]
        %v3244 = vld [vmem:[%s3070 + $0x52] sm:$0xff]
        %v3245 = vld [vmem:[%s3070 + $0x62] sm:$0xff]
        %v3246 = vld [vmem:[%s3070 + $0x72] sm:$0xff]
        %s3247 = scalar_lea.vmem %s3, 112
        %v3248 = vld [vmem:[%s3247] sm:$0xff]
        %v3249 = vld [vmem:[%s3247 + $0x8] sm:$0xff]
        %v3250 = vld [vmem:[%s3247 + $0x10] sm:$0xff]
        %v3251 = vld [vmem:[%s3247 + $0x18] sm:$0xff]
        %v3252 = vld [vmem:[%s3247 + $0x20] sm:$0xff]
        %v3253 = vld [vmem:[%s3247 + $0x28] sm:$0xff]
        %v3254 = vld [vmem:[%s3247 + $0x30] sm:$0x3]
        %v3256 = vsel %vm2962, %v3239, 0
        %v3259 = vsel %vm2962, %v3240, 0
        %v3262 = vsel %vm2962, %v3241, 0
        %v3265 = vsel %vm2962, %v3242, 0
        %v3268 = vsel %vm2962, %v3243, 0
        %v3271 = vsel %vm2962, %v3244, 0
        %v3274 = vsel %vm2962, %v3245, 0
        %v3277 = vsel %vm2962, %v3246, 0
        %v3280 = vsel %vm3126, %v3254, 0
        %3282 = vmatpush.msra.mxu0 0.0
        %3283 = vmatpush.msra.mxu0 0.0
        %3284 = vmatpush.msra.mxu0 0.0
        %3285 = vmatpush.msra.mxu0 0.0
        %3286 = vmatpush.msra.mxu0 0.0
        %3287 = vmatpush.msra.mxu0 0.0
        %3288 = vmatpush.msra.mxu0 0.0
        %3289 = vmatpush.msra.mxu0 0.0
        %3290 = vmatpush.msra.mxu0 0.0
        %3291 = vmatpush.msra.mxu0 %v3280
        %3292 = vmatpush.msra.mxu0 %v3253
        %3293 = vmatpush.msra.mxu0 %v3252
        %3294 = vmatpush.msra.mxu0 %v3251
        %3295 = vmatpush.msra.mxu0 %v3250
        %3296 = vmatpush.msra.mxu0 %v3249
        %3297 = vmatpush.msra.mxu0 %v3248
        %3298 = vmatmul.f32.gmra.mxu0 %v3256
        %v3299 = vpop.f32.mrf.mxu0
        %v3300 = vadd.f32 0.0, %v3299
        %3301 = vmatmul.f32.gmra.mxu0 %v3259
        %v3302 = vpop.f32.mrf.mxu0
        %v3303 = vadd.f32 0.0, %v3302
        %3304 = vmatmul.f32.gmra.mxu0 %v3262
        %v3305 = vpop.f32.mrf.mxu0
        %v3306 = vadd.f32 0.0, %v3305
        %3307 = vmatmul.f32.gmra.mxu0 %v3265
        %v3308 = vpop.f32.mrf.mxu0
        %v3309 = vadd.f32 0.0, %v3308
        %3310 = vmatmul.f32.gmra.mxu0 %v3268
        %v3311 = vpop.f32.mrf.mxu0
        %v3312 = vadd.f32 0.0, %v3311
        %3313 = vmatmul.f32.gmra.mxu0 %v3271
        %v3314 = vpop.f32.mrf.mxu0
        %v3315 = vadd.f32 0.0, %v3314
        %3316 = vmatmul.f32.gmra.mxu0 %v3274
        %v3317 = vpop.f32.mrf.mxu0
        %v3318 = vadd.f32 0.0, %v3317
        %3319 = vmatmul.f32.gmra.mxu0 %v3277
        %v3320 = vpop.f32.mrf.mxu0
        %v3321 = vadd.f32 0.0, %v3320
        %3322 = vdwg.mxu0
        %v3323 = vadd.f32 %v3216, %v3300
        %v3324 = vadd.f32 %v3219, %v3303
        %v3325 = vadd.f32 %v3222, %v3306
        %v3326 = vadd.f32 %v3225, %v3309
        %v3327 = vadd.f32 %v3228, %v3312
        %v3328 = vadd.f32 %v3231, %v3315
        %v3329 = vadd.f32 %v3234, %v3318
        %v3330 = vadd.f32 %v3237, %v3321
        %s3331 = sadd.s32 16, %s3069
        %s3332 = scalar_lea.vmem [#allocation3], %s3331
        %v3333 = vld [vmem:[%s3332] sm:$0xff]
        %v3334 = vld [vmem:[%s3332 + $0x10] sm:$0xff]
        %v3335 = vld [vmem:[%s3332 + $0x20] sm:$0xff]
        %v3336 = vld [vmem:[%s3332 + $0x30] sm:$0xff]
        %v3337 = vld [vmem:[%s3332 + $0x40] sm:$0xff]
        %v3338 = vld [vmem:[%s3332 + $0x50] sm:$0xff]
        %v3339 = vld [vmem:[%s3332 + $0x60] sm:$0xff]
        %v3340 = vld [vmem:[%s3332 + $0x70] sm:$0xff]
        %s3341 = scalar_lea.vmem %s3, 168
        %v3342 = vld [vmem:[%s3341] sm:$0xff]
        %v3343 = vld [vmem:[%s3341 + $0x8] sm:$0xff]
        %v3344 = vld [vmem:[%s3341 + $0x10] sm:$0xff]
        %v3345 = vld [vmem:[%s3341 + $0x18] sm:$0xff]
        %v3346 = vld [vmem:[%s3341 + $0x20] sm:$0xff]
        %v3347 = vld [vmem:[%s3341 + $0x28] sm:$0xff]
        %v3348 = vld [vmem:[%s3341 + $0x30] sm:$0x3]
        %v3350 = vsel %vm2962, %v3333, 0
        %v3353 = vsel %vm2962, %v3334, 0
        %v3356 = vsel %vm2962, %v3335, 0
        %v3359 = vsel %vm2962, %v3336, 0
        %v3362 = vsel %vm2962, %v3337, 0
        %v3365 = vsel %vm2962, %v3338, 0
        %v3368 = vsel %vm2962, %v3339, 0
        %v3371 = vsel %vm2962, %v3340, 0
        %v3374 = vsel %vm3126, %v3348, 0
        %3376 = vmatpush.msra.mxu0 0.0
        %3377 = vmatpush.msra.mxu0 0.0
        %3378 = vmatpush.msra.mxu0 0.0
        %3379 = vmatpush.msra.mxu0 0.0
        %3380 = vmatpush.msra.mxu0 0.0
        %3381 = vmatpush.msra.mxu0 0.0
        %3382 = vmatpush.msra.mxu0 0.0
        %3383 = vmatpush.msra.mxu0 0.0
        %3384 = vmatpush.msra.mxu0 0.0
        %3385 = vmatpush.msra.mxu0 %v3374
        %3386 = vmatpush.msra.mxu0 %v3347
        %3387 = vmatpush.msra.mxu0 %v3346
        %3388 = vmatpush.msra.mxu0 %v3345
        %3389 = vmatpush.msra.mxu0 %v3344
        %3390 = vmatpush.msra.mxu0 %v3343
        %3391 = vmatpush.msra.mxu0 %v3342
        %3392 = vmatmul.f32.gmra.mxu0 %v3350
        %v3393 = vpop.f32.mrf.mxu0
        %v3394 = vadd.f32 0.0, %v3393
        %3395 = vmatmul.f32.gmra.mxu0 %v3353
        %v3396 = vpop.f32.mrf.mxu0
        %v3397 = vadd.f32 0.0, %v3396
        %3398 = vmatmul.f32.gmra.mxu0 %v3356
        %v3399 = vpop.f32.mrf.mxu0
        %v3400 = vadd.f32 0.0, %v3399
        %3401 = vmatmul.f32.gmra.mxu0 %v3359
        %v3402 = vpop.f32.mrf.mxu0
        %v3403 = vadd.f32 0.0, %v3402
        %3404 = vmatmul.f32.gmra.mxu0 %v3362
        %v3405 = vpop.f32.mrf.mxu0
        %v3406 = vadd.f32 0.0, %v3405
        %3407 = vmatmul.f32.gmra.mxu0 %v3365
        %v3408 = vpop.f32.mrf.mxu0
        %v3409 = vadd.f32 0.0, %v3408
        %3410 = vmatmul.f32.gmra.mxu0 %v3368
        %v3411 = vpop.f32.mrf.mxu0
        %v3412 = vadd.f32 0.0, %v3411
        %3413 = vmatmul.f32.gmra.mxu0 %v3371
        %v3414 = vpop.f32.mrf.mxu0
        %v3415 = vadd.f32 0.0, %v3414
        %3416 = vdwg.mxu0
        %v3417 = vadd.f32 %v3323, %v3394
        %v3418 = vadd.f32 %v3324, %v3397
        %v3419 = vadd.f32 %v3325, %v3400
        %v3420 = vadd.f32 %v3326, %v3403
        %v3421 = vadd.f32 %v3327, %v3406
        %v3422 = vadd.f32 %v3328, %v3409
        %v3423 = vadd.f32 %v3329, %v3412
        %v3424 = vadd.f32 %v3330, %v3415
        %v3425 = vld [vmem:[%s3332 + $0x1] sm:$0xff]
        %v3426 = vld [vmem:[%s3332 + $0x11] sm:$0xff]
        %v3427 = vld [vmem:[%s3332 + $0x21] sm:$0xff]
        %v3428 = vld [vmem:[%s3332 + $0x31] sm:$0xff]
        %v3429 = vld [vmem:[%s3332 + $0x41] sm:$0xff]
        %v3430 = vld [vmem:[%s3332 + $0x51] sm:$0xff]
        %v3431 = vld [vmem:[%s3332 + $0x61] sm:$0xff]
        %v3432 = vld [vmem:[%s3332 + $0x71] sm:$0xff]
        %s3433 = scalar_lea.vmem %s3, 224
        %v3434 = vld [vmem:[%s3433] sm:$0xff]
        %v3435 = vld [vmem:[%s3433 + $0x8] sm:$0xff]
        %v3436 = vld [vmem:[%s3433 + $0x10] sm:$0xff]
        %v3437 = vld [vmem:[%s3433 + $0x18] sm:$0xff]
        %v3438 = vld [vmem:[%s3433 + $0x20] sm:$0xff]
        %v3439 = vld [vmem:[%s3433 + $0x28] sm:$0xff]
        %v3440 = vld [vmem:[%s3433 + $0x30] sm:$0x3]
        %v3442 = vsel %vm2962, %v3425, 0
        %v3445 = vsel %vm2962, %v3426, 0
        %v3448 = vsel %vm2962, %v3427, 0
        %v3451 = vsel %vm2962, %v3428, 0
        %v3454 = vsel %vm2962, %v3429, 0
        %v3457 = vsel %vm2962, %v3430, 0
        %v3460 = vsel %vm2962, %v3431, 0
        %v3463 = vsel %vm2962, %v3432, 0
        %v3466 = vsel %vm3126, %v3440, 0
        %3468 = vmatpush.msra.mxu0 0.0
        %3469 = vmatpush.msra.mxu0 0.0
        %3470 = vmatpush.msra.mxu0 0.0
        %3471 = vmatpush.msra.mxu0 0.0
        %3472 = vmatpush.msra.mxu0 0.0
        %3473 = vmatpush.msra.mxu0 0.0
        %3474 = vmatpush.msra.mxu0 0.0
        %3475 = vmatpush.msra.mxu0 0.0
        %3476 = vmatpush.msra.mxu0 0.0
        %3477 = vmatpush.msra.mxu0 %v3466
        %3478 = vmatpush.msra.mxu0 %v3439
        %3479 = vmatpush.msra.mxu0 %v3438
        %3480 = vmatpush.msra.mxu0 %v3437
        %3481 = vmatpush.msra.mxu0 %v3436
        %3482 = vmatpush.msra.mxu0 %v3435
        %3483 = vmatpush.msra.mxu0 %v3434
        %3484 = vmatmul.f32.gmra.mxu0 %v3442
        %v3485 = vpop.f32.mrf.mxu0
        %v3486 = vadd.f32 0.0, %v3485
        %3487 = vmatmul.f32.gmra.mxu0 %v3445
        %v3488 = vpop.f32.mrf.mxu0
        %v3489 = vadd.f32 0.0, %v3488
        %3490 = vmatmul.f32.gmra.mxu0 %v3448
        %v3491 = vpop.f32.mrf.mxu0
        %v3492 = vadd.f32 0.0, %v3491
        %3493 = vmatmul.f32.gmra.mxu0 %v3451
        %v3494 = vpop.f32.mrf.mxu0
        %v3495 = vadd.f32 0.0, %v3494
        %3496 = vmatmul.f32.gmra.mxu0 %v3454
        %v3497 = vpop.f32.mrf.mxu0
        %v3498 = vadd.f32 0.0, %v3497
        %3499 = vmatmul.f32.gmra.mxu0 %v3457
        %v3500 = vpop.f32.mrf.mxu0
        %v3501 = vadd.f32 0.0, %v3500
        %3502 = vmatmul.f32.gmra.mxu0 %v3460
        %v3503 = vpop.f32.mrf.mxu0
        %v3504 = vadd.f32 0.0, %v3503
        %3505 = vmatmul.f32.gmra.mxu0 %v3463
        %v3506 = vpop.f32.mrf.mxu0
        %v3507 = vadd.f32 0.0, %v3506
        %3508 = vdwg.mxu0
        %v3509 = vadd.f32 %v3417, %v3486
        %v3510 = vadd.f32 %v3418, %v3489
        %v3511 = vadd.f32 %v3419, %v3492
        %v3512 = vadd.f32 %v3420, %v3495
        %v3513 = vadd.f32 %v3421, %v3498
        %v3514 = vadd.f32 %v3422, %v3501
        %v3515 = vadd.f32 %v3423, %v3504
        %v3516 = vadd.f32 %v3424, %v3507
        %v3517 = vld [vmem:[%s3332 + $0x2] sm:$0xff]
        %v3518 = vld [vmem:[%s3332 + $0x12] sm:$0xff]
        %v3519 = vld [vmem:[%s3332 + $0x22] sm:$0xff]
        %v3520 = vld [vmem:[%s3332 + $0x32] sm:$0xff]
        %v3521 = vld [vmem:[%s3332 + $0x42] sm:$0xff]
        %v3522 = vld [vmem:[%s3332 + $0x52] sm:$0xff]
        %v3523 = vld [vmem:[%s3332 + $0x62] sm:$0xff]
        %v3524 = vld [vmem:[%s3332 + $0x72] sm:$0xff]
        %s3525 = scalar_lea.vmem %s3, 280
        %v3526 = vld [vmem:[%s3525] sm:$0xff]
        %v3527 = vld [vmem:[%s3525 + $0x8] sm:$0xff]
        %v3528 = vld [vmem:[%s3525 + $0x10] sm:$0xff]
        %v3529 = vld [vmem:[%s3525 + $0x18] sm:$0xff]
        %v3530 = vld [vmem:[%s3525 + $0x20] sm:$0xff]
        %v3531 = vld [vmem:[%s3525 + $0x28] sm:$0xff]
        %v3532 = vld [vmem:[%s3525 + $0x30] sm:$0x3]
        %v3534 = vsel %vm2962, %v3517, 0
        %v3537 = vsel %vm2962, %v3518, 0
        %v3540 = vsel %vm2962, %v3519, 0
        %v3543 = vsel %vm2962, %v3520, 0
        %v3546 = vsel %vm2962, %v3521, 0
        %v3549 = vsel %vm2962, %v3522, 0
        %v3552 = vsel %vm2962, %v3523, 0
        %v3555 = vsel %vm2962, %v3524, 0
        %v3558 = vsel %vm3126, %v3532, 0
        %3560 = vmatpush.msra.mxu0 0.0
        %3561 = vmatpush.msra.mxu0 0.0
        %3562 = vmatpush.msra.mxu0 0.0
        %3563 = vmatpush.msra.mxu0 0.0
        %3564 = vmatpush.msra.mxu0 0.0
        %3565 = vmatpush.msra.mxu0 0.0
        %3566 = vmatpush.msra.mxu0 0.0
        %3567 = vmatpush.msra.mxu0 0.0
        %3568 = vmatpush.msra.mxu0 0.0
        %3569 = vmatpush.msra.mxu0 %v3558
        %3570 = vmatpush.msra.mxu0 %v3531
        %3571 = vmatpush.msra.mxu0 %v3530
        %3572 = vmatpush.msra.mxu0 %v3529
        %3573 = vmatpush.msra.mxu0 %v3528
        %3574 = vmatpush.msra.mxu0 %v3527
        %3575 = vmatpush.msra.mxu0 %v3526
        %3576 = vmatmul.f32.gmra.mxu0 %v3534
        %v3577 = vpop.f32.mrf.mxu0
        %v3578 = vadd.f32 0.0, %v3577
        %3579 = vmatmul.f32.gmra.mxu0 %v3537
        %v3580 = vpop.f32.mrf.mxu0
        %v3581 = vadd.f32 0.0, %v3580
        %3582 = vmatmul.f32.gmra.mxu0 %v3540
        %v3583 = vpop.f32.mrf.mxu0
        %v3584 = vadd.f32 0.0, %v3583
        %3585 = vmatmul.f32.gmra.mxu0 %v3543
        %v3586 = vpop.f32.mrf.mxu0
        %v3587 = vadd.f32 0.0, %v3586
        %3588 = vmatmul.f32.gmra.mxu0 %v3546
        %v3589 = vpop.f32.mrf.mxu0
        %v3590 = vadd.f32 0.0, %v3589
        %3591 = vmatmul.f32.gmra.mxu0 %v3549
        %v3592 = vpop.f32.mrf.mxu0
        %v3593 = vadd.f32 0.0, %v3592
        %3594 = vmatmul.f32.gmra.mxu0 %v3552
        %v3595 = vpop.f32.mrf.mxu0
        %v3596 = vadd.f32 0.0, %v3595
        %3597 = vmatmul.f32.gmra.mxu0 %v3555
        %v3598 = vpop.f32.mrf.mxu0
        %v3599 = vadd.f32 0.0, %v3598
        %3600 = vdwg.mxu0
        %v3601 = vadd.f32 %v3509, %v3578
        %v3602 = vadd.f32 %v3510, %v3581
        %v3603 = vadd.f32 %v3511, %v3584
        %v3604 = vadd.f32 %v3512, %v3587
        %v3605 = vadd.f32 %v3513, %v3590
        %v3606 = vadd.f32 %v3514, %v3593
        %v3607 = vadd.f32 %v3515, %v3596
        %v3608 = vadd.f32 %v3516, %v3599
        %s3609 = sadd.s32 32, %s3069
        %s3610 = scalar_lea.vmem [#allocation3], %s3609
        %v3611 = vld [vmem:[%s3610] sm:$0xff]
        %v3612 = vld [vmem:[%s3610 + $0x10] sm:$0xff]
        %v3613 = vld [vmem:[%s3610 + $0x20] sm:$0xff]
        %v3614 = vld [vmem:[%s3610 + $0x30] sm:$0xff]
        %v3615 = vld [vmem:[%s3610 + $0x40] sm:$0xff]
        %v3616 = vld [vmem:[%s3610 + $0x50] sm:$0xff]
        %v3617 = vld [vmem:[%s3610 + $0x60] sm:$0xff]
        %v3618 = vld [vmem:[%s3610 + $0x70] sm:$0xff]
        %s3619 = scalar_lea.vmem %s3, 336
        %v3620 = vld [vmem:[%s3619] sm:$0xff]
        %v3621 = vld [vmem:[%s3619 + $0x8] sm:$0xff]
        %v3622 = vld [vmem:[%s3619 + $0x10] sm:$0xff]
        %v3623 = vld [vmem:[%s3619 + $0x18] sm:$0xff]
        %v3624 = vld [vmem:[%s3619 + $0x20] sm:$0xff]
        %v3625 = vld [vmem:[%s3619 + $0x28] sm:$0xff]
        %v3626 = vld [vmem:[%s3619 + $0x30] sm:$0x3]
        %v3628 = vsel %vm2962, %v3611, 0
        %v3631 = vsel %vm2962, %v3612, 0
        %v3634 = vsel %vm2962, %v3613, 0
        %v3637 = vsel %vm2962, %v3614, 0
        %v3640 = vsel %vm2962, %v3615, 0
        %v3643 = vsel %vm2962, %v3616, 0
        %v3646 = vsel %vm2962, %v3617, 0
        %v3649 = vsel %vm2962, %v3618, 0
        %v3652 = vsel %vm3126, %v3626, 0
        %3654 = vmatpush.msra.mxu0 0.0
        %3655 = vmatpush.msra.mxu0 0.0
        %3656 = vmatpush.msra.mxu0 0.0
        %3657 = vmatpush.msra.mxu0 0.0
        %3658 = vmatpush.msra.mxu0 0.0
        %3659 = vmatpush.msra.mxu0 0.0
        %3660 = vmatpush.msra.mxu0 0.0
        %3661 = vmatpush.msra.mxu0 0.0
        %3662 = vmatpush.msra.mxu0 0.0
        %3663 = vmatpush.msra.mxu0 %v3652
        %3664 = vmatpush.msra.mxu0 %v3625
        %3665 = vmatpush.msra.mxu0 %v3624
        %3666 = vmatpush.msra.mxu0 %v3623
        %3667 = vmatpush.msra.mxu0 %v3622
        %3668 = vmatpush.msra.mxu0 %v3621
        %3669 = vmatpush.msra.mxu0 %v3620
        %3670 = vmatmul.f32.gmra.mxu0 %v3628
        %v3671 = vpop.f32.mrf.mxu0
        %v3672 = vadd.f32 0.0, %v3671
        %3673 = vmatmul.f32.gmra.mxu0 %v3631
        %v3674 = vpop.f32.mrf.mxu0
        %v3675 = vadd.f32 0.0, %v3674
        %3676 = vmatmul.f32.gmra.mxu0 %v3634
        %v3677 = vpop.f32.mrf.mxu0
        %v3678 = vadd.f32 0.0, %v3677
        %3679 = vmatmul.f32.gmra.mxu0 %v3637
        %v3680 = vpop.f32.mrf.mxu0
        %v3681 = vadd.f32 0.0, %v3680
        %3682 = vmatmul.f32.gmra.mxu0 %v3640
        %v3683 = vpop.f32.mrf.mxu0
        %v3684 = vadd.f32 0.0, %v3683
        %3685 = vmatmul.f32.gmra.mxu0 %v3643
        %v3686 = vpop.f32.mrf.mxu0
        %v3687 = vadd.f32 0.0, %v3686
        %3688 = vmatmul.f32.gmra.mxu0 %v3646
        %v3689 = vpop.f32.mrf.mxu0
        %v3690 = vadd.f32 0.0, %v3689
        %3691 = vmatmul.f32.gmra.mxu0 %v3649
        %v3692 = vpop.f32.mrf.mxu0
        %v3693 = vadd.f32 0.0, %v3692
        %3694 = vdwg.mxu0
        %v3695 = vadd.f32 %v3601, %v3672
        %v3696 = vadd.f32 %v3602, %v3675
        %v3697 = vadd.f32 %v3603, %v3678
        %v3698 = vadd.f32 %v3604, %v3681
        %v3699 = vadd.f32 %v3605, %v3684
        %v3700 = vadd.f32 %v3606, %v3687
        %v3701 = vadd.f32 %v3607, %v3690
        %v3702 = vadd.f32 %v3608, %v3693
        %v3703 = vld [vmem:[%s3610 + $0x1] sm:$0xff]
        %v3704 = vld [vmem:[%s3610 + $0x11] sm:$0xff]
        %v3705 = vld [vmem:[%s3610 + $0x21] sm:$0xff]
        %v3706 = vld [vmem:[%s3610 + $0x31] sm:$0xff]
        %v3707 = vld [vmem:[%s3610 + $0x41] sm:$0xff]
        %v3708 = vld [vmem:[%s3610 + $0x51] sm:$0xff]
        %v3709 = vld [vmem:[%s3610 + $0x61] sm:$0xff]
        %v3710 = vld [vmem:[%s3610 + $0x71] sm:$0xff]
        %s3711 = scalar_lea.vmem %s3, 392
        %v3712 = vld [vmem:[%s3711] sm:$0xff]
        %v3713 = vld [vmem:[%s3711 + $0x8] sm:$0xff]
        %v3714 = vld [vmem:[%s3711 + $0x10] sm:$0xff]
        %v3715 = vld [vmem:[%s3711 + $0x18] sm:$0xff]
        %v3716 = vld [vmem:[%s3711 + $0x20] sm:$0xff]
        %v3717 = vld [vmem:[%s3711 + $0x28] sm:$0xff]
        %v3718 = vld [vmem:[%s3711 + $0x30] sm:$0x3]
        %v3720 = vsel %vm2962, %v3703, 0
        %v3723 = vsel %vm2962, %v3704, 0
        %v3726 = vsel %vm2962, %v3705, 0
        %v3729 = vsel %vm2962, %v3706, 0
        %v3732 = vsel %vm2962, %v3707, 0
        %v3735 = vsel %vm2962, %v3708, 0
        %v3738 = vsel %vm2962, %v3709, 0
        %v3741 = vsel %vm2962, %v3710, 0
        %v3744 = vsel %vm3126, %v3718, 0
        %3746 = vmatpush.msra.mxu0 0.0
        %3747 = vmatpush.msra.mxu0 0.0
        %3748 = vmatpush.msra.mxu0 0.0
        %3749 = vmatpush.msra.mxu0 0.0
        %3750 = vmatpush.msra.mxu0 0.0
        %3751 = vmatpush.msra.mxu0 0.0
        %3752 = vmatpush.msra.mxu0 0.0
        %3753 = vmatpush.msra.mxu0 0.0
        %3754 = vmatpush.msra.mxu0 0.0
        %3755 = vmatpush.msra.mxu0 %v3744
        %3756 = vmatpush.msra.mxu0 %v3717
        %3757 = vmatpush.msra.mxu0 %v3716
        %3758 = vmatpush.msra.mxu0 %v3715
        %3759 = vmatpush.msra.mxu0 %v3714
        %3760 = vmatpush.msra.mxu0 %v3713
        %3761 = vmatpush.msra.mxu0 %v3712
        %3762 = vmatmul.f32.gmra.mxu0 %v3720
        %v3763 = vpop.f32.mrf.mxu0
        %v3764 = vadd.f32 0.0, %v3763
        %3765 = vmatmul.f32.gmra.mxu0 %v3723
        %v3766 = vpop.f32.mrf.mxu0
        %v3767 = vadd.f32 0.0, %v3766
        %3768 = vmatmul.f32.gmra.mxu0 %v3726
        %v3769 = vpop.f32.mrf.mxu0
        %v3770 = vadd.f32 0.0, %v3769
        %3771 = vmatmul.f32.gmra.mxu0 %v3729
        %v3772 = vpop.f32.mrf.mxu0
        %v3773 = vadd.f32 0.0, %v3772
        %3774 = vmatmul.f32.gmra.mxu0 %v3732
        %v3775 = vpop.f32.mrf.mxu0
        %v3776 = vadd.f32 0.0, %v3775
        %3777 = vmatmul.f32.gmra.mxu0 %v3735
        %v3778 = vpop.f32.mrf.mxu0
        %v3779 = vadd.f32 0.0, %v3778
        %3780 = vmatmul.f32.gmra.mxu0 %v3738
        %v3781 = vpop.f32.mrf.mxu0
        %v3782 = vadd.f32 0.0, %v3781
        %3783 = vmatmul.f32.gmra.mxu0 %v3741
        %v3784 = vpop.f32.mrf.mxu0
        %v3785 = vadd.f32 0.0, %v3784
        %3786 = vdwg.mxu0
        %v3787 = vadd.f32 %v3695, %v3764
        %v3788 = vadd.f32 %v3696, %v3767
        %v3789 = vadd.f32 %v3697, %v3770
        %v3790 = vadd.f32 %v3698, %v3773
        %v3791 = vadd.f32 %v3699, %v3776
        %v3792 = vadd.f32 %v3700, %v3779
        %v3793 = vadd.f32 %v3701, %v3782
        %v3794 = vadd.f32 %v3702, %v3785
        %v3795 = vld [vmem:[%s3610 + $0x2] sm:$0xff]
        %v3796 = vld [vmem:[%s3610 + $0x12] sm:$0xff]
        %v3797 = vld [vmem:[%s3610 + $0x22] sm:$0xff]
        %v3798 = vld [vmem:[%s3610 + $0x32] sm:$0xff]
        %v3799 = vld [vmem:[%s3610 + $0x42] sm:$0xff]
        %v3800 = vld [vmem:[%s3610 + $0x52] sm:$0xff]
        %v3801 = vld [vmem:[%s3610 + $0x62] sm:$0xff]
        %v3802 = vld [vmem:[%s3610 + $0x72] sm:$0xff]
        %s3803 = scalar_lea.vmem %s3, 448
        %v3804 = vld [vmem:[%s3803] sm:$0xff]
        %v3805 = vld [vmem:[%s3803 + $0x8] sm:$0xff]
        %v3806 = vld [vmem:[%s3803 + $0x10] sm:$0xff]
        %v3807 = vld [vmem:[%s3803 + $0x18] sm:$0xff]
        %v3808 = vld [vmem:[%s3803 + $0x20] sm:$0xff]
        %v3809 = vld [vmem:[%s3803 + $0x28] sm:$0xff]
        %v3810 = vld [vmem:[%s3803 + $0x30] sm:$0x3]
        %v3812 = vsel %vm2962, %v3795, 0
        %v3815 = vsel %vm2962, %v3796, 0
        %v3818 = vsel %vm2962, %v3797, 0
        %v3821 = vsel %vm2962, %v3798, 0
        %v3824 = vsel %vm2962, %v3799, 0
        %v3827 = vsel %vm2962, %v3800, 0
        %v3830 = vsel %vm2962, %v3801, 0
        %v3833 = vsel %vm2962, %v3802, 0
        %v3836 = vsel %vm3126, %v3810, 0
        %3838 = vmatpush.msra.mxu0 0.0
        %3839 = vmatpush.msra.mxu0 0.0
        %3840 = vmatpush.msra.mxu0 0.0
        %3841 = vmatpush.msra.mxu0 0.0
        %3842 = vmatpush.msra.mxu0 0.0
        %3843 = vmatpush.msra.mxu0 0.0
        %3844 = vmatpush.msra.mxu0 0.0
        %3845 = vmatpush.msra.mxu0 0.0
        %3846 = vmatpush.msra.mxu0 0.0
        %3847 = vmatpush.msra.mxu0 %v3836
        %3848 = vmatpush.msra.mxu0 %v3809
        %3849 = vmatpush.msra.mxu0 %v3808
        %3850 = vmatpush.msra.mxu0 %v3807
        %3851 = vmatpush.msra.mxu0 %v3806
        %3852 = vmatpush.msra.mxu0 %v3805
        %3853 = vmatpush.msra.mxu0 %v3804
        %3854 = vmatmul.f32.gmra.mxu0 %v3812
        %v3855 = vpop.f32.mrf.mxu0
        %v3856 = vadd.f32 0.0, %v3855
        %3857 = vmatmul.f32.gmra.mxu0 %v3815
        %v3858 = vpop.f32.mrf.mxu0
        %v3859 = vadd.f32 0.0, %v3858
        %3860 = vmatmul.f32.gmra.mxu0 %v3818
        %v3861 = vpop.f32.mrf.mxu0
        %v3862 = vadd.f32 0.0, %v3861
        %3863 = vmatmul.f32.gmra.mxu0 %v3821
        %v3864 = vpop.f32.mrf.mxu0
        %v3865 = vadd.f32 0.0, %v3864
        %3866 = vmatmul.f32.gmra.mxu0 %v3824
        %v3867 = vpop.f32.mrf.mxu0
        %v3868 = vadd.f32 0.0, %v3867
        %3869 = vmatmul.f32.gmra.mxu0 %v3827
        %v3870 = vpop.f32.mrf.mxu0
        %v3871 = vadd.f32 0.0, %v3870
        %3872 = vmatmul.f32.gmra.mxu0 %v3830
        %v3873 = vpop.f32.mrf.mxu0
        %v3874 = vadd.f32 0.0, %v3873
        %3875 = vmatmul.f32.gmra.mxu0 %v3833
        %v3876 = vpop.f32.mrf.mxu0
        %v3877 = vadd.f32 0.0, %v3876
        %3878 = vdwg.mxu0
        %v3879 = vadd.f32 %v3787, %v3856
        %v3880 = vadd.f32 %v3788, %v3859
        %v3881 = vadd.f32 %v3789, %v3862
        %v3882 = vadd.f32 %v3790, %v3865
        %v3883 = vadd.f32 %v3791, %v3868
        %v3884 = vadd.f32 %v3792, %v3871
        %v3885 = vadd.f32 %v3793, %v3874
        %v3886 = vadd.f32 %v3794, %v3877
        %s3887 = smul.u32 %s3064, 64
        %s3888 = scalar_lea.vmem [#allocation4], %s3887
        %vm3889 = vcmask 818176
        %3890 = vst.msk [vmem:[%s3888] sm:$0xff] %vm3889, %v3879
        %3891 = vst.msk [vmem:[%s3888 + $0x8] sm:$0xff] %vm3889, %v3880
        %3892 = vst.msk [vmem:[%s3888 + $0x10] sm:$0xff] %vm3889, %v3881
        %3893 = vst.msk [vmem:[%s3888 + $0x18] sm:$0xff] %vm3889, %v3882
        %3894 = vst.msk [vmem:[%s3888 + $0x20] sm:$0xff] %vm3889, %v3883
        %3895 = vst.msk [vmem:[%s3888 + $0x28] sm:$0xff] %vm3889, %v3884
        %3896 = vst.msk [vmem:[%s3888 + $0x30] sm:$0xff] %vm3889, %v3885
        %3897 = vst.msk [vmem:[%s3888 + $0x38] sm:$0xff] %vm3889, %v3886
      $region60: #{_forward_impl.1} parent=47 // loop_footer
        %s3068 = sadd.s32 1, %s3064
      $region61: #{_forward_impl.1} parent=47 // loop_footer_branch
        %3063 = sbr.rel target = $region57
      $region62: #{_forward_impl.1} parent=47 // loop_exit
        _
      %v3898 = vld [vmem:[#allocation4] sm:$0x1]
      %v3899 = vld [vmem:[#allocation4 + $0x40] sm:$0x1]
      %v3900 = vld [vmem:[#allocation4 + $0x80] sm:$0x1]
      %v3901 = vld [vmem:[#allocation4 + $0x1] sm:$0x1]
      %v3902 = vld [vmem:[#allocation4 + $0x41] sm:$0x1]
      %v3903 = vld [vmem:[#allocation4 + $0x81] sm:$0x1]
      %v3904 = vmax.f32 %v3898, %v3901
      %v3905 = vmax.f32 %v3899, %v3902
      %v3906 = vmax.f32 %v3900, %v3903
      %s3907 = scalar_lea.vmem [#allocation4], 8
      %v3908 = vld [vmem:[%s3907] sm:$0x1]
      %v3909 = vld [vmem:[%s3907 + $0x40] sm:$0x1]
      %v3910 = vld [vmem:[%s3907 + $0x80] sm:$0x1]
      %v3911 = vld [vmem:[%s3907 + $0x1] sm:$0x1]
      %v3912 = vld [vmem:[%s3907 + $0x41] sm:$0x1]
      %v3913 = vld [vmem:[%s3907 + $0x81] sm:$0x1]
      %v3914 = vmax.f32 %v3908, %v3911
      %v3915 = vmax.f32 %v3909, %v3912
      %v3916 = vmax.f32 %v3910, %v3913
      %v3917 = vmax.f32 %v3904, %v3914
      %v3918 = vmax.f32 %v3905, %v3915
      %v3919 = vmax.f32 %v3906, %v3916
      %v3921 = vperm.slane %v284, 0
      %v3923 = vadd.f32 %v3917, %v3921
      %v3924 = vadd.f32 %v3918, %v3921
      %v3925 = vadd.f32 %v3919, %v3921
      %v3926 = vmax.f32 %v3923, 0.0
      %v3927 = vmax.f32 %v3924, 0.0
      %v3928 = vmax.f32 %v3925, 0.0
      %v3932 = vrot.slane %v3927, 7
      %vm3933 = vcmask 1041409
      %v3934 = vsel %vm3933, %v3932, %v3926
      %vm3935 = vcmask 1045509
      %v3936 = vsel %vm3935, %v3932, %v3934
      %v3937 = vrot.slane %v3928, 6
      %vm3938 = vcmask 1042434
      %v3939 = vsel %vm3938, %v3937, %v3936
      %vm3940 = vcmask 1046534
      %v3941 = vsel %vm3940, %v3937, %v3939
      %vm3943 = vcmask 813056
      %3944 = vst.msk [vmem:[#allocation5] sm:$0x7] %vm3943, %v3941
      %v3945 = vld [vmem:[#allocation4 + $0x2] sm:$0x1]
      %v3946 = vld [vmem:[#allocation4 + $0x42] sm:$0x1]
      %v3947 = vld [vmem:[#allocation4 + $0x82] sm:$0x1]
      %v3948 = vld [vmem:[#allocation4 + $0x3] sm:$0x1]
      %v3949 = vld [vmem:[#allocation4 + $0x43] sm:$0x1]
      %v3950 = vld [vmem:[#allocation4 + $0x83] sm:$0x1]
      %v3951 = vmax.f32 %v3945, %v3948
      %v3952 = vmax.f32 %v3946, %v3949
      %v3953 = vmax.f32 %v3947, %v3950
      %v3954 = vld [vmem:[%s3907 + $0x2] sm:$0x1]
      %v3955 = vld [vmem:[%s3907 + $0x42] sm:$0x1]
      %v3956 = vld [vmem:[%s3907 + $0x82] sm:$0x1]
      %v3957 = vld [vmem:[%s3907 + $0x3] sm:$0x1]
      %v3958 = vld [vmem:[%s3907 + $0x43] sm:$0x1]
      %v3959 = vld [vmem:[%s3907 + $0x83] sm:$0x1]
      %v3960 = vmax.f32 %v3954, %v3957
      %v3961 = vmax.f32 %v3955, %v3958
      %v3962 = vmax.f32 %v3956, %v3959
      %v3963 = vmax.f32 %v3951, %v3960
      %v3964 = vmax.f32 %v3952, %v3961
      %v3965 = vmax.f32 %v3953, %v3962
      %v3966 = vadd.f32 %v3963, %v3921
      %v3967 = vadd.f32 %v3964, %v3921
      %v3968 = vadd.f32 %v3965, %v3921
      %v3969 = vmax.f32 %v3966, 0.0
      %v3970 = vmax.f32 %v3967, 0.0
      %v3971 = vmax.f32 %v3968, 0.0
      %v3975 = vrot.slane %v3970, 7
      %v3976 = vsel %vm3933, %v3975, %v3969
      %v3977 = vsel %vm3935, %v3975, %v3976
      %v3978 = vrot.slane %v3971, 6
      %v3979 = vsel %vm3938, %v3978, %v3977
      %v3980 = vsel %vm3940, %v3978, %v3979
      %3981 = vrot.lane.b32.xlu0 %v3980, 100
      %v3982 = vpop.permute.xlu0 %3981
      %v3983 = vrot.slane %v3982, 4
      %vm3984 = vcmask 818176
      %v3985 = vsel %vm3984, %v3983, %v3982
      %vm3987 = vcmask 1043232
      %vm3988 = vcmask 587780
      %vm3989 = vmor %vm3988, %vm3987
      %3990 = vst.msk [vmem:[#allocation5] sm:$0x77] %vm3989, %v3985
      %v3991 = vld [vmem:[#allocation4 + $0x4] sm:$0x1]
      %v3992 = vld [vmem:[#allocation4 + $0x44] sm:$0x1]
      %v3993 = vld [vmem:[#allocation4 + $0x84] sm:$0x1]
      %v3994 = vld [vmem:[#allocation4 + $0x5] sm:$0x1]
      %v3995 = vld [vmem:[#allocation4 + $0x45] sm:$0x1]
      %v3996 = vld [vmem:[#allocation4 + $0x85] sm:$0x1]
      %v3997 = vmax.f32 %v3991, %v3994
      %v3998 = vmax.f32 %v3992, %v3995
      %v3999 = vmax.f32 %v3993, %v3996
      %v4000 = vld [vmem:[%s3907 + $0x4] sm:$0x1]
      %v4001 = vld [vmem:[%s3907 + $0x44] sm:$0x1]
      %v4002 = vld [vmem:[%s3907 + $0x84] sm:$0x1]
      %v4003 = vld [vmem:[%s3907 + $0x5] sm:$0x1]
      %v4004 = vld [vmem:[%s3907 + $0x45] sm:$0x1]
      %v4005 = vld [vmem:[%s3907 + $0x85] sm:$0x1]
      %v4006 = vmax.f32 %v4000, %v4003
      %v4007 = vmax.f32 %v4001, %v4004
      %v4008 = vmax.f32 %v4002, %v4005
      %v4009 = vmax.f32 %v3997, %v4006
      %v4010 = vmax.f32 %v3998, %v4007
      %v4011 = vmax.f32 %v3999, %v4008
      %v4012 = vadd.f32 %v4009, %v3921
      %v4013 = vadd.f32 %v4010, %v3921
      %v4014 = vadd.f32 %v4011, %v3921
      %v4015 = vmax.f32 %v4012, 0.0
      %v4016 = vmax.f32 %v4013, 0.0
      %v4017 = vmax.f32 %v4014, 0.0
      %v4021 = vrot.slane %v4016, 7
      %v4022 = vsel %vm3933, %v4021, %v4015
      %v4023 = vsel %vm3935, %v4021, %v4022
      %v4024 = vrot.slane %v4017, 6
      %v4025 = vsel %vm3938, %v4024, %v4023
      %v4026 = vsel %vm3940, %v4024, %v4025
      %4027 = vrot.lane.b32.xlu0 %v4026, 72
      %v4028 = vpop.permute.xlu0 %4027
      %v4029 = vrot.slane %v4028, 4
      %vm4030 = vcmask 588800
      %v4031 = vsel %vm4030, %v4029, %v4028
      %vm4033 = vcmask 1043008
      %vm4034 = vcmask 358404
      %vm4035 = vmor %vm4034, %vm4033
      %4036 = vst.msk [vmem:[#allocation5 + $0x4] sm:$0x77] %vm4035, %v4031
      %v4037 = vld [vmem:[#allocation4 + $0x6] sm:$0x1]
      %v4038 = vld [vmem:[#allocation4 + $0x46] sm:$0x1]
      %v4039 = vld [vmem:[#allocation4 + $0x86] sm:$0x1]
      %v4040 = vld [vmem:[#allocation4 + $0x7] sm:$0x1]
      %v4041 = vld [vmem:[#allocation4 + $0x47] sm:$0x1]
      %v4042 = vld [vmem:[#allocation4 + $0x87] sm:$0x1]
      %v4043 = vmax.f32 %v4037, %v4040
      %v4044 = vmax.f32 %v4038, %v4041
      %v4045 = vmax.f32 %v4039, %v4042
      %v4046 = vld [vmem:[%s3907 + $0x6] sm:$0x1]
      %v4047 = vld [vmem:[%s3907 + $0x46] sm:$0x1]
      %v4048 = vld [vmem:[%s3907 + $0x86] sm:$0x1]
      %v4049 = vld [vmem:[%s3907 + $0x7] sm:$0x1]
      %v4050 = vld [vmem:[%s3907 + $0x47] sm:$0x1]
      %v4051 = vld [vmem:[%s3907 + $0x87] sm:$0x1]
      %v4052 = vmax.f32 %v4046, %v4049
      %v4053 = vmax.f32 %v4047, %v4050
      %v4054 = vmax.f32 %v4048, %v4051
      %v4055 = vmax.f32 %v4043, %v4052
      %v4056 = vmax.f32 %v4044, %v4053
      %v4057 = vmax.f32 %v4045, %v4054
      %v4058 = vadd.f32 %v4055, %v3921
      %v4059 = vadd.f32 %v4056, %v3921
      %v4060 = vadd.f32 %v4057, %v3921
      %v4061 = vmax.f32 %v4058, 0.0
      %v4062 = vmax.f32 %v4059, 0.0
      %v4063 = vmax.f32 %v4060, 0.0
      %v4067 = vrot.slane %v4062, 7
      %v4068 = vsel %vm3933, %v4067, %v4061
      %v4069 = vsel %vm3935, %v4067, %v4068
      %v4070 = vrot.slane %v4063, 6
      %v4071 = vsel %vm3938, %v4070, %v4069
      %v4072 = vsel %vm3940, %v4070, %v4071
      %4073 = vrot.lane.b32.xlu0 %v4072, 44
      %v4074 = vpop.permute.xlu0 %4073
      %v4075 = vrot.slane %v4074, 4
      %vm4076 = vcmask 359424
      %v4077 = vsel %vm4076, %v4075, %v4074
      %vm4079 = vcmask 1042784
      %vm4080 = vcmask 129028
      %vm4081 = vmor %vm4080, %vm4079
      %4082 = vst.msk [vmem:[#allocation5 + $0x8] sm:$0x77] %vm4081, %v4077
      %s4083 = scalar_lea.vmem [#allocation4], 16
      %v4084 = vld [vmem:[%s4083] sm:$0x1]
      %v4085 = vld [vmem:[%s4083 + $0x40] sm:$0x1]
      %v4086 = vld [vmem:[%s4083 + $0x80] sm:$0x1]
      %v4087 = vld [vmem:[%s4083 + $0x1] sm:$0x1]
      %v4088 = vld [vmem:[%s4083 + $0x41] sm:$0x1]
      %v4089 = vld [vmem:[%s4083 + $0x81] sm:$0x1]
      %v4090 = vmax.f32 %v4084, %v4087
      %v4091 = vmax.f32 %v4085, %v4088
      %v4092 = vmax.f32 %v4086, %v4089
      %s4093 = scalar_lea.vmem [#allocation4], 24
      %v4094 = vld [vmem:[%s4093] sm:$0x1]
      %v4095 = vld [vmem:[%s4093 + $0x40] sm:$0x1]
      %v4096 = vld [vmem:[%s4093 + $0x80] sm:$0x1]
      %v4097 = vld [vmem:[%s4093 + $0x1] sm:$0x1]
      %v4098 = vld [vmem:[%s4093 + $0x41] sm:$0x1]
      %v4099 = vld [vmem:[%s4093 + $0x81] sm:$0x1]
      %v4100 = vmax.f32 %v4094, %v4097
      %v4101 = vmax.f32 %v4095, %v4098
      %v4102 = vmax.f32 %v4096, %v4099
      %v4103 = vmax.f32 %v4090, %v4100
      %v4104 = vmax.f32 %v4091, %v4101
      %v4105 = vmax.f32 %v4092, %v4102
      %v4106 = vadd.f32 %v4103, %v3921
      %v4107 = vadd.f32 %v4104, %v3921
      %v4108 = vadd.f32 %v4105, %v3921
      %v4109 = vmax.f32 %v4106, 0.0
      %v4110 = vmax.f32 %v4107, 0.0
      %v4111 = vmax.f32 %v4108, 0.0
      %v4115 = vrot.slane %v4110, 7
      %v4116 = vsel %vm3933, %v4115, %v4109
      %v4117 = vsel %vm3935, %v4115, %v4116
      %v4118 = vrot.slane %v4111, 6
      %v4119 = vsel %vm3938, %v4118, %v4117
      %v4120 = vsel %vm3940, %v4118, %v4119
      %4121 = vrot.lane.b32.xlu0 %v4120, 16
      %v4122 = vpop.permute.xlu0 %4121
      %vm4124 = vcmask 944256
      %4125 = vst.msk [vmem:[#allocation5 + $0xc] sm:$0x7] %vm4124, %v4122
      %v4126 = vld [vmem:[%s4083 + $0x2] sm:$0x1]
      %v4127 = vld [vmem:[%s4083 + $0x42] sm:$0x1]
      %v4128 = vld [vmem:[%s4083 + $0x82] sm:$0x1]
      %v4129 = vld [vmem:[%s4083 + $0x3] sm:$0x1]
      %v4130 = vld [vmem:[%s4083 + $0x43] sm:$0x1]
      %v4131 = vld [vmem:[%s4083 + $0x83] sm:$0x1]
      %v4132 = vmax.f32 %v4126, %v4129
      %v4133 = vmax.f32 %v4127, %v4130
      %v4134 = vmax.f32 %v4128, %v4131
      %v4135 = vld [vmem:[%s4093 + $0x2] sm:$0x1]
      %v4136 = vld [vmem:[%s4093 + $0x42] sm:$0x1]
      %v4137 = vld [vmem:[%s4093 + $0x82] sm:$0x1]
      %v4138 = vld [vmem:[%s4093 + $0x3] sm:$0x1]
      %v4139 = vld [vmem:[%s4093 + $0x43] sm:$0x1]
      %v4140 = vld [vmem:[%s4093 + $0x83] sm:$0x1]
      %v4141 = vmax.f32 %v4135, %v4138
      %v4142 = vmax.f32 %v4136, %v4139
      %v4143 = vmax.f32 %v4137, %v4140
      %v4144 = vmax.f32 %v4132, %v4141
      %v4145 = vmax.f32 %v4133, %v4142
      %v4146 = vmax.f32 %v4134, %v4143
      %v4147 = vadd.f32 %v4144, %v3921
      %v4148 = vadd.f32 %v4145, %v3921
      %v4149 = vadd.f32 %v4146, %v3921
      %v4150 = vmax.f32 %v4147, 0.0
      %v4151 = vmax.f32 %v4148, 0.0
      %v4152 = vmax.f32 %v4149, 0.0
      %v4156 = vrot.slane %v4151, 7
      %v4157 = vsel %vm3933, %v4156, %v4150
      %v4158 = vsel %vm3935, %v4156, %v4157
      %v4159 = vrot.slane %v4152, 6
      %v4160 = vsel %vm3938, %v4159, %v4158
      %v4161 = vsel %vm3940, %v4159, %v4160
      %4162 = vrot.lane.b32.xlu0 %v4161, 116
      %v4163 = vpop.permute.xlu0 %4162
      %v4164 = vrot.slane %v4163, 4
      %vm4165 = vcmask 949248
      %v4166 = vsel %vm4165, %v4164, %v4163
      %vm4168 = vcmask 1043360
      %vm4169 = vcmask 718852
      %vm4170 = vmor %vm4169, %vm4168
      %4171 = vst.msk [vmem:[#allocation5 + $0xc] sm:$0x77] %vm4170, %v4166
      %v4172 = vld [vmem:[%s4083 + $0x4] sm:$0x1]
      %v4173 = vld [vmem:[%s4083 + $0x44] sm:$0x1]
      %v4174 = vld [vmem:[%s4083 + $0x84] sm:$0x1]
      %v4175 = vld [vmem:[%s4083 + $0x5] sm:$0x1]
      %v4176 = vld [vmem:[%s4083 + $0x45] sm:$0x1]
      %v4177 = vld [vmem:[%s4083 + $0x85] sm:$0x1]
      %v4178 = vmax.f32 %v4172, %v4175
      %v4179 = vmax.f32 %v4173, %v4176
      %v4180 = vmax.f32 %v4174, %v4177
      %v4181 = vld [vmem:[%s4093 + $0x4] sm:$0x1]
      %v4182 = vld [vmem:[%s4093 + $0x44] sm:$0x1]
      %v4183 = vld [vmem:[%s4093 + $0x84] sm:$0x1]
      %v4184 = vld [vmem:[%s4093 + $0x5] sm:$0x1]
      %v4185 = vld [vmem:[%s4093 + $0x45] sm:$0x1]
      %v4186 = vld [vmem:[%s4093 + $0x85] sm:$0x1]
      %v4187 = vmax.f32 %v4181, %v4184
      %v4188 = vmax.f32 %v4182, %v4185
      %v4189 = vmax.f32 %v4183, %v4186
      %v4190 = vmax.f32 %v4178, %v4187
      %v4191 = vmax.f32 %v4179, %v4188
      %v4192 = vmax.f32 %v4180, %v4189
      %v4193 = vadd.f32 %v4190, %v3921
      %v4194 = vadd.f32 %v4191, %v3921
      %v4195 = vadd.f32 %v4192, %v3921
      %v4196 = vmax.f32 %v4193, 0.0
      %v4197 = vmax.f32 %v4194, 0.0
      %v4198 = vmax.f32 %v4195, 0.0
      %v4202 = vrot.slane %v4197, 7
      %v4203 = vsel %vm3933, %v4202, %v4196
      %v4204 = vsel %vm3935, %v4202, %v4203
      %v4205 = vrot.slane %v4198, 6
      %v4206 = vsel %vm3938, %v4205, %v4204
      %v4207 = vsel %vm3940, %v4205, %v4206
      %4208 = vrot.lane.b32.xlu0 %v4207, 88
      %v4209 = vpop.permute.xlu0 %4208
      %v4210 = vrot.slane %v4209, 4
      %vm4211 = vcmask 719872
      %v4212 = vsel %vm4211, %v4210, %v4209
      %vm4214 = vcmask 1043136
      %vm4215 = vcmask 489476
      %vm4216 = vmor %vm4215, %vm4214
      %4217 = vst.msk [vmem:[#allocation5 + $0x10] sm:$0x77] %vm4216, %v4212
      %v4218 = vld [vmem:[%s4083 + $0x6] sm:$0x1]
      %v4219 = vld [vmem:[%s4083 + $0x46] sm:$0x1]
      %v4220 = vld [vmem:[%s4083 + $0x86] sm:$0x1]
      %v4221 = vld [vmem:[%s4083 + $0x7] sm:$0x1]
      %v4222 = vld [vmem:[%s4083 + $0x47] sm:$0x1]
      %v4223 = vld [vmem:[%s4083 + $0x87] sm:$0x1]
      %v4224 = vmax.f32 %v4218, %v4221
      %v4225 = vmax.f32 %v4219, %v4222
      %v4226 = vmax.f32 %v4220, %v4223
      %v4227 = vld [vmem:[%s4093 + $0x6] sm:$0x1]
      %v4228 = vld [vmem:[%s4093 + $0x46] sm:$0x1]
      %v4229 = vld [vmem:[%s4093 + $0x86] sm:$0x1]
      %v4230 = vld [vmem:[%s4093 + $0x7] sm:$0x1]
      %v4231 = vld [vmem:[%s4093 + $0x47] sm:$0x1]
      %v4232 = vld [vmem:[%s4093 + $0x87] sm:$0x1]
      %v4233 = vmax.f32 %v4227, %v4230
      %v4234 = vmax.f32 %v4228, %v4231
      %v4235 = vmax.f32 %v4229, %v4232
      %v4236 = vmax.f32 %v4224, %v4233
      %v4237 = vmax.f32 %v4225, %v4234
      %v4238 = vmax.f32 %v4226, %v4235
      %v4239 = vadd.f32 %v4236, %v3921
      %v4240 = vadd.f32 %v4237, %v3921
      %v4241 = vadd.f32 %v4238, %v3921
      %v4242 = vmax.f32 %v4239, 0.0
      %v4243 = vmax.f32 %v4240, 0.0
      %v4244 = vmax.f32 %v4241, 0.0
      %v4248 = vrot.slane %v4243, 7
      %v4249 = vsel %vm3933, %v4248, %v4242
      %v4250 = vsel %vm3935, %v4248, %v4249
      %v4251 = vrot.slane %v4244, 6
      %v4252 = vsel %vm3938, %v4251, %v4250
      %v4253 = vsel %vm3940, %v4251, %v4252
      %4254 = vrot.lane.b32.xlu0 %v4253, 60
      %v4255 = vpop.permute.xlu0 %4254
      %v4256 = vrot.slane %v4255, 4
      %vm4257 = vcmask 490496
      %v4258 = vsel %vm4257, %v4256, %v4255
      %vm4260 = vcmask 1042912
      %vm4261 = vcmask 260100
      %vm4262 = vmor %vm4261, %vm4260
      %4263 = vst.msk [vmem:[#allocation5 + $0x14] sm:$0x77] %vm4262, %v4258
      %s4264 = scalar_lea.vmem [#allocation4], 32
      %v4265 = vld [vmem:[%s4264] sm:$0x1]
      %v4266 = vld [vmem:[%s4264 + $0x40] sm:$0x1]
      %v4267 = vld [vmem:[%s4264 + $0x80] sm:$0x1]
      %v4268 = vld [vmem:[%s4264 + $0x1] sm:$0x1]
      %v4269 = vld [vmem:[%s4264 + $0x41] sm:$0x1]
      %v4270 = vld [vmem:[%s4264 + $0x81] sm:$0x1]
      %v4271 = vmax.f32 %v4265, %v4268
      %v4272 = vmax.f32 %v4266, %v4269
      %v4273 = vmax.f32 %v4267, %v4270
      %s4274 = scalar_lea.vmem [#allocation4], 40
      %v4275 = vld [vmem:[%s4274] sm:$0x1]
      %v4276 = vld [vmem:[%s4274 + $0x40] sm:$0x1]
      %v4277 = vld [vmem:[%s4274 + $0x80] sm:$0x1]
      %v4278 = vld [vmem:[%s4274 + $0x1] sm:$0x1]
      %v4279 = vld [vmem:[%s4274 + $0x41] sm:$0x1]
      %v4280 = vld [vmem:[%s4274 + $0x81] sm:$0x1]
      %v4281 = vmax.f32 %v4275, %v4278
      %v4282 = vmax.f32 %v4276, %v4279
      %v4283 = vmax.f32 %v4277, %v4280
      %v4284 = vmax.f32 %v4271, %v4281
      %v4285 = vmax.f32 %v4272, %v4282
      %v4286 = vmax.f32 %v4273, %v4283
      %v4287 = vadd.f32 %v4284, %v3921
      %v4288 = vadd.f32 %v4285, %v3921
      %v4289 = vadd.f32 %v4286, %v3921
      %v4290 = vmax.f32 %v4287, 0.0
      %v4291 = vmax.f32 %v4288, 0.0
      %v4292 = vmax.f32 %v4289, 0.0
      %v4296 = vrot.slane %v4291, 7
      %v4297 = vsel %vm3933, %v4296, %v4290
      %v4298 = vsel %vm3935, %v4296, %v4297
      %v4299 = vrot.slane %v4292, 6
      %v4300 = vsel %vm3938, %v4299, %v4298
      %v4301 = vsel %vm3940, %v4299, %v4300
      %4302 = vrot.lane.b32.xlu0 %v4301, 32
      %v4303 = vpop.permute.xlu0 %4302
      %v4304 = vrot.slane %v4303, 4
      %vm4305 = vcmask 261120
      %v4306 = vsel %vm4305, %v4304, %v4303
      %vm4308 = vcmask 1042688
      %vm4309 = vcmask 30724
      %vm4310 = vmor %vm4309, %vm4308
      %4311 = vst.msk [vmem:[#allocation5 + $0x18] sm:$0x77] %vm4310, %v4306
      %v4312 = vld [vmem:[%s4264 + $0x2] sm:$0x1]
      %v4313 = vld [vmem:[%s4264 + $0x42] sm:$0x1]
      %v4314 = vld [vmem:[%s4264 + $0x82] sm:$0x1]
      %v4315 = vld [vmem:[%s4264 + $0x3] sm:$0x1]
      %v4316 = vld [vmem:[%s4264 + $0x43] sm:$0x1]
      %v4317 = vld [vmem:[%s4264 + $0x83] sm:$0x1]
      %v4318 = vmax.f32 %v4312, %v4315
      %v4319 = vmax.f32 %v4313, %v4316
      %v4320 = vmax.f32 %v4314, %v4317
      %v4321 = vld [vmem:[%s4274 + $0x2] sm:$0x1]
      %v4322 = vld [vmem:[%s4274 + $0x42] sm:$0x1]
      %v4323 = vld [vmem:[%s4274 + $0x82] sm:$0x1]
      %v4324 = vld [vmem:[%s4274 + $0x3] sm:$0x1]
      %v4325 = vld [vmem:[%s4274 + $0x43] sm:$0x1]
      %v4326 = vld [vmem:[%s4274 + $0x83] sm:$0x1]
      %v4327 = vmax.f32 %v4321, %v4324
      %v4328 = vmax.f32 %v4322, %v4325
      %v4329 = vmax.f32 %v4323, %v4326
      %v4330 = vmax.f32 %v4318, %v4327
      %v4331 = vmax.f32 %v4319, %v4328
      %v4332 = vmax.f32 %v4320, %v4329
      %v4333 = vadd.f32 %v4330, %v3921
      %v4334 = vadd.f32 %v4331, %v3921
      %v4335 = vadd.f32 %v4332, %v3921
      %v4336 = vmax.f32 %v4333, 0.0
      %v4337 = vmax.f32 %v4334, 0.0
      %v4338 = vmax.f32 %v4335, 0.0
      %v4342 = vrot.slane %v4337, 7
      %v4343 = vsel %vm3933, %v4342, %v4336
      %v4344 = vsel %vm3935, %v4342, %v4343
      %v4345 = vrot.slane %v4338, 6
      %v4346 = vsel %vm3938, %v4345, %v4344
      %v4347 = vsel %vm3940, %v4345, %v4346
      %4348 = vrot.lane.b32.xlu0 %v4347, 4
      %v4349 = vpop.permute.xlu0 %4348
      %vm4351 = vcmask 845856
      %4352 = vst.msk [vmem:[#allocation5 + $0x1c] sm:$0x7] %vm4351, %v4349
      %v4353 = vld [vmem:[%s4264 + $0x4] sm:$0x1]
      %v4354 = vld [vmem:[%s4264 + $0x44] sm:$0x1]
      %v4355 = vld [vmem:[%s4264 + $0x84] sm:$0x1]
      %v4356 = vld [vmem:[%s4264 + $0x5] sm:$0x1]
      %v4357 = vld [vmem:[%s4264 + $0x45] sm:$0x1]
      %v4358 = vld [vmem:[%s4264 + $0x85] sm:$0x1]
      %v4359 = vmax.f32 %v4353, %v4356
      %v4360 = vmax.f32 %v4354, %v4357
      %v4361 = vmax.f32 %v4355, %v4358
      %v4362 = vld [vmem:[%s4274 + $0x4] sm:$0x1]
      %v4363 = vld [vmem:[%s4274 + $0x44] sm:$0x1]
      %v4364 = vld [vmem:[%s4274 + $0x84] sm:$0x1]
      %v4365 = vld [vmem:[%s4274 + $0x5] sm:$0x1]
      %v4366 = vld [vmem:[%s4274 + $0x45] sm:$0x1]
      %v4367 = vld [vmem:[%s4274 + $0x85] sm:$0x1]
      %v4368 = vmax.f32 %v4362, %v4365
      %v4369 = vmax.f32 %v4363, %v4366
      %v4370 = vmax.f32 %v4364, %v4367
      %v4371 = vmax.f32 %v4359, %v4368
      %v4372 = vmax.f32 %v4360, %v4369
      %v4373 = vmax.f32 %v4361, %v4370
      %v4374 = vadd.f32 %v4371, %v3921
      %v4375 = vadd.f32 %v4372, %v3921
      %v4376 = vadd.f32 %v4373, %v3921
      %v4377 = vmax.f32 %v4374, 0.0
      %v4378 = vmax.f32 %v4375, 0.0
      %v4379 = vmax.f32 %v4376, 0.0
      %v4383 = vrot.slane %v4378, 7
      %v4384 = vsel %vm3933, %v4383, %v4377
      %v4385 = vsel %vm3935, %v4383, %v4384
      %v4386 = vrot.slane %v4379, 6
      %v4387 = vsel %vm3938, %v4386, %v4385
      %v4388 = vsel %vm3940, %v4386, %v4387
      %4389 = vrot.lane.b32.xlu0 %v4388, 104
      %v4390 = vpop.permute.xlu0 %4389
      %v4391 = vrot.slane %v4390, 4
      %vm4392 = vcmask 850944
      %v4393 = vsel %vm4392, %v4391, %v4390
      %vm4395 = vcmask 1043264
      %vm4396 = vcmask 620548
      %vm4397 = vmor %vm4396, %vm4395
      %4398 = vst.msk [vmem:[#allocation5 + $0x1c] sm:$0x77] %vm4397, %v4393
      %v4399 = vld [vmem:[%s4264 + $0x6] sm:$0x1]
      %v4400 = vld [vmem:[%s4264 + $0x46] sm:$0x1]
      %v4401 = vld [vmem:[%s4264 + $0x86] sm:$0x1]
      %v4402 = vld [vmem:[%s4264 + $0x7] sm:$0x1]
      %v4403 = vld [vmem:[%s4264 + $0x47] sm:$0x1]
      %v4404 = vld [vmem:[%s4264 + $0x87] sm:$0x1]
      %v4405 = vmax.f32 %v4399, %v4402
      %v4406 = vmax.f32 %v4400, %v4403
      %v4407 = vmax.f32 %v4401, %v4404
      %v4408 = vld [vmem:[%s4274 + $0x6] sm:$0x1]
      %v4409 = vld [vmem:[%s4274 + $0x46] sm:$0x1]
      %v4410 = vld [vmem:[%s4274 + $0x86] sm:$0x1]
      %v4411 = vld [vmem:[%s4274 + $0x7] sm:$0x1]
      %v4412 = vld [vmem:[%s4274 + $0x47] sm:$0x1]
      %v4413 = vld [vmem:[%s4274 + $0x87] sm:$0x1]
      %v4414 = vmax.f32 %v4408, %v4411
      %v4415 = vmax.f32 %v4409, %v4412
      %v4416 = vmax.f32 %v4410, %v4413
      %v4417 = vmax.f32 %v4405, %v4414
      %v4418 = vmax.f32 %v4406, %v4415
      %v4419 = vmax.f32 %v4407, %v4416
      %v4420 = vadd.f32 %v4417, %v3921
      %v4421 = vadd.f32 %v4418, %v3921
      %v4422 = vadd.f32 %v4419, %v3921
      %v4423 = vmax.f32 %v4420, 0.0
      %v4424 = vmax.f32 %v4421, 0.0
      %v4425 = vmax.f32 %v4422, 0.0
      %v4429 = vrot.slane %v4424, 7
      %v4430 = vsel %vm3933, %v4429, %v4423
      %v4431 = vsel %vm3935, %v4429, %v4430
      %v4432 = vrot.slane %v4425, 6
      %v4433 = vsel %vm3938, %v4432, %v4431
      %v4434 = vsel %vm3940, %v4432, %v4433
      %4435 = vrot.lane.b32.xlu0 %v4434, 76
      %v4436 = vpop.permute.xlu0 %4435
      %v4437 = vrot.slane %v4436, 4
      %vm4438 = vcmask 621568
      %v4439 = vsel %vm4438, %v4437, %v4436
      %vm4441 = vcmask 1043040
      %vm4442 = vcmask 391172
      %vm4443 = vmor %vm4442, %vm4441
      %4444 = vst.msk [vmem:[#allocation5 + $0x20] sm:$0x77] %vm4443, %v4439
      %s4445 = scalar_lea.vmem [#allocation4], 48
      %v4446 = vld [vmem:[%s4445] sm:$0x1]
      %v4447 = vld [vmem:[%s4445 + $0x40] sm:$0x1]
      %v4448 = vld [vmem:[%s4445 + $0x80] sm:$0x1]
      %v4449 = vld [vmem:[%s4445 + $0x1] sm:$0x1]
      %v4450 = vld [vmem:[%s4445 + $0x41] sm:$0x1]
      %v4451 = vld [vmem:[%s4445 + $0x81] sm:$0x1]
      %v4452 = vmax.f32 %v4446, %v4449
      %v4453 = vmax.f32 %v4447, %v4450
      %v4454 = vmax.f32 %v4448, %v4451
      %s4455 = scalar_lea.vmem [#allocation4], 56
      %v4456 = vld [vmem:[%s4455] sm:$0x1]
      %v4457 = vld [vmem:[%s4455 + $0x40] sm:$0x1]
      %v4458 = vld [vmem:[%s4455 + $0x80] sm:$0x1]
      %v4459 = vld [vmem:[%s4455 + $0x1] sm:$0x1]
      %v4460 = vld [vmem:[%s4455 + $0x41] sm:$0x1]
      %v4461 = vld [vmem:[%s4455 + $0x81] sm:$0x1]
      %v4462 = vmax.f32 %v4456, %v4459
      %v4463 = vmax.f32 %v4457, %v4460
      %v4464 = vmax.f32 %v4458, %v4461
      %v4465 = vmax.f32 %v4452, %v4462
      %v4466 = vmax.f32 %v4453, %v4463
      %v4467 = vmax.f32 %v4454, %v4464
      %v4468 = vadd.f32 %v4465, %v3921
      %v4469 = vadd.f32 %v4466, %v3921
      %v4470 = vadd.f32 %v4467, %v3921
      %v4471 = vmax.f32 %v4468, 0.0
      %v4472 = vmax.f32 %v4469, 0.0
      %v4473 = vmax.f32 %v4470, 0.0
      %v4477 = vrot.slane %v4472, 7
      %v4478 = vsel %vm3933, %v4477, %v4471
      %v4479 = vsel %vm3935, %v4477, %v4478
      %v4480 = vrot.slane %v4473, 6
      %v4481 = vsel %vm3938, %v4480, %v4479
      %v4482 = vsel %vm3940, %v4480, %v4481
      %4483 = vrot.lane.b32.xlu0 %v4482, 48
      %v4484 = vpop.permute.xlu0 %4483
      %v4485 = vrot.slane %v4484, 4
      %vm4486 = vcmask 392192
      %v4487 = vsel %vm4486, %v4485, %v4484
      %vm4489 = vcmask 1042816
      %vm4490 = vcmask 161796
      %vm4491 = vmor %vm4490, %vm4489
      %4492 = vst.msk [vmem:[#allocation5 + $0x24] sm:$0x77] %vm4491, %v4487
      %v4493 = vld [vmem:[%s4445 + $0x2] sm:$0x1]
      %v4494 = vld [vmem:[%s4445 + $0x42] sm:$0x1]
      %v4495 = vld [vmem:[%s4445 + $0x82] sm:$0x1]
      %v4496 = vld [vmem:[%s4445 + $0x3] sm:$0x1]
      %v4497 = vld [vmem:[%s4445 + $0x43] sm:$0x1]
      %v4498 = vld [vmem:[%s4445 + $0x83] sm:$0x1]
      %v4499 = vmax.f32 %v4493, %v4496
      %v4500 = vmax.f32 %v4494, %v4497
      %v4501 = vmax.f32 %v4495, %v4498
      %v4502 = vld [vmem:[%s4455 + $0x2] sm:$0x1]
      %v4503 = vld [vmem:[%s4455 + $0x42] sm:$0x1]
      %v4504 = vld [vmem:[%s4455 + $0x82] sm:$0x1]
      %v4505 = vld [vmem:[%s4455 + $0x3] sm:$0x1]
      %v4506 = vld [vmem:[%s4455 + $0x43] sm:$0x1]
      %v4507 = vld [vmem:[%s4455 + $0x83] sm:$0x1]
      %v4508 = vmax.f32 %v4502, %v4505
      %v4509 = vmax.f32 %v4503, %v4506
      %v4510 = vmax.f32 %v4504, %v4507
      %v4511 = vmax.f32 %v4499, %v4508
      %v4512 = vmax.f32 %v4500, %v4509
      %v4513 = vmax.f32 %v4501, %v4510
      %v4514 = vadd.f32 %v4511, %v3921
      %v4515 = vadd.f32 %v4512, %v3921
      %v4516 = vadd.f32 %v4513, %v3921
      %v4517 = vmax.f32 %v4514, 0.0
      %v4518 = vmax.f32 %v4515, 0.0
      %v4519 = vmax.f32 %v4516, 0.0
      %v4523 = vrot.slane %v4518, 7
      %v4524 = vsel %vm3933, %v4523, %v4517
      %v4525 = vsel %vm3935, %v4523, %v4524
      %v4526 = vrot.slane %v4519, 6
      %v4527 = vsel %vm3938, %v4526, %v4525
      %v4528 = vsel %vm3940, %v4526, %v4527
      %4529 = vrot.lane.b32.xlu0 %v4528, 20
      %v4530 = vpop.permute.xlu0 %4529
      %vm4532 = vcmask 977056
      %4533 = vst.msk [vmem:[#allocation5 + $0x28] sm:$0x7] %vm4532, %v4530
      %v4534 = vld [vmem:[%s4445 + $0x4] sm:$0x1]
      %v4535 = vld [vmem:[%s4445 + $0x44] sm:$0x1]
      %v4536 = vld [vmem:[%s4445 + $0x84] sm:$0x1]
      %v4537 = vld [vmem:[%s4445 + $0x5] sm:$0x1]
      %v4538 = vld [vmem:[%s4445 + $0x45] sm:$0x1]
      %v4539 = vld [vmem:[%s4445 + $0x85] sm:$0x1]
      %v4540 = vmax.f32 %v4534, %v4537
      %v4541 = vmax.f32 %v4535, %v4538
      %v4542 = vmax.f32 %v4536, %v4539
      %v4543 = vld [vmem:[%s4455 + $0x4] sm:$0x1]
      %v4544 = vld [vmem:[%s4455 + $0x44] sm:$0x1]
      %v4545 = vld [vmem:[%s4455 + $0x84] sm:$0x1]
      %v4546 = vld [vmem:[%s4455 + $0x5] sm:$0x1]
      %v4547 = vld [vmem:[%s4455 + $0x45] sm:$0x1]
      %v4548 = vld [vmem:[%s4455 + $0x85] sm:$0x1]
      %v4549 = vmax.f32 %v4543, %v4546
      %v4550 = vmax.f32 %v4544, %v4547
      %v4551 = vmax.f32 %v4545, %v4548
      %v4552 = vmax.f32 %v4540, %v4549
      %v4553 = vmax.f32 %v4541, %v4550
      %v4554 = vmax.f32 %v4542, %v4551
      %v4555 = vadd.f32 %v4552, %v3921
      %v4556 = vadd.f32 %v4553, %v3921
      %v4557 = vadd.f32 %v4554, %v3921
      %v4558 = vmax.f32 %v4555, 0.0
      %v4559 = vmax.f32 %v4556, 0.0
      %v4560 = vmax.f32 %v4557, 0.0
      %v4564 = vrot.slane %v4559, 7
      %v4565 = vsel %vm3933, %v4564, %v4558
      %v4566 = vsel %vm3935, %v4564, %v4565
      %v4567 = vrot.slane %v4560, 6
      %v4568 = vsel %vm3938, %v4567, %v4566
      %v4569 = vsel %vm3940, %v4567, %v4568
      %4570 = vrot.lane.b32.xlu0 %v4569, 120
      %v4571 = vpop.permute.xlu0 %4570
      %v4572 = vrot.slane %v4571, 4
      %vm4573 = vcmask 982016
      %v4574 = vsel %vm4573, %v4572, %v4571
      %vm4576 = vcmask 1043392
      %vm4577 = vcmask 751620
      %vm4578 = vmor %vm4577, %vm4576
      %4579 = vst.msk [vmem:[#allocation5 + $0x28] sm:$0x77] %vm4578, %v4574
      %v4580 = vld [vmem:[%s4445 + $0x6] sm:$0x1]
      %v4581 = vld [vmem:[%s4445 + $0x46] sm:$0x1]
      %v4582 = vld [vmem:[%s4445 + $0x86] sm:$0x1]
      %v4583 = vld [vmem:[%s4445 + $0x7] sm:$0x1]
      %v4584 = vld [vmem:[%s4445 + $0x47] sm:$0x1]
      %v4585 = vld [vmem:[%s4445 + $0x87] sm:$0x1]
      %v4586 = vmax.f32 %v4580, %v4583
      %v4587 = vmax.f32 %v4581, %v4584
      %v4588 = vmax.f32 %v4582, %v4585
      %v4589 = vld [vmem:[%s4455 + $0x6] sm:$0x1]
      %v4590 = vld [vmem:[%s4455 + $0x46] sm:$0x1]
      %v4591 = vld [vmem:[%s4455 + $0x86] sm:$0x1]
      %v4592 = vld [vmem:[%s4455 + $0x7] sm:$0x1]
      %v4593 = vld [vmem:[%s4455 + $0x47] sm:$0x1]
      %v4594 = vld [vmem:[%s4455 + $0x87] sm:$0x1]
      %v4595 = vmax.f32 %v4589, %v4592
      %v4596 = vmax.f32 %v4590, %v4593
      %v4597 = vmax.f32 %v4591, %v4594
      %v4598 = vmax.f32 %v4586, %v4595
      %v4599 = vmax.f32 %v4587, %v4596
      %v4600 = vmax.f32 %v4588, %v4597
      %v4601 = vadd.f32 %v4598, %v3921
      %v4602 = vadd.f32 %v4599, %v3921
      %v4603 = vadd.f32 %v4600, %v3921
      %v4604 = vmax.f32 %v4601, 0.0
      %v4605 = vmax.f32 %v4602, 0.0
      %v4606 = vmax.f32 %v4603, 0.0
      %v4610 = vrot.slane %v4605, 7
      %v4611 = vsel %vm3933, %v4610, %v4604
      %v4612 = vsel %vm3935, %v4610, %v4611
      %v4613 = vrot.slane %v4606, 6
      %v4614 = vsel %vm3938, %v4613, %v4612
      %v4615 = vsel %vm3940, %v4613, %v4614
      %4616 = vrot.lane.b32.xlu0 %v4615, 92
      %v4617 = vpop.permute.xlu0 %4616
      %v4618 = vrot.slane %v4617, 4
      %vm4619 = vcmask 752640
      %v4620 = vsel %vm4619, %v4618, %v4617
      %vm4622 = vcmask 1043168
      %vm4623 = vcmask 522244
      %vm4624 = vmor %vm4623, %vm4622
      %4625 = vst.msk [vmem:[#allocation5 + $0x2c] sm:$0x77] %vm4624, %v4620
      %v4626 = vld [vmem:[#allocation5] sm:$0x77]
      %v4627 = vld [vmem:[#allocation5 + $0x8] sm:$0x77]
      %v4628 = vld [vmem:[#allocation5 + $0x10] sm:$0x77]
      %v4629 = vld [vmem:[#allocation5 + $0x18] sm:$0x77]
      %v4630 = vld [vmem:[#allocation5 + $0x20] sm:$0x77]
      %v4631 = vld [vmem:[#allocation5 + $0x28] sm:$0x77]
      %v4632 = vld [vmem:[#allocation5 + $0x30] sm:$0x7]
      %v4633 = vld [vmem:[%s5] sm:$0xff]
      %v4634 = vld [vmem:[%s5 + $0x8] sm:$0xff]
      %v4635 = vld [vmem:[%s5 + $0x10] sm:$0xff]
      %v4636 = vld [vmem:[%s5 + $0x18] sm:$0xff]
      %v4637 = vld [vmem:[%s5 + $0x20] sm:$0xff]
      %v4638 = vld [vmem:[%s5 + $0x28] sm:$0xff]
      %v4639 = vld [vmem:[%s5 + $0x30] sm:$0xff]
      %v4640 = vld [vmem:[%s5 + $0x38] sm:$0xff]
      %v4641 = vld [vmem:[%s5 + $0x40] sm:$0xff]
      %v4642 = vld [vmem:[%s5 + $0x48] sm:$0xff]
      %v4643 = vld [vmem:[%s5 + $0x50] sm:$0xff]
      %v4644 = vld [vmem:[%s5 + $0x58] sm:$0xff]
      %v4645 = vld [vmem:[%s5 + $0x60] sm:$0xff]
      %v4646 = vld [vmem:[%s5 + $0x68] sm:$0xff]
      %v4647 = vld [vmem:[%s5 + $0x70] sm:$0xff]
      %v4648 = vld [vmem:[%s5 + $0x78] sm:$0xff]
      %v4649 = vld [vmem:[%s5 + $0x80] sm:$0xff]
      %v4650 = vld [vmem:[%s5 + $0x88] sm:$0xff]
      %v4651 = vld [vmem:[%s5 + $0x90] sm:$0xff]
      %v4652 = vld [vmem:[%s5 + $0x98] sm:$0xff]
      %v4653 = vld [vmem:[%s5 + $0xa0] sm:$0xff]
      %v4654 = vld [vmem:[%s5 + $0xa8] sm:$0xff]
      %v4655 = vld [vmem:[%s5 + $0xb0] sm:$0xff]
      %v4656 = vld [vmem:[%s5 + $0xb8] sm:$0xff]
      %v4657 = vld [vmem:[%s5 + $0xc0] sm:$0xff]
      %v4658 = vld [vmem:[%s5 + $0xc8] sm:$0xff]
      %v4659 = vld [vmem:[%s5 + $0xd0] sm:$0xff]
      %v4660 = vld [vmem:[%s5 + $0xd8] sm:$0xff]
      %v4661 = vld [vmem:[%s5 + $0xe0] sm:$0xff]
      %v4662 = vld [vmem:[%s5 + $0xe8] sm:$0xff]
      %v4663 = vld [vmem:[%s5 + $0xf0] sm:$0xff]
      %v4664 = vld [vmem:[%s5 + $0xf8] sm:$0xff]
      %v4665 = vld [vmem:[%s5 + $0x100] sm:$0xff]
      %v4666 = vld [vmem:[%s5 + $0x108] sm:$0xff]
      %v4667 = vld [vmem:[%s5 + $0x110] sm:$0xff]
      %v4668 = vld [vmem:[%s5 + $0x118] sm:$0xff]
      %v4669 = vld [vmem:[%s5 + $0x120] sm:$0xff]
      %v4670 = vld [vmem:[%s5 + $0x128] sm:$0xff]
      %v4671 = vld [vmem:[%s5 + $0x130] sm:$0xff]
      %v4672 = vld [vmem:[%s5 + $0x138] sm:$0xff]
      %v4673 = vld [vmem:[%s5 + $0x140] sm:$0xff]
      %v4674 = vld [vmem:[%s5 + $0x148] sm:$0xff]
      %v4675 = vld [vmem:[%s5 + $0x150] sm:$0xff]
      %v4676 = vld [vmem:[%s5 + $0x158] sm:$0xff]
      %v4677 = vld [vmem:[%s5 + $0x160] sm:$0xff]
      %v4678 = vld [vmem:[%s5 + $0x168] sm:$0xff]
      %v4679 = vld [vmem:[%s5 + $0x170] sm:$0xff]
      %v4680 = vld [vmem:[%s5 + $0x178] sm:$0xff]
      %v4681 = vld [vmem:[%s5 + $0x180] sm:$0xff]
      %v4682 = vld [vmem:[%s5 + $0x188] sm:$0xff]
      %v4683 = vld [vmem:[%s5 + $0x190] sm:$0xff]
      %v4684 = vld [vmem:[%s5 + $0x198] sm:$0xff]
      %v4685 = vld [vmem:[%s5 + $0x1a0] sm:$0xff]
      %v4686 = vld [vmem:[%s5 + $0x1a8] sm:$0xff]
      %v4687 = vld [vmem:[%s5 + $0x1b0] sm:$0xff]
      %v4688 = vld [vmem:[%s5 + $0x1b8] sm:$0xff]
      %v4689 = vld [vmem:[%s5 + $0x1c0] sm:$0xff]
      %v4690 = vld [vmem:[%s5 + $0x1c8] sm:$0xff]
      %v4691 = vld [vmem:[%s5 + $0x1d0] sm:$0xff]
      %v4692 = vld [vmem:[%s5 + $0x1d8] sm:$0xff]
      %v4693 = vld [vmem:[%s5 + $0x1e0] sm:$0xff]
      %v4694 = vld [vmem:[%s5 + $0x1e8] sm:$0xff]
      %v4695 = vld [vmem:[%s5 + $0x1f0] sm:$0xff]
      %v4696 = vld [vmem:[%s5 + $0x1f8] sm:$0xff]
      %v4697 = vld [vmem:[%s5 + $0x200] sm:$0xff]
      %v4698 = vld [vmem:[%s5 + $0x208] sm:$0xff]
      %v4699 = vld [vmem:[%s5 + $0x210] sm:$0xff]
      %v4700 = vld [vmem:[%s5 + $0x218] sm:$0xff]
      %v4701 = vld [vmem:[%s5 + $0x220] sm:$0xff]
      %v4702 = vld [vmem:[%s5 + $0x228] sm:$0xff]
      %v4703 = vld [vmem:[%s5 + $0x230] sm:$0xff]
      %v4704 = vld [vmem:[%s5 + $0x238] sm:$0xff]
      %v4705 = vld [vmem:[%s5 + $0x240] sm:$0xff]
      %v4706 = vld [vmem:[%s5 + $0x248] sm:$0xff]
      %v4707 = vld [vmem:[%s5 + $0x250] sm:$0xff]
      %v4708 = vld [vmem:[%s5 + $0x258] sm:$0xff]
      %v4709 = vld [vmem:[%s5 + $0x260] sm:$0xff]
      %v4710 = vld [vmem:[%s5 + $0x268] sm:$0xff]
      %v4711 = vld [vmem:[%s5 + $0x270] sm:$0xff]
      %v4712 = vld [vmem:[%s5 + $0x278] sm:$0xff]
      %v4713 = vld [vmem:[%s5 + $0x280] sm:$0xff]
      %v4714 = vld [vmem:[%s5 + $0x288] sm:$0xff]
      %v4715 = vld [vmem:[%s5 + $0x290] sm:$0xff]
      %v4716 = vld [vmem:[%s5 + $0x298] sm:$0xff]
      %v4717 = vld [vmem:[%s5 + $0x2a0] sm:$0xff]
      %v4718 = vld [vmem:[%s5 + $0x2a8] sm:$0xff]
      %v4719 = vld [vmem:[%s5 + $0x2b0] sm:$0xff]
      %v4720 = vld [vmem:[%s5 + $0x2b8] sm:$0xff]
      %v4721 = vld [vmem:[%s5 + $0x2c0] sm:$0xff]
      %v4722 = vld [vmem:[%s5 + $0x2c8] sm:$0xff]
      %v4723 = vld [vmem:[%s5 + $0x2d0] sm:$0xff]
      %v4724 = vld [vmem:[%s5 + $0x2d8] sm:$0xff]
      %v4725 = vld [vmem:[%s5 + $0x2e0] sm:$0xff]
      %v4726 = vld [vmem:[%s5 + $0x2e8] sm:$0xff]
      %v4727 = vld [vmem:[%s5 + $0x2f0] sm:$0xff]
      %v4728 = vld [vmem:[%s5 + $0x2f8] sm:$0xff]
      %v4729 = vld [vmem:[%s5 + $0x300] sm:$0xff]
      %v4730 = vld [vmem:[%s5 + $0x308] sm:$0xff]
      %v4731 = vld [vmem:[%s5 + $0x310] sm:$0xff]
      %v4732 = vld [vmem:[%s5 + $0x318] sm:$0xff]
      %v4733 = vld [vmem:[%s5 + $0x320] sm:$0xff]
      %v4734 = vld [vmem:[%s5 + $0x328] sm:$0xff]
      %v4735 = vld [vmem:[%s5 + $0x330] sm:$0xff]
      %v4736 = vld [vmem:[%s5 + $0x338] sm:$0xff]
      %v4737 = vld [vmem:[%s5 + $0x340] sm:$0xff]
      %v4738 = vld [vmem:[%s5 + $0x348] sm:$0xff]
      %v4739 = vld [vmem:[%s5 + $0x350] sm:$0xff]
      %v4740 = vld [vmem:[%s5 + $0x358] sm:$0xff]
      %v4741 = vld [vmem:[%s5 + $0x360] sm:$0xff]
      %v4742 = vld [vmem:[%s5 + $0x368] sm:$0xff]
      %v4743 = vld [vmem:[%s5 + $0x370] sm:$0xff]
      %v4744 = vld [vmem:[%s5 + $0x378] sm:$0xff]
      %v4745 = vld [vmem:[%s5 + $0x380] sm:$0xff]
      %v4746 = vld [vmem:[%s5 + $0x388] sm:$0xff]
      %v4747 = vld [vmem:[%s5 + $0x390] sm:$0xff]
      %v4748 = vld [vmem:[%s5 + $0x398] sm:$0xff]
      %v4749 = vld [vmem:[%s5 + $0x3a0] sm:$0xff]
      %v4750 = vld [vmem:[%s5 + $0x3a8] sm:$0xff]
      %v4751 = vld [vmem:[%s5 + $0x3b0] sm:$0xff]
      %v4752 = vld [vmem:[%s5 + $0x3b8] sm:$0xff]
      %v4753 = vld [vmem:[%s5 + $0x3c0] sm:$0xff]
      %v4754 = vld [vmem:[%s5 + $0x3c8] sm:$0xff]
      %v4755 = vld [vmem:[%s5 + $0x3d0] sm:$0xff]
      %v4756 = vld [vmem:[%s5 + $0x3d8] sm:$0xff]
      %v4757 = vld [vmem:[%s5 + $0x3e0] sm:$0xff]
      %v4758 = vld [vmem:[%s5 + $0x3e8] sm:$0xff]
      %v4759 = vld [vmem:[%s5 + $0x3f0] sm:$0xff]
      %v4760 = vld [vmem:[%s5 + $0x3f8] sm:$0xff]
      %v4761 = vld [vmem:[%s5 + $0x400] sm:$0xff]
      %v4762 = vld [vmem:[%s5 + $0x408] sm:$0xff]
      %v4763 = vld [vmem:[%s5 + $0x410] sm:$0xff]
      %v4764 = vld [vmem:[%s5 + $0x418] sm:$0xff]
      %v4765 = vld [vmem:[%s5 + $0x420] sm:$0xff]
      %v4766 = vld [vmem:[%s5 + $0x428] sm:$0xff]
      %v4767 = vld [vmem:[%s5 + $0x430] sm:$0xff]
      %v4768 = vld [vmem:[%s5 + $0x438] sm:$0xff]
      %v4769 = vld [vmem:[%s5 + $0x440] sm:$0xff]
      %v4770 = vld [vmem:[%s5 + $0x448] sm:$0xff]
      %v4771 = vld [vmem:[%s5 + $0x450] sm:$0xff]
      %v4772 = vld [vmem:[%s5 + $0x458] sm:$0xff]
      %v4773 = vld [vmem:[%s5 + $0x460] sm:$0xff]
      %v4774 = vld [vmem:[%s5 + $0x468] sm:$0xff]
      %v4775 = vld [vmem:[%s5 + $0x470] sm:$0xff]
      %v4776 = vld [vmem:[%s5 + $0x478] sm:$0xff]
      %v4777 = vld [vmem:[%s5 + $0x480] sm:$0xff]
      %v4778 = vld [vmem:[%s5 + $0x488] sm:$0xff]
      %v4779 = vld [vmem:[%s5 + $0x490] sm:$0xff]
      %v4780 = vld [vmem:[%s5 + $0x498] sm:$0xff]
      %v4781 = vld [vmem:[%s5 + $0x4a0] sm:$0xff]
      %v4782 = vld [vmem:[%s5 + $0x4a8] sm:$0xff]
      %v4783 = vld [vmem:[%s5 + $0x4b0] sm:$0xff]
      %v4784 = vld [vmem:[%s5 + $0x4b8] sm:$0xff]
      %v4785 = vld [vmem:[%s5 + $0x4c0] sm:$0xff]
      %v4786 = vld [vmem:[%s5 + $0x4c8] sm:$0xff]
      %v4787 = vld [vmem:[%s5 + $0x4d0] sm:$0xff]
      %v4788 = vld [vmem:[%s5 + $0x4d8] sm:$0xff]
      %v4789 = vld [vmem:[%s5 + $0x4e0] sm:$0xff]
      %v4790 = vld [vmem:[%s5 + $0x4e8] sm:$0xff]
      %v4791 = vld [vmem:[%s5 + $0x4f0] sm:$0xff]
      %v4792 = vld [vmem:[%s5 + $0x4f8] sm:$0xff]
      %v4793 = vld [vmem:[%s5 + $0x500] sm:$0xff]
      %v4794 = vld [vmem:[%s5 + $0x508] sm:$0xff]
      %v4795 = vld [vmem:[%s5 + $0x510] sm:$0xff]
      %v4796 = vld [vmem:[%s5 + $0x518] sm:$0xff]
      %v4797 = vld [vmem:[%s5 + $0x520] sm:$0xff]
      %v4798 = vld [vmem:[%s5 + $0x528] sm:$0xff]
      %v4799 = vld [vmem:[%s5 + $0x530] sm:$0xff]
      %v4800 = vld [vmem:[%s5 + $0x538] sm:$0xff]
      %v4801 = vld [vmem:[%s5 + $0x540] sm:$0xff]
      %v4802 = vld [vmem:[%s5 + $0x548] sm:$0xff]
      %v4803 = vld [vmem:[%s5 + $0x550] sm:$0xff]
      %v4804 = vld [vmem:[%s5 + $0x558] sm:$0xff]
      %v4805 = vld [vmem:[%s5 + $0x560] sm:$0xff]
      %v4806 = vld [vmem:[%s5 + $0x568] sm:$0xff]
      %v4807 = vld [vmem:[%s5 + $0x570] sm:$0xff]
      %v4808 = vld [vmem:[%s5 + $0x578] sm:$0xff]
      %v4809 = vld [vmem:[%s5 + $0x580] sm:$0xff]
      %v4810 = vld [vmem:[%s5 + $0x588] sm:$0xff]
      %v4811 = vld [vmem:[%s5 + $0x590] sm:$0xff]
      %v4812 = vld [vmem:[%s5 + $0x598] sm:$0xff]
      %v4813 = vld [vmem:[%s5 + $0x5a0] sm:$0xff]
      %v4814 = vld [vmem:[%s5 + $0x5a8] sm:$0xff]
      %v4815 = vld [vmem:[%s5 + $0x5b0] sm:$0xff]
      %v4816 = vld [vmem:[%s5 + $0x5b8] sm:$0xff]
      %v4817 = vld [vmem:[%s5 + $0x5c0] sm:$0xff]
      %v4818 = vld [vmem:[%s5 + $0x5c8] sm:$0xff]
      %v4819 = vld [vmem:[%s5 + $0x5d0] sm:$0xff]
      %v4820 = vld [vmem:[%s5 + $0x5d8] sm:$0xff]
      %v4821 = vld [vmem:[%s5 + $0x5e0] sm:$0xff]
      %v4822 = vld [vmem:[%s5 + $0x5e8] sm:$0xff]
      %v4823 = vld [vmem:[%s5 + $0x5f0] sm:$0xff]
      %v4824 = vld [vmem:[%s5 + $0x5f8] sm:$0xff]
      %v4825 = vld [vmem:[%s5 + $0x600] sm:$0xff]
      %v4826 = vld [vmem:[%s5 + $0x608] sm:$0xff]
      %v4827 = vld [vmem:[%s5 + $0x610] sm:$0xff]
      %v4828 = vld [vmem:[%s5 + $0x618] sm:$0xff]
      %v4829 = vld [vmem:[%s5 + $0x620] sm:$0xff]
      %v4830 = vld [vmem:[%s5 + $0x628] sm:$0xff]
      %v4831 = vld [vmem:[%s5 + $0x630] sm:$0xff]
      %v4832 = vld [vmem:[%s5 + $0x638] sm:$0xff]
      %v4833 = vld [vmem:[%s6] sm:$0x1]
      %v4835 = vperm.slane %v4833, 0
      %4844 = vst [vmem:[#allocation1] ss:$2 sm:$0xff] %v4626
      %s4845 = scalar_lea.vmem [#allocation1], 16
      %4846 = vst [vmem:[%s4845] ss:$2 sm:$0xff] %v4627
      %s4847 = scalar_lea.vmem [#allocation1], 32
      %4848 = vst [vmem:[%s4847] ss:$2 sm:$0xff] %v4628
      %s4849 = scalar_lea.vmem [#allocation1], 48
      %4850 = vst [vmem:[%s4849] ss:$2 sm:$0xff] %v4629
      %v4851 = vld.sshfl [vmem:[#allocation1] sm:$0xff pattern:$0x75316420]
      %v4852 = vld.sshfl [vmem:[#allocation1 + $0x8] sm:$0xff pattern:$0x75316420]
      %v4853 = vld.sshfl [vmem:[#allocation1 + $0x10] sm:$0xff pattern:$0x75316420]
      %v4854 = vld.sshfl [vmem:[#allocation1 + $0x18] sm:$0xff pattern:$0x75316420]
      %v4855 = vld.sshfl [vmem:[#allocation1 + $0x20] sm:$0xff pattern:$0x75316420]
      %v4856 = vld.sshfl [vmem:[#allocation1 + $0x28] sm:$0xff pattern:$0x75316420]
      %v4857 = vld.sshfl [vmem:[#allocation1 + $0x30] sm:$0xff pattern:$0x75316420]
      %v4858 = vld.sshfl [vmem:[#allocation1 + $0x38] sm:$0xff pattern:$0x75316420]
      %4859 = vst [vmem:[#allocation1] ss:$2 sm:$0xff] %v4630
      %4860 = vst [vmem:[%s4845] ss:$2 sm:$0xff] %v4631
      %4861 = vst [vmem:[%s4847] ss:$2 sm:$0xff] %v4632
      %v4862 = vld.sshfl [vmem:[#allocation1] sm:$0xff pattern:$0x75316420]
      %v4863 = vld.sshfl [vmem:[#allocation1 + $0x8] sm:$0xff pattern:$0x75316420]
      %v4864 = vld.sshfl [vmem:[#allocation1 + $0x10] sm:$0xff pattern:$0x75316420]
      %v4865 = vld.sshfl [vmem:[#allocation1 + $0x18] sm:$0xff pattern:$0x75316420]
      %v4866 = vld.sshfl [vmem:[#allocation1 + $0x20] sm:$0xff pattern:$0x75316420]
      %vm4879 = vcmask 523264
      %v4880 = vsel %vm4879, %v4866, 0
      %4882 = vmatpush.msra.mxu0 %v4648
      %4883 = vmatpush.msra.mxu0 %v4647
      %4884 = vmatpush.msra.mxu0 %v4646
      %4885 = vmatpush.msra.mxu0 %v4645
      %4886 = vmatpush.msra.mxu0 %v4644
      %4887 = vmatpush.msra.mxu0 %v4643
      %4888 = vmatpush.msra.mxu0 %v4642
      %4889 = vmatpush.msra.mxu0 %v4641
      %4890 = vmatpush.msra.mxu0 %v4640
      %4891 = vmatpush.msra.mxu0 %v4639
      %4892 = vmatpush.msra.mxu0 %v4638
      %4893 = vmatpush.msra.mxu0 %v4637
      %4894 = vmatpush.msra.mxu0 %v4636
      %4895 = vmatpush.msra.mxu0 %v4635
      %4896 = vmatpush.msra.mxu0 %v4634
      %4897 = vmatpush.msra.mxu0 %v4633
      %4898 = vmatmul.f32.gmra.mxu0 %v4851
      %v4899 = vpop.f32.mrf.mxu0
      %v4900 = vadd.f32 %v4835, %v4899
      %4901 = vdwg.mxu0
      %4902 = vmatpush.msra.mxu0 %v4664
      %4903 = vmatpush.msra.mxu0 %v4663
      %4904 = vmatpush.msra.mxu0 %v4662
      %4905 = vmatpush.msra.mxu0 %v4661
      %4906 = vmatpush.msra.mxu0 %v4660
      %4907 = vmatpush.msra.mxu0 %v4659
      %4908 = vmatpush.msra.mxu0 %v4658
      %4909 = vmatpush.msra.mxu0 %v4657
      %4910 = vmatpush.msra.mxu0 %v4656
      %4911 = vmatpush.msra.mxu0 %v4655
      %4912 = vmatpush.msra.mxu0 %v4654
      %4913 = vmatpush.msra.mxu0 %v4653
      %4914 = vmatpush.msra.mxu0 %v4652
      %4915 = vmatpush.msra.mxu0 %v4651
      %4916 = vmatpush.msra.mxu0 %v4650
      %4917 = vmatpush.msra.mxu0 %v4649
      %4918 = vmatmul.f32.gmra.mxu0 %v4852
      %v4919 = vpop.f32.mrf.mxu0
      %v4920 = vadd.f32 %v4900, %v4919
      %4921 = vdwg.mxu0
      %4922 = vmatpush.msra.mxu0 %v4680
      %4923 = vmatpush.msra.mxu0 %v4679
      %4924 = vmatpush.msra.mxu0 %v4678
      %4925 = vmatpush.msra.mxu0 %v4677
      %4926 = vmatpush.msra.mxu0 %v4676
      %4927 = vmatpush.msra.mxu0 %v4675
      %4928 = vmatpush.msra.mxu0 %v4674
      %4929 = vmatpush.msra.mxu0 %v4673
      %4930 = vmatpush.msra.mxu0 %v4672
      %4931 = vmatpush.msra.mxu0 %v4671
      %4932 = vmatpush.msra.mxu0 %v4670
      %4933 = vmatpush.msra.mxu0 %v4669
      %4934 = vmatpush.msra.mxu0 %v4668
      %4935 = vmatpush.msra.mxu0 %v4667
      %4936 = vmatpush.msra.mxu0 %v4666
      %4937 = vmatpush.msra.mxu0 %v4665
      %4938 = vmatmul.f32.gmra.mxu0 %v4853
      %v4939 = vpop.f32.mrf.mxu0
      %v4940 = vadd.f32 %v4920, %v4939
      %4941 = vdwg.mxu0
      %4942 = vmatpush.msra.mxu0 %v4696
      %4943 = vmatpush.msra.mxu0 %v4695
      %4944 = vmatpush.msra.mxu0 %v4694
      %4945 = vmatpush.msra.mxu0 %v4693
      %4946 = vmatpush.msra.mxu0 %v4692
      %4947 = vmatpush.msra.mxu0 %v4691
      %4948 = vmatpush.msra.mxu0 %v4690
      %4949 = vmatpush.msra.mxu0 %v4689
      %4950 = vmatpush.msra.mxu0 %v4688
      %4951 = vmatpush.msra.mxu0 %v4687
      %4952 = vmatpush.msra.mxu0 %v4686
      %4953 = vmatpush.msra.mxu0 %v4685
      %4954 = vmatpush.msra.mxu0 %v4684
      %4955 = vmatpush.msra.mxu0 %v4683
      %4956 = vmatpush.msra.mxu0 %v4682
      %4957 = vmatpush.msra.mxu0 %v4681
      %4958 = vmatmul.f32.gmra.mxu0 %v4854
      %v4959 = vpop.f32.mrf.mxu0
      %v4960 = vadd.f32 %v4940, %v4959
      %4961 = vdwg.mxu0
      %4962 = vmatpush.msra.mxu0 %v4712
      %4963 = vmatpush.msra.mxu0 %v4711
      %4964 = vmatpush.msra.mxu0 %v4710
      %4965 = vmatpush.msra.mxu0 %v4709
      %4966 = vmatpush.msra.mxu0 %v4708
      %4967 = vmatpush.msra.mxu0 %v4707
      %4968 = vmatpush.msra.mxu0 %v4706
      %4969 = vmatpush.msra.mxu0 %v4705
      %4970 = vmatpush.msra.mxu0 %v4704
      %4971 = vmatpush.msra.mxu0 %v4703
      %4972 = vmatpush.msra.mxu0 %v4702
      %4973 = vmatpush.msra.mxu0 %v4701
      %4974 = vmatpush.msra.mxu0 %v4700
      %4975 = vmatpush.msra.mxu0 %v4699
      %4976 = vmatpush.msra.mxu0 %v4698
      %4977 = vmatpush.msra.mxu0 %v4697
      %4978 = vmatmul.f32.gmra.mxu0 %v4855
      %v4979 = vpop.f32.mrf.mxu0
      %v4980 = vadd.f32 %v4960, %v4979
      %4981 = vdwg.mxu0
      %4982 = vmatpush.msra.mxu0 %v4728
      %4983 = vmatpush.msra.mxu0 %v4727
      %4984 = vmatpush.msra.mxu0 %v4726
      %4985 = vmatpush.msra.mxu0 %v4725
      %4986 = vmatpush.msra.mxu0 %v4724
      %4987 = vmatpush.msra.mxu0 %v4723
      %4988 = vmatpush.msra.mxu0 %v4722
      %4989 = vmatpush.msra.mxu0 %v4721
      %4990 = vmatpush.msra.mxu0 %v4720
      %4991 = vmatpush.msra.mxu0 %v4719
      %4992 = vmatpush.msra.mxu0 %v4718
      %4993 = vmatpush.msra.mxu0 %v4717
      %4994 = vmatpush.msra.mxu0 %v4716
      %4995 = vmatpush.msra.mxu0 %v4715
      %4996 = vmatpush.msra.mxu0 %v4714
      %4997 = vmatpush.msra.mxu0 %v4713
      %4998 = vmatmul.f32.gmra.mxu0 %v4856
      %v4999 = vpop.f32.mrf.mxu0
      %v5000 = vadd.f32 %v4980, %v4999
      %5001 = vdwg.mxu0
      %5002 = vmatpush.msra.mxu0 %v4744
      %5003 = vmatpush.msra.mxu0 %v4743
      %5004 = vmatpush.msra.mxu0 %v4742
      %5005 = vmatpush.msra.mxu0 %v4741
      %5006 = vmatpush.msra.mxu0 %v4740
      %5007 = vmatpush.msra.mxu0 %v4739
      %5008 = vmatpush.msra.mxu0 %v4738
      %5009 = vmatpush.msra.mxu0 %v4737
      %5010 = vmatpush.msra.mxu0 %v4736
      %5011 = vmatpush.msra.mxu0 %v4735
      %5012 = vmatpush.msra.mxu0 %v4734
      %5013 = vmatpush.msra.mxu0 %v4733
      %5014 = vmatpush.msra.mxu0 %v4732
      %5015 = vmatpush.msra.mxu0 %v4731
      %5016 = vmatpush.msra.mxu0 %v4730
      %5017 = vmatpush.msra.mxu0 %v4729
      %5018 = vmatmul.f32.gmra.mxu0 %v4857
      %v5019 = vpop.f32.mrf.mxu0
      %v5020 = vadd.f32 %v5000, %v5019
      %5021 = vdwg.mxu0
      %5022 = vmatpush.msra.mxu0 %v4760
      %5023 = vmatpush.msra.mxu0 %v4759
      %5024 = vmatpush.msra.mxu0 %v4758
      %5025 = vmatpush.msra.mxu0 %v4757
      %5026 = vmatpush.msra.mxu0 %v4756
      %5027 = vmatpush.msra.mxu0 %v4755
      %5028 = vmatpush.msra.mxu0 %v4754
      %5029 = vmatpush.msra.mxu0 %v4753
      %5030 = vmatpush.msra.mxu0 %v4752
      %5031 = vmatpush.msra.mxu0 %v4751
      %5032 = vmatpush.msra.mxu0 %v4750
      %5033 = vmatpush.msra.mxu0 %v4749
      %5034 = vmatpush.msra.mxu0 %v4748
      %5035 = vmatpush.msra.mxu0 %v4747
      %5036 = vmatpush.msra.mxu0 %v4746
      %5037 = vmatpush.msra.mxu0 %v4745
      %5038 = vmatmul.f32.gmra.mxu0 %v4858
      %v5039 = vpop.f32.mrf.mxu0
      %v5040 = vadd.f32 %v5020, %v5039
      %5041 = vdwg.mxu0
      %5042 = vmatpush.msra.mxu0 %v4776
      %5043 = vmatpush.msra.mxu0 %v4775
      %5044 = vmatpush.msra.mxu0 %v4774
      %5045 = vmatpush.msra.mxu0 %v4773
      %5046 = vmatpush.msra.mxu0 %v4772
      %5047 = vmatpush.msra.mxu0 %v4771
      %5048 = vmatpush.msra.mxu0 %v4770
      %5049 = vmatpush.msra.mxu0 %v4769
      %5050 = vmatpush.msra.mxu0 %v4768
      %5051 = vmatpush.msra.mxu0 %v4767
      %5052 = vmatpush.msra.mxu0 %v4766
      %5053 = vmatpush.msra.mxu0 %v4765
      %5054 = vmatpush.msra.mxu0 %v4764
      %5055 = vmatpush.msra.mxu0 %v4763
      %5056 = vmatpush.msra.mxu0 %v4762
      %5057 = vmatpush.msra.mxu0 %v4761
      %5058 = vmatmul.f32.gmra.mxu0 %v4862
      %v5059 = vpop.f32.mrf.mxu0
      %v5060 = vadd.f32 %v5040, %v5059
      %5061 = vdwg.mxu0
      %5062 = vmatpush.msra.mxu0 %v4792
      %5063 = vmatpush.msra.mxu0 %v4791
      %5064 = vmatpush.msra.mxu0 %v4790
      %5065 = vmatpush.msra.mxu0 %v4789
      %5066 = vmatpush.msra.mxu0 %v4788
      %5067 = vmatpush.msra.mxu0 %v4787
      %5068 = vmatpush.msra.mxu0 %v4786
      %5069 = vmatpush.msra.mxu0 %v4785
      %5070 = vmatpush.msra.mxu0 %v4784
      %5071 = vmatpush.msra.mxu0 %v4783
      %5072 = vmatpush.msra.mxu0 %v4782
      %5073 = vmatpush.msra.mxu0 %v4781
      %5074 = vmatpush.msra.mxu0 %v4780
      %5075 = vmatpush.msra.mxu0 %v4779
      %5076 = vmatpush.msra.mxu0 %v4778
      %5077 = vmatpush.msra.mxu0 %v4777
      %5078 = vmatmul.f32.gmra.mxu0 %v4863
      %v5079 = vpop.f32.mrf.mxu0
      %v5080 = vadd.f32 %v5060, %v5079
      %5081 = vdwg.mxu0
      %5082 = vmatpush.msra.mxu0 %v4808
      %5083 = vmatpush.msra.mxu0 %v4807
      %5084 = vmatpush.msra.mxu0 %v4806
      %5085 = vmatpush.msra.mxu0 %v4805
      %5086 = vmatpush.msra.mxu0 %v4804
      %5087 = vmatpush.msra.mxu0 %v4803
      %5088 = vmatpush.msra.mxu0 %v4802
      %5089 = vmatpush.msra.mxu0 %v4801
      %5090 = vmatpush.msra.mxu0 %v4800
      %5091 = vmatpush.msra.mxu0 %v4799
      %5092 = vmatpush.msra.mxu0 %v4798
      %5093 = vmatpush.msra.mxu0 %v4797
      %5094 = vmatpush.msra.mxu0 %v4796
      %5095 = vmatpush.msra.mxu0 %v4795
      %5096 = vmatpush.msra.mxu0 %v4794
      %5097 = vmatpush.msra.mxu0 %v4793
      %5098 = vmatmul.f32.gmra.mxu0 %v4864
      %v5099 = vpop.f32.mrf.mxu0
      %v5100 = vadd.f32 %v5080, %v5099
      %5101 = vdwg.mxu0
      %5102 = vmatpush.msra.mxu0 %v4824
      %5103 = vmatpush.msra.mxu0 %v4823
      %5104 = vmatpush.msra.mxu0 %v4822
      %5105 = vmatpush.msra.mxu0 %v4821
      %5106 = vmatpush.msra.mxu0 %v4820
      %5107 = vmatpush.msra.mxu0 %v4819
      %5108 = vmatpush.msra.mxu0 %v4818
      %5109 = vmatpush.msra.mxu0 %v4817
      %5110 = vmatpush.msra.mxu0 %v4816
      %5111 = vmatpush.msra.mxu0 %v4815
      %5112 = vmatpush.msra.mxu0 %v4814
      %5113 = vmatpush.msra.mxu0 %v4813
      %5114 = vmatpush.msra.mxu0 %v4812
      %5115 = vmatpush.msra.mxu0 %v4811
      %5116 = vmatpush.msra.mxu0 %v4810
      %5117 = vmatpush.msra.mxu0 %v4809
      %5118 = vmatmul.f32.gmra.mxu0 %v4865
      %v5119 = vpop.f32.mrf.mxu0
      %v5120 = vadd.f32 %v5100, %v5119
      %5121 = vdwg.mxu0
      %5122 = vmatpush.msra.mxu0 0.0
      %5123 = vmatpush.msra.mxu0 0.0
      %5124 = vmatpush.msra.mxu0 0.0
      %5125 = vmatpush.msra.mxu0 0.0
      %5126 = vmatpush.msra.mxu0 0.0
      %5127 = vmatpush.msra.mxu0 0.0
      %5128 = vmatpush.msra.mxu0 0.0
      %5129 = vmatpush.msra.mxu0 0.0
      %5130 = vmatpush.msra.mxu0 %v4832
      %5131 = vmatpush.msra.mxu0 %v4831
      %5132 = vmatpush.msra.mxu0 %v4830
      %5133 = vmatpush.msra.mxu0 %v4829
      %5134 = vmatpush.msra.mxu0 %v4828
      %5135 = vmatpush.msra.mxu0 %v4827
      %5136 = vmatpush.msra.mxu0 %v4826
      %5137 = vmatpush.msra.mxu0 %v4825
      %5138 = vmatmul.f32.gmra.mxu0 %v4880
      %v5139 = vpop.f32.mrf.mxu0
      %v5140 = vadd.f32 %v5120, %v5139
      %5141 = vdwg.mxu0
      %v5143 = vrot.slane %v5140, 1
      %v5144 = vrot.slane %v5140, 2
      %vm5147 = vcmask 73728
      %5148 = vst.msk [vmem:[%s281] sm:$0x1] %vm5147, %v5140
      %5149 = vst.msk [vmem:[%s281 + $0x1] sm:$0x1] %vm5147, %v5143
      %5150 = vst.msk [vmem:[%s281 + $0x2] sm:$0x1] %vm5147, %v5144
      %s5151 = smul.u32 3, %s18
      %p5152 = scmp.lt.s32.totalorder %s5151, 5
      %s5153 = scalar_select %p5152, %s5151, 5
      %s5154 = scalar_lea.vmem %s7, %s5153
      // Predicated region
      $region63: #{_forward_impl.1} parent=47 // pred_check
        %p5155 = pneg %p188
      $region64: #{_forward_impl.1} parent=47 // pred_check_branch
        %5157 = sbr.rel (%p5155) target = $region66
      $region65: #{_forward_impl.1} parent=47 // pred_region
        %s5158 = smul.u32 3, %s18
      $region66: #{_forward_impl.1} parent=47 // pred_fallthru
        _
    $region48: #{_forward_impl.1} parent=5 // pred_fallthru
      _
    %p5159 = scmp.le.s32.totalorder 2, %s13
    // Predicated region
    $region67: #{_forward_impl.1} parent=5 // pred_check
      %p5160 = pneg %p5159
    $region68: #{_forward_impl.1} parent=5 // pred_check_branch
      %5162 = sbr.rel (%p5160) target = $region70
    $region69: #{_forward_impl.1} parent=5 // pred_region
      %s5163 = ssub.s32 %s13, 2
      // Predicated region
      $region71: #{_forward_impl.1} parent=69 // pred_check
        %p5164 = pneg %p194
      $region72: #{_forward_impl.1} parent=69 // pred_check_branch
        %5166 = sbr.rel (%p5164) target = $region74
      $region73: #{_forward_impl.1} parent=69 // pred_region
        %s5167 = smul.u32 3, %s19
        %p5168 = scmp.lt.s32.totalorder %s5167, 5
        %s5169 = scalar_select %p5168, %s5167, 5
        %s5170 = scalar_lea.vmem %s7, %s5169
      $region74: #{_forward_impl.1} parent=69 // pred_fallthru
        _
    $region70: #{_forward_impl.1} parent=5 // pred_fallthru
      _
  $region6: #{_forward_impl.1} parent=0 // loop_footer
    %s17 = sadd.s32 1, %s13
  $region7: #{_forward_impl.1} parent=0 // loop_footer_branch
    %12 = sbr.rel target = $region3
  $region8: #{_forward_impl.1} parent=0 // loop_exit
    _

</llo_original>
